<compile_context>
chip_gen: v7x
topology: tpu7x:2x2x1
jax: 0.10.0
libtpu: 0.0.40
codegen_flags: <defaults>
</compile_context>

<pallas_src>
import functools

import jax
import jax.numpy as jnp
from jax import lax
from jax.experimental import pallas as pl
from jax.experimental.pallas import tpu as pltpu


# ----------------------------- fused Pallas kernel --------------------------- #

def _bottleneck_fused_kernel(x_lo_ref, x_ref, x_hi_ref,
                             w1_ref, s1_ref, b1_ref,
                             w2_ref, s2_ref, b2_ref,
                             w3_ref, s3_ref, b3_ref,
                             o_ref, *, TD, H, W):
    # One grid step = one (n, depth-block) output slab of TD planes.
    #   x_lo_ref : (H, W, Cin)      f32 plane below the block (clamped fetch)
    #   x_ref    : (TD, H, W, Cin)  f32 main block (also the identity residual)
    #   x_hi_ref : (H, W, Cin)      f32 plane above the block (clamped fetch)
    #   w1 (Cin,P)  w2 (27P,P)  w3 (P,Cout)   bf16 matmul weights
    #   s*/b*       folded BatchNorm scale/shift, f32, shape (1, C)
    db = pl.program_id(1)
    n_db = pl.num_programs(1)
    Cin = x_ref.shape[-1]
    P = w1_ref.shape[-1]
    Cout = w3_ref.shape[-1]
    M = TD * H * W
    Mw = (TD + 2) * H * W                       # rows incl. the two depth-halo planes
    bf16 = jnp.bfloat16

    # ---- stage 1: conv1 (1x1x1) + BN1 + ReLU over the TD+2 depth window ------------
    x_main = x_ref[...]                                            # (TD, H, W, Cin) f32
    x_win = jnp.concatenate(
        [x_lo_ref[...].reshape(1, H, W, Cin), x_main,
         x_hi_ref[...].reshape(1, H, W, Cin)], axis=0)             # (TD+2, H, W, Cin)
    h1 = jnp.dot(x_win.reshape(Mw, Cin).astype(bf16), w1_ref[...],
                 preferred_element_type=jnp.float32)               # (Mw, P)
    h1 = jnp.maximum(h1 * s1_ref[...] + b1_ref[...], 0.0)
    # Depth padding: the halo planes must be zero when they fall outside [0, D).
    row = lax.broadcasted_iota(jnp.int32, (Mw, 1), 0)
    keep = jnp.logical_and(jnp.logical_or(row >= H * W, db > 0),
                           jnp.logical_or(row < Mw - H * W, db < n_db - 1))
    h1 = jnp.where(keep, h1, 0.0).astype(bf16).reshape(TD + 2, H, W, P)

    # ---- H/W zero halo built in-register (padded h1 window never touches HBM) -------
    zw = jnp.zeros((TD + 2, H, 1, P), bf16)
    hp = jnp.concatenate([zw, h1, zw], axis=2)                     # (TD+2, H, W+2, P)
    zh = jnp.zeros((TD + 2, 1, W + 2, P), bf16)
    hp = jnp.concatenate([zh, hp, zh], axis=1)                     # (TD+2, H+2, W+2, P)

    # ---- stage 2: conv2 (3x3x3) as ONE fat im2col matmul (K = 27*P) -----------------
    # Pre-shift along W once (3 sublane slices) so the 27 taps are pure outer-dim views.
    hp_w = [hp[:, :, kw:kw + W, :] for kw in range(3)]
    taps = [hp_w[kw][kd:kd + TD, kh:kh + H]
            for kd in range(3) for kh in range(3) for kw in range(3)]
    lhs = jnp.concatenate(taps, axis=-1).reshape(M, 27 * P)        # (M, 27P) bf16
    y2 = jnp.dot(lhs, w2_ref[...], preferred_element_type=jnp.float32)
    h2 = jnp.maximum(y2 * s2_ref[...] + b2_ref[...], 0.0).astype(bf16)

    # ---- stage 3: conv3 (1x1x1) + BN3 + residual + ReLU, lane-dense f32 store -------
    y3 = jnp.dot(h2, w3_ref[...], preferred_element_type=jnp.float32)
    y3 = y3 * s3_ref[...] + b3_ref[...] + x_main.reshape(M, Cout)
    o_ref[...] = jnp.maximum(y3, 0.0).reshape(TD, H, W, Cout).astype(o_ref.dtype)


# ------------------------------ pallas_call glue ----------------------------- #

def _pick_td(depth, max_td=4):
    for td in range(min(max_td, depth), 0, -1):
        if depth % td == 0:
            return td
    return 1


def bottleneck_fused(x_ndhwc, params, *, td=None):
    """Fully fused Bottleneck on a channels-last (N, D, H, W, Cin) f32 input."""
    N, D, H, W, Cin = x_ndhwc.shape
    P = params['w1'].shape[1]
    Cout = params['w3'].shape[1]
    assert Cin == Cout, "identity residual requires in_planes == 4*planes"
    if td is None:
        td = _pick_td(D)
    assert D % td == 0, "depth-block size must divide D"
    n_db = D // td

    kern = functools.partial(_bottleneck_fused_kernel, TD=td, H=H, W=W)

    flops = (2 * N * n_db * (td + 2) * H * W * Cin * P   # conv1 (incl. halo recompute)
             + 2 * N * D * H * W * 27 * P * P            # conv2
             + 2 * N * D * H * W * P * Cout)             # conv3
    bytes_accessed = (N * n_db * (td + 2) * H * W * Cin * 4   # x reads (main + halo)
                      + N * D * H * W * Cout * 4              # output write
                      + 2 * (Cin * P + 27 * P * P + P * Cout) # bf16 weights
                      + 4 * 2 * (2 * P + Cout))               # folded BN scale/shift

    return pl.pallas_call(
        kern,
        out_shape=jax.ShapeDtypeStruct((N, D, H, W, Cout), jnp.float32),
        grid=(N, n_db),
        in_specs=[
            # depth-halo plane below the block (clamped index; zeroed in-kernel at db==0)
            pl.BlockSpec((None, None, H, W, Cin),
                         lambda n, db: (n, jnp.maximum(db * td - 1, 0), 0, 0, 0)),
            # main TD-plane block (also serves as the residual since Cin == Cout)
            pl.BlockSpec((None, td, H, W, Cin), lambda n, db: (n, db, 0, 0, 0)),
            # depth-halo plane above the block (clamped; zeroed in-kernel at last block)
            pl.BlockSpec((None, None, H, W, Cin),
                         lambda n, db: (n, jnp.minimum((db + 1) * td, D - 1), 0, 0, 0)),
            # weights / folded-BN params: constant index_map -> resident across steps
            pl.BlockSpec((Cin, P), lambda n, db: (0, 0)),
            pl.BlockSpec((1, P), lambda n, db: (0, 0)),
            pl.BlockSpec((1, P), lambda n, db: (0, 0)),
            pl.BlockSpec((27 * P, P), lambda n, db: (0, 0)),
            pl.BlockSpec((1, P), lambda n, db: (0, 0)),
            pl.BlockSpec((1, P), lambda n, db: (0, 0)),
            pl.BlockSpec((P, Cout), lambda n, db: (0, 0)),
            pl.BlockSpec((1, Cout), lambda n, db: (0, 0)),
            pl.BlockSpec((1, Cout), lambda n, db: (0, 0)),
        ],
        out_specs=pl.BlockSpec((None, td, H, W, Cout), lambda n, db: (n, db, 0, 0, 0)),
        compiler_params=pltpu.CompilerParams(
            dimension_semantics=("parallel", "parallel")),
        cost_estimate=pl.CostEstimate(flops=flops, transcendentals=0,
                                      bytes_accessed=bytes_accessed),
    )(x_ndhwc, x_ndhwc, x_ndhwc,
      params['w1'], params['s1'], params['b1'],
      params['w2'], params['s2'], params['b2'],
      params['w3'], params['s3'], params['b3'])


def bottleneck_forward(x_ncdhw, params, *, td=None):
    """Full Bottleneck forward. x_ncdhw: (N, C, D, H, W) float32 (PyTorch layout)."""
    # TODO(synk): when composing this block into a full network, keep activations
    # channels-last (and optionally bf16) end-to-end to drop these two transposes and
    # halve the output HBM stream.
    x = jnp.transpose(x_ncdhw, (0, 2, 3, 4, 1))        # -> (N, D, H, W, C) f32
    out = bottleneck_fused(x, params, td=td)           # (N, D, H, W, Cout) f32
    return jnp.transpose(out, (0, 4, 1, 2, 3))         # back to NCDHW


# ------------------------------ parameters ----------------------------------- #

def init_params(key, in_planes, planes):
    exp = 4
    assert in_planes == planes * exp, "identity residual requires in_planes == 4*planes"
    ks = jax.random.split(key, 6)

    def conv_w(k, o, i, kd, kh, kw):
        fan_in = i * kd * kh * kw
        return jax.random.normal(k, (o, i, kd, kh, kw), jnp.float32) / jnp.sqrt(
            jnp.float32(fan_in))

    wc1 = conv_w(ks[0], planes, in_planes, 1, 1, 1)          # torch OIDHW
    wc2 = conv_w(ks[1], planes, planes, 3, 3, 3)
    wc3 = conv_w(ks[2], planes * exp, planes, 1, 1, 1)

    def bn_fold(k, c):
        kg, kb, km, kv = jax.random.split(k, 4)
        gamma = 1.0 + 0.1 * jax.random.normal(kg, (c,), jnp.float32)
        beta = 0.1 * jax.random.normal(kb, (c,), jnp.float32)
        mean = 0.1 * jax.random.normal(km, (c,), jnp.float32)
        var = 0.5 + jax.random.uniform(kv, (c,), jnp.float32)
        scale = gamma / jnp.sqrt(var + 1e-5)
        shift = beta - mean * scale
        return scale, shift

    s1, b1 = bn_fold(ks[3], planes)
    s2, b2 = bn_fold(ks[4], planes)
    s3, b3 = bn_fold(ks[5], planes * exp)

    # conv2 packed as an im2col slab: row = ((kd*3 + kh)*3 + kw)*P + ci, col = co.
    w2_slab = jnp.transpose(wc2, (2, 3, 4, 1, 0)).reshape(27 * planes, planes)

    params = dict(
        w1=jnp.transpose(wc1[:, :, 0, 0, 0]).astype(jnp.bfloat16),   # (Cin, P)
        w2=w2_slab.astype(jnp.bfloat16),                             # (27P, P)
        w3=jnp.transpose(wc3[:, :, 0, 0, 0]).astype(jnp.bfloat16),   # (P, 4P)
        s1=s1.reshape(1, -1), b1=b1.reshape(1, -1),
        s2=s2.reshape(1, -1), b2=b2.reshape(1, -1),
        s3=s3.reshape(1, -1), b3=b3.reshape(1, -1),
    )
    torch_layout = (wc1, s1, b1, wc2, s2, b2, wc3, s3, b3)
    return params, torch_layout


# --------------------------- plain-JAX reference ----------------------------- #

def reference_forward(x, wc1, s1, b1, wc2, s2, b2, wc3, s3, b3):
    dn = ('NCDHW', 'OIDHW', 'NCDHW')

    def bn(y, s, b):
        return y * s[None, :, None, None, None] + b[None, :, None, None, None]

    h = lax.conv_general_dilated(x, wc1, (1, 1, 1), 'VALID', dimension_numbers=dn)
    h = jnp.maximum(bn(h, s1, b1), 0.0)
    h = lax.conv_general_dilated(h, wc2, (1, 1, 1), [(1, 1)] * 3, dimension_numbers=dn)
    h = jnp.maximum(bn(h, s2, b2), 0.0)
    h = lax.conv_general_dilated(h, wc3, (1, 1, 1), 'VALID', dimension_numbers=dn)
    h = bn(h, s3, b3) + x
    return jnp.maximum(h, 0.0)


# ----------------------------------- main ------------------------------------ #

if __name__ == "__main__":
    key = jax.random.PRNGKey(0)
    # planes=32 keeps the test small while making the fused output lane-dense
    # (4*planes = 128 lanes) and the conv2 contraction fat (K = 27*planes = 864).
    N, planes = 2, 32
    in_planes = planes * 4          # 128, required for the identity residual
    D = H = W = 8                   # TD=4 -> grid (2, 2); both depth-halo paths exercised

    k_x, k_p = jax.random.split(key)
    x = jax.random.normal(k_x, (N, in_planes, D, H, W), jnp.float32)
    params, torch_layout = init_params(k_p, in_planes, planes)

    fwd = jax.jit(bottleneck_forward)
    out = jax.block_until_ready(fwd(x, params))

    ref = reference_forward(x, *torch_layout)
    max_err = float(jnp.max(jnp.abs(out - ref)))
    # Tolerance sized for three chained bf16-input / f32-accumulate MXU matmuls
    # compared against a pure-f32 reference.
    if not bool(jnp.allclose(out, ref, atol=4e-2, rtol=4e-2)):
        raise AssertionError(f"Pallas output mismatch vs reference, max abs err={max_err}")

    print("KERNEL_OK")
</pallas_src>

<mosaic_0001>
module attributes {stable_mosaic.version = 11 : i64} {
  func.func @_bottleneck_fused_kernel(%arg0: i32, %arg1: i32, %arg2: memref<1x1x8x8x128xf32, #tpu.memory_space<vmem>>, %arg3: memref<1x4x8x8x128xf32, #tpu.memory_space<vmem>>, %arg4: memref<1x1x8x8x128xf32, #tpu.memory_space<vmem>>, %arg5: memref<128x32xbf16, #tpu.memory_space<vmem>>, %arg6: memref<1x32xf32, #tpu.memory_space<vmem>>, %arg7: memref<1x32xf32, #tpu.memory_space<vmem>>, %arg8: memref<864x32xbf16, #tpu.memory_space<vmem>>, %arg9: memref<1x32xf32, #tpu.memory_space<vmem>>, %arg10: memref<1x32xf32, #tpu.memory_space<vmem>>, %arg11: memref<32x128xbf16, #tpu.memory_space<vmem>>, %arg12: memref<1x128xf32, #tpu.memory_space<vmem>>, %arg13: memref<1x128xf32, #tpu.memory_space<vmem>>, %arg14: memref<1x4x8x8x128xf32, #tpu.memory_space<vmem>>) attributes {dimension_semantics = [#tpu.dimension_semantics<parallel>, #tpu.dimension_semantics<parallel>], iteration_bounds = array<i64: 2, 2>, scalar_prefetch = 0 : i64, scratch_operands = 0 : i64, tpu.core_type = #tpu.core_type<tc>, window_params = [{transform_indices = @transform_0, window_bounds = array<i64: 1, 1, 8, 8, 128>}, {transform_indices = @transform_1, window_bounds = array<i64: 1, 4, 8, 8, 128>}, {transform_indices = @transform_2, window_bounds = array<i64: 1, 1, 8, 8, 128>}, {pipeline_mode = #tpu.pipeline_mode<synchronous>, transform_indices = @transform_3, window_bounds = array<i64: 128, 32>}, {pipeline_mode = #tpu.pipeline_mode<synchronous>, transform_indices = @transform_4, window_bounds = array<i64: 1, 32>}, {pipeline_mode = #tpu.pipeline_mode<synchronous>, transform_indices = @transform_5, window_bounds = array<i64: 1, 32>}, {pipeline_mode = #tpu.pipeline_mode<synchronous>, transform_indices = @transform_6, window_bounds = array<i64: 864, 32>}, {pipeline_mode = #tpu.pipeline_mode<synchronous>, transform_indices = @transform_7, window_bounds = array<i64: 1, 32>}, {pipeline_mode = #tpu.pipeline_mode<synchronous>, transform_indices = @transform_8, window_bounds = array<i64: 1, 32>}, {pipeline_mode = #tpu.pipeline_mode<synchronous>, transform_indices = @transform_9, window_bounds = array<i64: 32, 128>}, {pipeline_mode = #tpu.pipeline_mode<synchronous>, transform_indices = @transform_10, window_bounds = array<i64: 1, 128>}, {pipeline_mode = #tpu.pipeline_mode<synchronous>, transform_indices = @transform_11, window_bounds = array<i64: 1, 128>}, {transform_indices = @transform_12, window_bounds = array<i64: 1, 4, 8, 8, 128>}]} {
    %c0 = arith.constant 0 : index
    %c0_0 = arith.constant 0 : index
    %c0_1 = arith.constant 0 : index
    %c0_2 = arith.constant 0 : index
    %c0_3 = arith.constant 0 : index
    %0 = vector.load %arg3[%c0, %c0_0, %c0_1, %c0_2, %c0_3] : memref<1x4x8x8x128xf32, #tpu.memory_space<vmem>>, vector<1x4x8x8x128xf32>
    %1 = vector.shape_cast %0 : vector<1x4x8x8x128xf32> to vector<4x8x8x128xf32>
    %c0_4 = arith.constant 0 : index
    %c0_5 = arith.constant 0 : index
    %c0_6 = arith.constant 0 : index
    %c0_7 = arith.constant 0 : index
    %c0_8 = arith.constant 0 : index
    %2 = vector.load %arg2[%c0_4, %c0_5, %c0_6, %c0_7, %c0_8] : memref<1x1x8x8x128xf32, #tpu.memory_space<vmem>>, vector<1x1x8x8x128xf32>
    %3 = vector.shape_cast %2 : vector<1x1x8x8x128xf32> to vector<8x8x128xf32>
    %4 = vector.shape_cast %3 : vector<8x8x128xf32> to vector<1x8x8x128xf32>
    %c0_9 = arith.constant 0 : index
    %c0_10 = arith.constant 0 : index
    %c0_11 = arith.constant 0 : index
    %c0_12 = arith.constant 0 : index
    %c0_13 = arith.constant 0 : index
    %5 = vector.load %arg4[%c0_9, %c0_10, %c0_11, %c0_12, %c0_13] : memref<1x1x8x8x128xf32, #tpu.memory_space<vmem>>, vector<1x1x8x8x128xf32>
    %6 = vector.shape_cast %5 : vector<1x1x8x8x128xf32> to vector<8x8x128xf32>
    %7 = vector.shape_cast %6 : vector<8x8x128xf32> to vector<1x8x8x128xf32>
    %8 = tpu.concatenate %4, %1, %7 in 0 : vector<1x8x8x128xf32>, vector<4x8x8x128xf32>, vector<1x8x8x128xf32> -> vector<6x8x8x128xf32>
    %9 = vector.shape_cast %8 : vector<6x8x8x128xf32> to vector<384x128xf32>
    %10 = arith.truncf %9 : vector<384x128xf32> to vector<384x128xbf16>
    %c0_14 = arith.constant 0 : index
    %c0_15 = arith.constant 0 : index
    %11 = vector.load %arg5[%c0_14, %c0_15] : memref<128x32xbf16, #tpu.memory_space<vmem>>, vector<128x32xbf16>
    %cst = arith.constant dense<0.000000e+00> : vector<384x32xf32>
    %12 = tpu.matmul %10, %11, %cst {dimension_numbers = #tpu.dot_dimension_numbers<[1], [0], [0], [1], [0, 0, 1, 1], [], []>} : vector<384x128xbf16>, vector<128x32xbf16>, vector<384x32xf32> -> vector<384x32xf32>
    %c0_16 = arith.constant 0 : index
    %c0_17 = arith.constant 0 : index
    %13 = vector.load %arg6[%c0_16, %c0_17] : memref<1x32xf32, #tpu.memory_space<vmem>>, vector<1x32xf32>
    %14 = vector.broadcast %13 : vector<1x32xf32> to vector<384x32xf32>
    %15 = arith.mulf %12, %14 : vector<384x32xf32>
    %c0_18 = arith.constant 0 : index
    %c0_19 = arith.constant 0 : index
    %16 = vector.load %arg7[%c0_18, %c0_19] : memref<1x32xf32, #tpu.memory_space<vmem>>, vector<1x32xf32>
    %17 = vector.broadcast %16 : vector<1x32xf32> to vector<384x32xf32>
    %18 = arith.addf %15, %17 : vector<384x32xf32>
    %cst_20 = arith.constant 0.000000e+00 : f32
    %19 = vector.broadcast %cst_20 : f32 to vector<384x32xf32>
    %20 = arith.maximumf %18, %19 : vector<384x32xf32>
    %21 = tpu.iota {dimensions = array<i32: 0>} : vector<384x1xi32>
    %c64_i32 = arith.constant 64 : i32
    %22 = vector.broadcast %c64_i32 : i32 to vector<384x1xi32>
    %23 = arith.cmpi sge, %21, %22 : vector<384x1xi32>
    %c0_i32 = arith.constant 0 : i32
    %24 = arith.cmpi sgt, %arg1, %c0_i32 : i32
    %25 = vector.broadcast %24 : i1 to vector<384x1xi1>
    %26 = arith.ori %23, %25 : vector<384x1xi1>
    %c320_i32 = arith.constant 320 : i32
    %27 = vector.broadcast %c320_i32 : i32 to vector<384x1xi32>
    %28 = arith.cmpi slt, %21, %27 : vector<384x1xi32>
    %c1_i32 = arith.constant 1 : i32
    %29 = arith.cmpi slt, %arg1, %c1_i32 : i32
    %30 = vector.broadcast %29 : i1 to vector<384x1xi1>
    %31 = arith.ori %28, %30 : vector<384x1xi1>
    %32 = arith.andi %26, %31 : vector<384x1xi1>
    %cst_21 = arith.constant 0.000000e+00 : f32
    %33 = vector.shape_cast %32 : vector<384x1xi1> to vector<384x1xi1>
    %34 = vector.broadcast %33 : vector<384x1xi1> to vector<384x32xi1>
    %35 = vector.broadcast %cst_21 : f32 to vector<384x32xf32>
    %36 = arith.select %34, %20, %35 : vector<384x32xi1>, vector<384x32xf32>
    %37 = arith.truncf %36 : vector<384x32xf32> to vector<384x32xbf16>
    %38 = vector.shape_cast %37 : vector<384x32xbf16> to vector<6x8x8x32xbf16>
    %cst_22 = arith.constant 0.000000e+00 : bf16
    %39 = vector.broadcast %cst_22 : bf16 to vector<6x8x1x32xbf16>
    %40 = tpu.concatenate %39, %38, %39 in 2 : vector<6x8x1x32xbf16>, vector<6x8x8x32xbf16>, vector<6x8x1x32xbf16> -> vector<6x8x10x32xbf16>
    %cst_23 = arith.constant 0.000000e+00 : bf16
    %41 = vector.broadcast %cst_23 : bf16 to vector<6x1x10x32xbf16>
    %42 = tpu.concatenate %41, %40, %41 in 1 : vector<6x1x10x32xbf16>, vector<6x8x10x32xbf16>, vector<6x1x10x32xbf16> -> vector<6x10x10x32xbf16>
    %43 = vector.extract_strided_slice %42 {offsets = [0, 0, 0, 0], sizes = [6, 10, 8, 32], strides = [1, 1, 1, 1]} : vector<6x10x10x32xbf16> to vector<6x10x8x32xbf16>
    %44 = vector.extract_strided_slice %42 {offsets = [0, 0, 1, 0], sizes = [6, 10, 8, 32], strides = [1, 1, 1, 1]} : vector<6x10x10x32xbf16> to vector<6x10x8x32xbf16>
    %45 = vector.extract_strided_slice %42 {offsets = [0, 0, 2, 0], sizes = [6, 10, 8, 32], strides = [1, 1, 1, 1]} : vector<6x10x10x32xbf16> to vector<6x10x8x32xbf16>
    %46 = vector.extract_strided_slice %43 {offsets = [0, 0, 0, 0], sizes = [4, 8, 8, 32], strides = [1, 1, 1, 1]} : vector<6x10x8x32xbf16> to vector<4x8x8x32xbf16>
    %47 = vector.extract_strided_slice %44 {offsets = [0, 0, 0, 0], sizes = [4, 8, 8, 32], strides = [1, 1, 1, 1]} : vector<6x10x8x32xbf16> to vector<4x8x8x32xbf16>
    %48 = vector.extract_strided_slice %45 {offsets = [0, 0, 0, 0], sizes = [4, 8, 8, 32], strides = [1, 1, 1, 1]} : vector<6x10x8x32xbf16> to vector<4x8x8x32xbf16>
    %49 = vector.extract_strided_slice %43 {offsets = [0, 1, 0, 0], sizes = [4, 8, 8, 32], strides = [1, 1, 1, 1]} : vector<6x10x8x32xbf16> to vector<4x8x8x32xbf16>
    %50 = vector.extract_strided_slice %44 {offsets = [0, 1, 0, 0], sizes = [4, 8, 8, 32], strides = [1, 1, 1, 1]} : vector<6x10x8x32xbf16> to vector<4x8x8x32xbf16>
    %51 = vector.extract_strided_slice %45 {offsets = [0, 1, 0, 0], sizes = [4, 8, 8, 32], strides = [1, 1, 1, 1]} : vector<6x10x8x32xbf16> to vector<4x8x8x32xbf16>
    %52 = vector.extract_strided_slice %43 {offsets = [0, 2, 0, 0], sizes = [4, 8, 8, 32], strides = [1, 1, 1, 1]} : vector<6x10x8x32xbf16> to vector<4x8x8x32xbf16>
    %53 = vector.extract_strided_slice %44 {offsets = [0, 2, 0, 0], sizes = [4, 8, 8, 32], strides = [1, 1, 1, 1]} : vector<6x10x8x32xbf16> to vector<4x8x8x32xbf16>
    %54 = vector.extract_strided_slice %45 {offsets = [0, 2, 0, 0], sizes = [4, 8, 8, 32], strides = [1, 1, 1, 1]} : vector<6x10x8x32xbf16> to vector<4x8x8x32xbf16>
    %55 = vector.extract_strided_slice %43 {offsets = [1, 0, 0, 0], sizes = [4, 8, 8, 32], strides = [1, 1, 1, 1]} : vector<6x10x8x32xbf16> to vector<4x8x8x32xbf16>
    %56 = vector.extract_strided_slice %44 {offsets = [1, 0, 0, 0], sizes = [4, 8, 8, 32], strides = [1, 1, 1, 1]} : vector<6x10x8x32xbf16> to vector<4x8x8x32xbf16>
    %57 = vector.extract_strided_slice %45 {offsets = [1, 0, 0, 0], sizes = [4, 8, 8, 32], strides = [1, 1, 1, 1]} : vector<6x10x8x32xbf16> to vector<4x8x8x32xbf16>
    %58 = vector.extract_strided_slice %43 {offsets = [1, 1, 0, 0], sizes = [4, 8, 8, 32], strides = [1, 1, 1, 1]} : vector<6x10x8x32xbf16> to vector<4x8x8x32xbf16>
    %59 = vector.extract_strided_slice %44 {offsets = [1, 1, 0, 0], sizes = [4, 8, 8, 32], strides = [1, 1, 1, 1]} : vector<6x10x8x32xbf16> to vector<4x8x8x32xbf16>
    %60 = vector.extract_strided_slice %45 {offsets = [1, 1, 0, 0], sizes = [4, 8, 8, 32], strides = [1, 1, 1, 1]} : vector<6x10x8x32xbf16> to vector<4x8x8x32xbf16>
    %61 = vector.extract_strided_slice %43 {offsets = [1, 2, 0, 0], sizes = [4, 8, 8, 32], strides = [1, 1, 1, 1]} : vector<6x10x8x32xbf16> to vector<4x8x8x32xbf16>
    %62 = vector.extract_strided_slice %44 {offsets = [1, 2, 0, 0], sizes = [4, 8, 8, 32], strides = [1, 1, 1, 1]} : vector<6x10x8x32xbf16> to vector<4x8x8x32xbf16>
    %63 = vector.extract_strided_slice %45 {offsets = [1, 2, 0, 0], sizes = [4, 8, 8, 32], strides = [1, 1, 1, 1]} : vector<6x10x8x32xbf16> to vector<4x8x8x32xbf16>
    %64 = vector.extract_strided_slice %43 {offsets = [2, 0, 0, 0], sizes = [4, 8, 8, 32], strides = [1, 1, 1, 1]} : vector<6x10x8x32xbf16> to vector<4x8x8x32xbf16>
    %65 = vector.extract_strided_slice %44 {offsets = [2, 0, 0, 0], sizes = [4, 8, 8, 32], strides = [1, 1, 1, 1]} : vector<6x10x8x32xbf16> to vector<4x8x8x32xbf16>
    %66 = vector.extract_strided_slice %45 {offsets = [2, 0, 0, 0], sizes = [4, 8, 8, 32], strides = [1, 1, 1, 1]} : vector<6x10x8x32xbf16> to vector<4x8x8x32xbf16>
    %67 = vector.extract_strided_slice %43 {offsets = [2, 1, 0, 0], sizes = [4, 8, 8, 32], strides = [1, 1, 1, 1]} : vector<6x10x8x32xbf16> to vector<4x8x8x32xbf16>
    %68 = vector.extract_strided_slice %44 {offsets = [2, 1, 0, 0], sizes = [4, 8, 8, 32], strides = [1, 1, 1, 1]} : vector<6x10x8x32xbf16> to vector<4x8x8x32xbf16>
    %69 = vector.extract_strided_slice %45 {offsets = [2, 1, 0, 0], sizes = [4, 8, 8, 32], strides = [1, 1, 1, 1]} : vector<6x10x8x32xbf16> to vector<4x8x8x32xbf16>
    %70 = vector.extract_strided_slice %43 {offsets = [2, 2, 0, 0], sizes = [4, 8, 8, 32], strides = [1, 1, 1, 1]} : vector<6x10x8x32xbf16> to vector<4x8x8x32xbf16>
    %71 = vector.extract_strided_slice %44 {offsets = [2, 2, 0, 0], sizes = [4, 8, 8, 32], strides = [1, 1, 1, 1]} : vector<6x10x8x32xbf16> to vector<4x8x8x32xbf16>
    %72 = vector.extract_strided_slice %45 {offsets = [2, 2, 0, 0], sizes = [4, 8, 8, 32], strides = [1, 1, 1, 1]} : vector<6x10x8x32xbf16> to vector<4x8x8x32xbf16>
    %73 = tpu.concatenate %46, %47, %48, %49, %50, %51, %52, %53, %54, %55, %56, %57, %58, %59, %60, %61 in 3 : vector<4x8x8x32xbf16>, vector<4x8x8x32xbf16>, vector<4x8x8x32xbf16>, vector<4x8x8x32xbf16>, vector<4x8x8x32xbf16>, vector<4x8x8x32xbf16>, vector<4x8x8x32xbf16>, vector<4x8x8x32xbf16>, vector<4x8x8x32xbf16>, vector<4x8x8x32xbf16>, vector<4x8x8x32xbf16>, vector<4x8x8x32xbf16>, vector<4x8x8x32xbf16>, vector<4x8x8x32xbf16>, vector<4x8x8x32xbf16>, vector<4x8x8x32xbf16> -> vector<4x8x8x512xbf16>
    %74 = tpu.concatenate %62, %63, %64, %65, %66, %67, %68, %69, %70, %71, %72 in 3 : vector<4x8x8x32xbf16>, vector<4x8x8x32xbf16>, vector<4x8x8x32xbf16>, vector<4x8x8x32xbf16>, vector<4x8x8x32xbf16>, vector<4x8x8x32xbf16>, vector<4x8x8x32xbf16>, vector<4x8x8x32xbf16>, vector<4x8x8x32xbf16>, vector<4x8x8x32xbf16>, vector<4x8x8x32xbf16> -> vector<4x8x8x352xbf16>
    %75 = tpu.concatenate %73, %74 in 3 : vector<4x8x8x512xbf16>, vector<4x8x8x352xbf16> -> vector<4x8x8x864xbf16>
    %76 = vector.shape_cast %75 : vector<4x8x8x864xbf16> to vector<256x864xbf16>
    %c0_24 = arith.constant 0 : index
    %c0_25 = arith.constant 0 : index
    %77 = vector.load %arg8[%c0_24, %c0_25] : memref<864x32xbf16, #tpu.memory_space<vmem>>, vector<864x32xbf16>
    %cst_26 = arith.constant dense<0.000000e+00> : vector<256x32xf32>
    %78 = tpu.matmul %76, %77, %cst_26 {dimension_numbers = #tpu.dot_dimension_numbers<[1], [0], [0], [1], [0, 0, 1, 1], [], []>} : vector<256x864xbf16>, vector<864x32xbf16>, vector<256x32xf32> -> vector<256x32xf32>
    %c0_27 = arith.constant 0 : index
    %c0_28 = arith.constant 0 : index
    %79 = vector.load %arg9[%c0_27, %c0_28] : memref<1x32xf32, #tpu.memory_space<vmem>>, vector<1x32xf32>
    %80 = vector.broadcast %79 : vector<1x32xf32> to vector<256x32xf32>
    %81 = arith.mulf %78, %80 : vector<256x32xf32>
    %c0_29 = arith.constant 0 : index
    %c0_30 = arith.constant 0 : index
    %82 = vector.load %arg10[%c0_29, %c0_30] : memref<1x32xf32, #tpu.memory_space<vmem>>, vector<1x32xf32>
    %83 = vector.broadcast %82 : vector<1x32xf32> to vector<256x32xf32>
    %84 = arith.addf %81, %83 : vector<256x32xf32>
    %cst_31 = arith.constant 0.000000e+00 : f32
    %85 = vector.broadcast %cst_31 : f32 to vector<256x32xf32>
    %86 = arith.maximumf %84, %85 : vector<256x32xf32>
    %87 = arith.truncf %86 : vector<256x32xf32> to vector<256x32xbf16>
    %c0_32 = arith.constant 0 : index
    %c0_33 = arith.constant 0 : index
    %88 = vector.load %arg11[%c0_32, %c0_33] : memref<32x128xbf16, #tpu.memory_space<vmem>>, vector<32x128xbf16>
    %cst_34 = arith.constant dense<0.000000e+00> : vector<256x128xf32>
    %89 = tpu.matmul %87, %88, %cst_34 {dimension_numbers = #tpu.dot_dimension_numbers<[1], [0], [0], [1], [0, 0, 1, 1], [], []>} : vector<256x32xbf16>, vector<32x128xbf16>, vector<256x128xf32> -> vector<256x128xf32>
    %c0_35 = arith.constant 0 : index
    %c0_36 = arith.constant 0 : index
    %90 = vector.load %arg12[%c0_35, %c0_36] : memref<1x128xf32, #tpu.memory_space<vmem>>, vector<1x128xf32>
    %91 = vector.broadcast %90 : vector<1x128xf32> to vector<256x128xf32>
    %92 = arith.mulf %89, %91 : vector<256x128xf32>
    %c0_37 = arith.constant 0 : index
    %c0_38 = arith.constant 0 : index
    %93 = vector.load %arg13[%c0_37, %c0_38] : memref<1x128xf32, #tpu.memory_space<vmem>>, vector<1x128xf32>
    %94 = vector.broadcast %93 : vector<1x128xf32> to vector<256x128xf32>
    %95 = arith.addf %92, %94 : vector<256x128xf32>
    %96 = vector.shape_cast %1 : vector<4x8x8x128xf32> to vector<256x128xf32>
    %97 = arith.addf %95, %96 : vector<256x128xf32>
    %cst_39 = arith.constant 0.000000e+00 : f32
    %98 = vector.broadcast %cst_39 : f32 to vector<256x128xf32>
    %99 = arith.maximumf %97, %98 : vector<256x128xf32>
    %100 = vector.shape_cast %99 : vector<256x128xf32> to vector<4x8x8x128xf32>
    %c0_40 = arith.constant 0 : index
    %c0_41 = arith.constant 0 : index
    %c0_42 = arith.constant 0 : index
    %c0_43 = arith.constant 0 : index
    %c0_44 = arith.constant 0 : index
    %101 = vector.load %arg14[%c0_40, %c0_41, %c0_42, %c0_43, %c0_44] : memref<1x4x8x8x128xf32, #tpu.memory_space<vmem>>, vector<1x4x8x8x128xf32>
    %102 = vector.shape_cast %101 : vector<1x4x8x8x128xf32> to vector<4x8x8x128xf32>
    %103 = vector.shape_cast %100 : vector<4x8x8x128xf32> to vector<1x4x8x8x128xf32>
    tpu.vector_store %arg14[%c0_40, %c0_41, %c0_42, %c0_43, %c0_44], %103 {strides = array<i32>} : memref<1x4x8x8x128xf32, #tpu.memory_space<vmem>>, vector<1x4x8x8x128xf32>,
    return
  }
  func.func @transform_0(%arg0: i32, %arg1: i32) -> (i32, i32, i32, i32, i32) {
    %c4_i32 = arith.constant 4 : i32
    %0 = arith.muli %arg1, %c4_i32 : i32
    %c1_i32 = arith.constant 1 : i32
    %1 = arith.subi %0, %c1_i32 : i32
    %c0_i32 = arith.constant 0 : i32
    %2 = arith.maxsi %1, %c0_i32 : i32
    %c0_i32_0 = arith.constant 0 : i32
    %c0_i32_1 = arith.constant 0 : i32
    %c0_i32_2 = arith.constant 0 : i32
    %c0_i32_3 = arith.constant 0 : i32
    return %arg0, %2, %c0_i32_0, %c0_i32_1, %c0_i32_2 : i32, i32, i32, i32, i32
  }
  func.func @transform_1(%arg0: i32, %arg1: i32) -> (i32, i32, i32, i32, i32) {
    %c0_i32 = arith.constant 0 : i32
    %c0_i32_0 = arith.constant 0 : i32
    %c0_i32_1 = arith.constant 0 : i32
    %c0_i32_2 = arith.constant 0 : i32
    return %arg0, %arg1, %c0_i32, %c0_i32_0, %c0_i32_1 : i32, i32, i32, i32, i32
  }
  func.func @transform_2(%arg0: i32, %arg1: i32) -> (i32, i32, i32, i32, i32) {
    %c1_i32 = arith.constant 1 : i32
    %0 = arith.addi %arg1, %c1_i32 : i32
    %c4_i32 = arith.constant 4 : i32
    %1 = arith.muli %0, %c4_i32 : i32
    %c7_i32 = arith.constant 7 : i32
    %2 = arith.minsi %1, %c7_i32 : i32
    %c0_i32 = arith.constant 0 : i32
    %c0_i32_0 = arith.constant 0 : i32
    %c0_i32_1 = arith.constant 0 : i32
    %c0_i32_2 = arith.constant 0 : i32
    return %arg0, %2, %c0_i32, %c0_i32_0, %c0_i32_1 : i32, i32, i32, i32, i32
  }
  func.func @transform_3(%arg0: i32, %arg1: i32) -> (i32, i32) {
    %c0_i32 = arith.constant 0 : i32
    %c0_i32_0 = arith.constant 0 : i32
    %c0_i32_1 = arith.constant 0 : i32
    return %c0_i32, %c0_i32_0 : i32, i32
  }
  func.func @transform_4(%arg0: i32, %arg1: i32) -> (i32, i32) {
    %c0_i32 = arith.constant 0 : i32
    %c0_i32_0 = arith.constant 0 : i32
    %c0_i32_1 = arith.constant 0 : i32
    return %c0_i32, %c0_i32_0 : i32, i32
  }
  func.func @transform_5(%arg0: i32, %arg1: i32) -> (i32, i32) {
    %c0_i32 = arith.constant 0 : i32
    %c0_i32_0 = arith.constant 0 : i32
    %c0_i32_1 = arith.constant 0 : i32
    return %c0_i32, %c0_i32_0 : i32, i32
  }
  func.func @transform_6(%arg0: i32, %arg1: i32) -> (i32, i32) {
    %c0_i32 = arith.constant 0 : i32
    %c0_i32_0 = arith.constant 0 : i32
    %c0_i32_1 = arith.constant 0 : i32
    return %c0_i32, %c0_i32_0 : i32, i32
  }
  func.func @transform_7(%arg0: i32, %arg1: i32) -> (i32, i32) {
    %c0_i32 = arith.constant 0 : i32
    %c0_i32_0 = arith.constant 0 : i32
    %c0_i32_1 = arith.constant 0 : i32
    return %c0_i32, %c0_i32_0 : i32, i32
  }
  func.func @transform_8(%arg0: i32, %arg1: i32) -> (i32, i32) {
    %c0_i32 = arith.constant 0 : i32
    %c0_i32_0 = arith.constant 0 : i32
    %c0_i32_1 = arith.constant 0 : i32
    return %c0_i32, %c0_i32_0 : i32, i32
  }
  func.func @transform_9(%arg0: i32, %arg1: i32) -> (i32, i32) {
    %c0_i32 = arith.constant 0 : i32
    %c0_i32_0 = arith.constant 0 : i32
    %c0_i32_1 = arith.constant 0 : i32
    return %c0_i32, %c0_i32_0 : i32, i32
  }
  func.func @transform_10(%arg0: i32, %arg1: i32) -> (i32, i32) {
    %c0_i32 = arith.constant 0 : i32
    %c0_i32_0 = arith.constant 0 : i32
    %c0_i32_1 = arith.constant 0 : i32
    return %c0_i32, %c0_i32_0 : i32, i32
  }
  func.func @transform_11(%arg0: i32, %arg1: i32) -> (i32, i32) {
    %c0_i32 = arith.constant 0 : i32
    %c0_i32_0 = arith.constant 0 : i32
    %c0_i32_1 = arith.constant 0 : i32
    return %c0_i32, %c0_i32_0 : i32, i32
  }
  func.func @transform_12(%arg0: i32, %arg1: i32) -> (i32, i32, i32, i32, i32) {
    %c0_i32 = arith.constant 0 : i32
    %c0_i32_0 = arith.constant 0 : i32
    %c0_i32_1 = arith.constant 0 : i32
    %c0_i32_2 = arith.constant 0 : i32
    return %arg0, %arg1, %c0_i32, %c0_i32_0, %c0_i32_1 : i32, i32, i32, i32, i32
  }
}

</mosaic_0001>

<llo_original>
// kernel: bottleneck_forward.1
$region0: #{bottleneck_forward.1}
  #allocation0 [shape = 'u32[]', space=smem, size = 0x4, offset = 0x4, fixed_abs, tag = 'smem constant byte address 0x4 - core index']
  #allocation1 [shape = 'u32[144,128]{1,0:T(1,128)}', space=vmem, size = 0x12000, scoped, tag = 'internal scratch']
  %s0 = inlined_call_operand.hbm [shape: f32[2,8,8,8,128], index: 0, kind: input, shape index: {}, may-alias: {0,1,2}]
  %s1 = inlined_call_operand.hbm [shape: f32[2,8,8,8,128], index: 1, kind: input, shape index: {}, may-alias: {0,1,2}]
  %s2 = inlined_call_operand.hbm [shape: f32[2,8,8,8,128], index: 2, kind: input, shape index: {}, may-alias: {0,1,2}]
  %s3 = inlined_call_operand.vmem [shape: bf16[128,32], index: 3, kind: input, shape index: {}]
  %s4 = inlined_call_operand.vmem [shape: f32[1,32], index: 4, kind: input, shape index: {}]
  %s5 = inlined_call_operand.vmem [shape: f32[1,32], index: 5, kind: input, shape index: {}]
  %s6 = inlined_call_operand.vmem [shape: bf16[864,32], index: 6, kind: input, shape index: {}]
  %s7 = inlined_call_operand.vmem [shape: f32[1,32], index: 7, kind: input, shape index: {}]
  %s8 = inlined_call_operand.vmem [shape: f32[1,32], index: 8, kind: input, shape index: {}]
  %s9 = inlined_call_operand.vmem [shape: bf16[32,128], index: 9, kind: input, shape index: {}]
  %s10 = inlined_call_operand.vmem [shape: f32[1,128], index: 10, kind: input, shape index: {}]
  %s11 = inlined_call_operand.vmem [shape: f32[1,128], index: 11, kind: input, shape index: {}]
  %s12 = inlined_call_operand.hbm [shape: f32[2,8,8,8,128], index: 12, kind: output, shape index: {}]
  %s13 = sld [smem:[#allocation0]]
  $region93: #{bottleneck_forward.1} parent=0
    _
  %s15 = ssub.s32 1, %s13
  %s16 = scalar_select 0, %s15, %s13
  $region1: #{bottleneck_forward.1} parent=0
    #allocation2 [shape = 'u8[65536]{0}', space=vmem, size = 0x10000, scoped, tag = 'input window, operand 0']
    #allocation3 [shape = 's32[2]{0}', space=sflag, size = 0x8, scoped, tag = 'scoped memory for bottleneck_forward.1']
    #allocation4 [shape = 's32[2]{0}', space=sflag, size = 0x8, scoped, tag = 'scoped memory for bottleneck_forward.1']
    #allocation5 [shape = 'u8[262144]{0}', space=vmem, size = 0x40000, scoped, tag = 'input window, operand 1']
    #allocation6 [shape = 's32[2]{0}', space=sflag, size = 0x8, scoped, tag = 'scoped memory for bottleneck_forward.1']
    #allocation7 [shape = 'u8[65536]{0}', space=vmem, size = 0x10000, scoped, tag = 'input window, operand 2']
    #allocation8 [shape = 'u8[262144]{0}', space=vmem, size = 0x40000, scoped, tag = 'output window, operand 0']
    %17 = vsyncpa [#allocation3], 0
    %s18 = scalar_lea.sflag [#allocation3], 1
    %19 = vsyncpa %s18, 0
    %20 = vsyncpa [#allocation6], 0
    %s21 = scalar_lea.sflag [#allocation6], 1
    %22 = vsyncpa %s21, 0
    %23 = vsyncpa [#allocation4], 0
    %s24 = scalar_lea.sflag [#allocation4], 1
    %25 = vsyncpa %s24, 0
    loop: start=0, step=1, limit=6
    $region2: #{bottleneck_forward.1} parent=1 // loop_pre_header
      _
    $region3: #{bottleneck_forward.1} parent=1 // loop_header
      %s27 = sphi 0, %s31
      %p28 = scmp.ge.s32.totalorder %s27, 6
      %s34 = sphi 0, %s46
      %s35 = sphi 0, %s42
      %s36 = sphi 0, %s34
      %s37 = sphi 0, %s35
      %s38 = sphi 0, %s36
      %s39 = sphi 0, %s37
      %s59 = sphi 0, %s61
      %s62 = sphi 0, %s59
      %s63 = sphi 0, %s62
      %s79 = sphi 0, %s63
      %s87 = sphi 0, %s89
      %s90 = sphi 0, %s87
      %s91 = sphi 0, %s90
      %s107 = sphi 0, %s91
      %s123 = sphi 0, %s125
      %s126 = sphi 0, %s123
      %s127 = sphi 0, %s126
      %s143 = sphi 0, %s127
      %s147 = sphi 0, %s147
      %s149 = sphi 0, %s147
      %s150 = sphi 0, %s149
      %s164 = sphi 0, %s150
      %s168 = sphi 0, %s168
      %s170 = sphi 0, %s168
      %s171 = sphi 0, %s170
      %s185 = sphi 0, %s171
      %s189 = sphi 0, %s189
      %s191 = sphi 0, %s189
      %s192 = sphi 0, %s191
      %s206 = sphi 0, %s192
      %s210 = sphi 0, %s210
      %s212 = sphi 0, %s210
      %s213 = sphi 0, %s212
      %s227 = sphi 0, %s213
      %s231 = sphi 0, %s231
      %s233 = sphi 0, %s231
      %s234 = sphi 0, %s233
      %s248 = sphi 0, %s234
      %s252 = sphi 0, %s252
      %s254 = sphi 0, %s252
      %s255 = sphi 0, %s254
      %s269 = sphi 0, %s255
      %s273 = sphi 0, %s273
      %s275 = sphi 0, %s273
      %s276 = sphi 0, %s275
      %s290 = sphi 0, %s276
      %s294 = sphi 0, %s294
      %s296 = sphi 0, %s294
      %s297 = sphi 0, %s296
      %s311 = sphi 0, %s297
      %s315 = sphi 0, %s315
      %s317 = sphi 0, %s315
      %s318 = sphi 0, %s317
      %s332 = sphi 0, %s318
      %s340 = sphi 0, %s342
      %s343 = sphi 0, %s340
      %s344 = sphi 0, %s343
      %s360 = sphi 0, %s344
    $region4: #{bottleneck_forward.1} parent=1 // loop_header_branch
      %30 = sbr.rel (%p28) target = $region8
    $region5: #{bottleneck_forward.1} parent=1 // loop_body
      %s32 = ssub.s32 %s27, 1
      %s33 = ssub.s32 %s27, 2
      %s40 = sadd.s32 1, %s35
      %p41 = scmp.ge.s32.totalorder %s40, 2
      %s42 = scalar_select %p41, 0, %s40
      %s43 = sadd.s32 1, %s34
      %s44 = scalar_select %p41, %s43, %s34
      %p45 = scmp.ge.s32.totalorder %s44, 2
      %s46 = scalar_select %p45, 0, %s44
      %s47 = smul.u32 %s35, 4
      %s48 = ssub.s32 %s47, 1
      %p49 = scmp.gt.s32.totalorder %s48, 0
      %s50 = scalar_select %p49, %s48, 0
      %s51 = smul.u32 %s42, 4
      %s52 = ssub.s32 %s51, 1
      %p53 = scmp.gt.s32.totalorder %s52, 0
      %s54 = scalar_select %p53, %s52, 0
      %s55 = ssub.s32 %s34, %s46
      %s56 = ssub.s32 %s50, %s54
      %s57 = sor.u32 %s55, %s56
      %p58 = scmp.eq.s32.totalorder %s57, 0
      %s60 = sadd.s32 %s59, 1
      %s61 = scalar_select %p58, %s59, %s60
      %p64 = pneg %p58
      %p65 = scmp.eq.s32.totalorder %s27, 3
      %p66 = por %p64, %p65
      %p67 = scmp.ne.s32.totalorder %s59, %s62
      %p68 = scmp.eq.s32.totalorder %s27, 0
      %p69 = por %p67, %p68
      %p70 = scmp.ne.s32.totalorder %s59, %s62
      %p71 = scmp.eq.s32.totalorder %s32, 3
      %p72 = por %p70, %p71
      %p73 = scmp.ne.s32.totalorder %s62, %s63
      %p74 = scmp.eq.s32.totalorder %s32, 0
      %p75 = por %p73, %p74
      %p76 = scmp.ne.s32.totalorder %s62, %s63
      %p77 = scmp.eq.s32.totalorder %s33, 3
      %p78 = por %p76, %p77
      %p80 = scmp.ne.s32.totalorder %s63, %s79
      %p81 = scmp.eq.s32.totalorder %s33, 0
      %p82 = por %p80, %p81
      %s83 = ssub.s32 %s34, %s46
      %s84 = ssub.s32 %s35, %s42
      %s85 = sor.u32 %s83, %s84
      %p86 = scmp.eq.s32.totalorder %s85, 0
      %s88 = sadd.s32 %s87, 1
      %s89 = scalar_select %p86, %s87, %s88
      %p92 = pneg %p86
      %p93 = scmp.eq.s32.totalorder %s27, 3
      %p94 = por %p92, %p93
      %p95 = scmp.ne.s32.totalorder %s87, %s90
      %p96 = scmp.eq.s32.totalorder %s27, 0
      %p97 = por %p95, %p96
      %p98 = scmp.ne.s32.totalorder %s87, %s90
      %p99 = scmp.eq.s32.totalorder %s32, 3
      %p100 = por %p98, %p99
      %p101 = scmp.ne.s32.totalorder %s90, %s91
      %p102 = scmp.eq.s32.totalorder %s32, 0
      %p103 = por %p101, %p102
      %p104 = scmp.ne.s32.totalorder %s90, %s91
      %p105 = scmp.eq.s32.totalorder %s33, 3
      %p106 = por %p104, %p105
      %p108 = scmp.ne.s32.totalorder %s91, %s107
      %p109 = scmp.eq.s32.totalorder %s33, 0
      %p110 = por %p108, %p109
      %s111 = sadd.s32 %s35, 1
      %s112 = smul.u32 %s111, 4
      %p113 = scmp.lt.s32.totalorder %s112, 7
      %s114 = scalar_select %p113, %s112, 7
      %s115 = sadd.s32 %s42, 1
      %s116 = smul.u32 %s115, 4
      %p117 = scmp.lt.s32.totalorder %s116, 7
      %s118 = scalar_select %p117, %s116, 7
      %s119 = ssub.s32 %s34, %s46
      %s120 = ssub.s32 %s114, %s118
      %s121 = sor.u32 %s119, %s120
      %p122 = scmp.eq.s32.totalorder %s121, 0
      %s124 = sadd.s32 %s123, 1
      %s125 = scalar_select %p122, %s123, %s124
      %p128 = pneg %p122
      %p129 = scmp.eq.s32.totalorder %s27, 3
      %p130 = por %p128, %p129
      %p131 = scmp.ne.s32.totalorder %s123, %s126
      %p132 = scmp.eq.s32.totalorder %s27, 0
      %p133 = por %p131, %p132
      %p134 = scmp.ne.s32.totalorder %s123, %s126
      %p135 = scmp.eq.s32.totalorder %s32, 3
      %p136 = por %p134, %p135
      %p137 = scmp.ne.s32.totalorder %s126, %s127
      %p138 = scmp.eq.s32.totalorder %s32, 0
      %p139 = por %p137, %p138
      %p140 = scmp.ne.s32.totalorder %s126, %s127
      %p141 = scmp.eq.s32.totalorder %s33, 3
      %p142 = por %p140, %p141
      %p144 = scmp.ne.s32.totalorder %s127, %s143
      %p145 = scmp.eq.s32.totalorder %s33, 0
      %p146 = por %p144, %p145
      %s148 = sadd.s32 %s147, 1
      %p151 = scmp.eq.s32.totalorder %s27, 3
      %p152 = scmp.ne.s32.totalorder %s147, %s149
      %p153 = scmp.eq.s32.totalorder %s27, 0
      %p154 = por %p152, %p153
      %p155 = scmp.ne.s32.totalorder %s147, %s149
      %p156 = scmp.eq.s32.totalorder %s32, 3
      %p157 = por %p155, %p156
      %p158 = scmp.ne.s32.totalorder %s149, %s150
      %p159 = scmp.eq.s32.totalorder %s32, 0
      %p160 = por %p158, %p159
      %p161 = scmp.ne.s32.totalorder %s149, %s150
      %p162 = scmp.eq.s32.totalorder %s33, 3
      %p163 = por %p161, %p162
      %p165 = scmp.ne.s32.totalorder %s150, %s164
      %p166 = scmp.eq.s32.totalorder %s33, 0
      %p167 = por %p165, %p166
      %s169 = sadd.s32 %s168, 1
      %p172 = scmp.eq.s32.totalorder %s27, 3
      %p173 = scmp.ne.s32.totalorder %s168, %s170
      %p174 = scmp.eq.s32.totalorder %s27, 0
      %p175 = por %p173, %p174
      %p176 = scmp.ne.s32.totalorder %s168, %s170
      %p177 = scmp.eq.s32.totalorder %s32, 3
      %p178 = por %p176, %p177
      %p179 = scmp.ne.s32.totalorder %s170, %s171
      %p180 = scmp.eq.s32.totalorder %s32, 0
      %p181 = por %p179, %p180
      %p182 = scmp.ne.s32.totalorder %s170, %s171
      %p183 = scmp.eq.s32.totalorder %s33, 3
      %p184 = por %p182, %p183
      %p186 = scmp.ne.s32.totalorder %s171, %s185
      %p187 = scmp.eq.s32.totalorder %s33, 0
      %p188 = por %p186, %p187
      %s190 = sadd.s32 %s189, 1
      %p193 = scmp.eq.s32.totalorder %s27, 3
      %p194 = scmp.ne.s32.totalorder %s189, %s191
      %p195 = scmp.eq.s32.totalorder %s27, 0
      %p196 = por %p194, %p195
      %p197 = scmp.ne.s32.totalorder %s189, %s191
      %p198 = scmp.eq.s32.totalorder %s32, 3
      %p199 = por %p197, %p198
      %p200 = scmp.ne.s32.totalorder %s191, %s192
      %p201 = scmp.eq.s32.totalorder %s32, 0
      %p202 = por %p200, %p201
      %p203 = scmp.ne.s32.totalorder %s191, %s192
      %p204 = scmp.eq.s32.totalorder %s33, 3
      %p205 = por %p203, %p204
      %p207 = scmp.ne.s32.totalorder %s192, %s206
      %p208 = scmp.eq.s32.totalorder %s33, 0
      %p209 = por %p207, %p208
      %s211 = sadd.s32 %s210, 1
      %p214 = scmp.eq.s32.totalorder %s27, 3
      %p215 = scmp.ne.s32.totalorder %s210, %s212
      %p216 = scmp.eq.s32.totalorder %s27, 0
      %p217 = por %p215, %p216
      %p218 = scmp.ne.s32.totalorder %s210, %s212
      %p219 = scmp.eq.s32.totalorder %s32, 3
      %p220 = por %p218, %p219
      %p221 = scmp.ne.s32.totalorder %s212, %s213
      %p222 = scmp.eq.s32.totalorder %s32, 0
      %p223 = por %p221, %p222
      %p224 = scmp.ne.s32.totalorder %s212, %s213
      %p225 = scmp.eq.s32.totalorder %s33, 3
      %p226 = por %p224, %p225
      %p228 = scmp.ne.s32.totalorder %s213, %s227
      %p229 = scmp.eq.s32.totalorder %s33, 0
      %p230 = por %p228, %p229
      %s232 = sadd.s32 %s231, 1
      %p235 = scmp.eq.s32.totalorder %s27, 3
      %p236 = scmp.ne.s32.totalorder %s231, %s233
      %p237 = scmp.eq.s32.totalorder %s27, 0
      %p238 = por %p236, %p237
      %p239 = scmp.ne.s32.totalorder %s231, %s233
      %p240 = scmp.eq.s32.totalorder %s32, 3
      %p241 = por %p239, %p240
      %p242 = scmp.ne.s32.totalorder %s233, %s234
      %p243 = scmp.eq.s32.totalorder %s32, 0
      %p244 = por %p242, %p243
      %p245 = scmp.ne.s32.totalorder %s233, %s234
      %p246 = scmp.eq.s32.totalorder %s33, 3
      %p247 = por %p245, %p246
      %p249 = scmp.ne.s32.totalorder %s234, %s248
      %p250 = scmp.eq.s32.totalorder %s33, 0
      %p251 = por %p249, %p250
      %s253 = sadd.s32 %s252, 1
      %p256 = scmp.eq.s32.totalorder %s27, 3
      %p257 = scmp.ne.s32.totalorder %s252, %s254
      %p258 = scmp.eq.s32.totalorder %s27, 0
      %p259 = por %p257, %p258
      %p260 = scmp.ne.s32.totalorder %s252, %s254
      %p261 = scmp.eq.s32.totalorder %s32, 3
      %p262 = por %p260, %p261
      %p263 = scmp.ne.s32.totalorder %s254, %s255
      %p264 = scmp.eq.s32.totalorder %s32, 0
      %p265 = por %p263, %p264
      %p266 = scmp.ne.s32.totalorder %s254, %s255
      %p267 = scmp.eq.s32.totalorder %s33, 3
      %p268 = por %p266, %p267
      %p270 = scmp.ne.s32.totalorder %s255, %s269
      %p271 = scmp.eq.s32.totalorder %s33, 0
      %p272 = por %p270, %p271
      %s274 = sadd.s32 %s273, 1
      %p277 = scmp.eq.s32.totalorder %s27, 3
      %p278 = scmp.ne.s32.totalorder %s273, %s275
      %p279 = scmp.eq.s32.totalorder %s27, 0
      %p280 = por %p278, %p279
      %p281 = scmp.ne.s32.totalorder %s273, %s275
      %p282 = scmp.eq.s32.totalorder %s32, 3
      %p283 = por %p281, %p282
      %p284 = scmp.ne.s32.totalorder %s275, %s276
      %p285 = scmp.eq.s32.totalorder %s32, 0
      %p286 = por %p284, %p285
      %p287 = scmp.ne.s32.totalorder %s275, %s276
      %p288 = scmp.eq.s32.totalorder %s33, 3
      %p289 = por %p287, %p288
      %p291 = scmp.ne.s32.totalorder %s276, %s290
      %p292 = scmp.eq.s32.totalorder %s33, 0
      %p293 = por %p291, %p292
      %s295 = sadd.s32 %s294, 1
      %p298 = scmp.eq.s32.totalorder %s27, 3
      %p299 = scmp.ne.s32.totalorder %s294, %s296
      %p300 = scmp.eq.s32.totalorder %s27, 0
      %p301 = por %p299, %p300
      %p302 = scmp.ne.s32.totalorder %s294, %s296
      %p303 = scmp.eq.s32.totalorder %s32, 3
      %p304 = por %p302, %p303
      %p305 = scmp.ne.s32.totalorder %s296, %s297
      %p306 = scmp.eq.s32.totalorder %s32, 0
      %p307 = por %p305, %p306
      %p308 = scmp.ne.s32.totalorder %s296, %s297
      %p309 = scmp.eq.s32.totalorder %s33, 3
      %p310 = por %p308, %p309
      %p312 = scmp.ne.s32.totalorder %s297, %s311
      %p313 = scmp.eq.s32.totalorder %s33, 0
      %p314 = por %p312, %p313
      %s316 = sadd.s32 %s315, 1
      %p319 = scmp.eq.s32.totalorder %s27, 3
      %p320 = scmp.ne.s32.totalorder %s315, %s317
      %p321 = scmp.eq.s32.totalorder %s27, 0
      %p322 = por %p320, %p321
      %p323 = scmp.ne.s32.totalorder %s315, %s317
      %p324 = scmp.eq.s32.totalorder %s32, 3
      %p325 = por %p323, %p324
      %p326 = scmp.ne.s32.totalorder %s317, %s318
      %p327 = scmp.eq.s32.totalorder %s32, 0
      %p328 = por %p326, %p327
      %p329 = scmp.ne.s32.totalorder %s317, %s318
      %p330 = scmp.eq.s32.totalorder %s33, 3
      %p331 = por %p329, %p330
      %p333 = scmp.ne.s32.totalorder %s318, %s332
      %p334 = scmp.eq.s32.totalorder %s33, 0
      %p335 = por %p333, %p334
      %s336 = ssub.s32 %s34, %s46
      %s337 = ssub.s32 %s35, %s42
      %s338 = sor.u32 %s336, %s337
      %p339 = scmp.eq.s32.totalorder %s338, 0
      %s341 = sadd.s32 %s340, 1
      %s342 = scalar_select %p339, %s340, %s341
      %p345 = pneg %p339
      %p346 = scmp.eq.s32.totalorder %s27, 3
      %p347 = por %p345, %p346
      %p348 = scmp.ne.s32.totalorder %s340, %s343
      %p349 = scmp.eq.s32.totalorder %s27, 0
      %p350 = por %p348, %p349
      %p351 = scmp.ne.s32.totalorder %s340, %s343
      %p352 = scmp.eq.s32.totalorder %s32, 3
      %p353 = por %p351, %p352
      %p354 = scmp.ne.s32.totalorder %s343, %s344
      %p355 = scmp.eq.s32.totalorder %s32, 0
      %p356 = por %p354, %p355
      %p357 = scmp.ne.s32.totalorder %s343, %s344
      %p358 = scmp.eq.s32.totalorder %s33, 3
      %p359 = por %p357, %p358
      %p361 = scmp.ne.s32.totalorder %s344, %s360
      %p362 = scmp.eq.s32.totalorder %s33, 0
      %p363 = por %p361, %p362
      %p364 = scmp.le.s32.totalorder 1, %s27
      %p365 = scmp.lt.s32.totalorder %s27, 5
      %p366 = pnand %p364, %p365
      %p367 = pneg %p366
      // Predicated region
      $region9: #{bottleneck_forward.1} parent=5 // pred_check
        _
      $region10: #{bottleneck_forward.1} parent=5 // pred_check_branch
        %369 = sbr.rel (%p366) target = $region12
      $region11: #{bottleneck_forward.1} parent=5 // pred_region
        %s370 = ssub.s32 %s27, 1
        // Predicated region
        $region13: #{bottleneck_forward.1} parent=11 // pred_check
          %p371 = pneg %p160
        $region14: #{bottleneck_forward.1} parent=11 // pred_check_branch
          %373 = sbr.rel (%p371) target = $region16
        $region15: #{bottleneck_forward.1} parent=11 // pred_region
          _
        $region16: #{bottleneck_forward.1} parent=11 // pred_fallthru
          _
        // Predicated region
        $region17: #{bottleneck_forward.1} parent=11 // pred_check
          %p374 = pneg %p181
        $region18: #{bottleneck_forward.1} parent=11 // pred_check_branch
          %376 = sbr.rel (%p374) target = $region20
        $region19: #{bottleneck_forward.1} parent=11 // pred_region
          _
        $region20: #{bottleneck_forward.1} parent=11 // pred_fallthru
          _
        // Predicated region
        $region21: #{bottleneck_forward.1} parent=11 // pred_check
          %p377 = pneg %p202
        $region22: #{bottleneck_forward.1} parent=11 // pred_check_branch
          %379 = sbr.rel (%p377) target = $region24
        $region23: #{bottleneck_forward.1} parent=11 // pred_region
          _
        $region24: #{bottleneck_forward.1} parent=11 // pred_fallthru
          _
        // Predicated region
        $region25: #{bottleneck_forward.1} parent=11 // pred_check
          %p380 = pneg %p223
        $region26: #{bottleneck_forward.1} parent=11 // pred_check_branch
          %382 = sbr.rel (%p380) target = $region28
        $region27: #{bottleneck_forward.1} parent=11 // pred_region
          _
        $region28: #{bottleneck_forward.1} parent=11 // pred_fallthru
          _
        // Predicated region
        $region29: #{bottleneck_forward.1} parent=11 // pred_check
          %p383 = pneg %p244
        $region30: #{bottleneck_forward.1} parent=11 // pred_check_branch
          %385 = sbr.rel (%p383) target = $region32
        $region31: #{bottleneck_forward.1} parent=11 // pred_region
          _
        $region32: #{bottleneck_forward.1} parent=11 // pred_fallthru
          _
        // Predicated region
        $region33: #{bottleneck_forward.1} parent=11 // pred_check
          %p386 = pneg %p265
        $region34: #{bottleneck_forward.1} parent=11 // pred_check_branch
          %388 = sbr.rel (%p386) target = $region36
        $region35: #{bottleneck_forward.1} parent=11 // pred_region
          _
        $region36: #{bottleneck_forward.1} parent=11 // pred_fallthru
          _
        // Predicated region
        $region37: #{bottleneck_forward.1} parent=11 // pred_check
          %p389 = pneg %p286
        $region38: #{bottleneck_forward.1} parent=11 // pred_check_branch
          %391 = sbr.rel (%p389) target = $region40
        $region39: #{bottleneck_forward.1} parent=11 // pred_region
          _
        $region40: #{bottleneck_forward.1} parent=11 // pred_fallthru
          _
        // Predicated region
        $region41: #{bottleneck_forward.1} parent=11 // pred_check
          %p392 = pneg %p307
        $region42: #{bottleneck_forward.1} parent=11 // pred_check_branch
          %394 = sbr.rel (%p392) target = $region44
        $region43: #{bottleneck_forward.1} parent=11 // pred_region
          _
        $region44: #{bottleneck_forward.1} parent=11 // pred_fallthru
          _
        // Predicated region
        $region45: #{bottleneck_forward.1} parent=11 // pred_check
          %p395 = pneg %p328
        $region46: #{bottleneck_forward.1} parent=11 // pred_check_branch
          %397 = sbr.rel (%p395) target = $region48
        $region47: #{bottleneck_forward.1} parent=11 // pred_region
          _
        $region48: #{bottleneck_forward.1} parent=11 // pred_fallthru
          _
      $region12: #{bottleneck_forward.1} parent=5 // pred_fallthru
        _
      %p398 = scmp.lt.s32.totalorder %s27, 4
      // Predicated region
      $region49: #{bottleneck_forward.1} parent=5 // pred_check
        %p399 = pneg %p398
      $region50: #{bottleneck_forward.1} parent=5 // pred_check_branch
        %401 = sbr.rel (%p399) target = $region52
      $region51: #{bottleneck_forward.1} parent=5 // pred_region
        // Predicated region
        $region53: #{bottleneck_forward.1} parent=51 // pred_check
          %p402 = pneg %p69
        $region54: #{bottleneck_forward.1} parent=51 // pred_check_branch
          %404 = sbr.rel (%p402) target = $region56
        $region55: #{bottleneck_forward.1} parent=51 // pred_region
          %s405 = sand.u32 %s59, 1
          %s406 = scalar_lea.sflag [#allocation3], %s405
          %s407 = sand.u32 %s59, 1
          %s408 = smul.addr %s407, 64
          %s409 = scalar_lea.vmem [#allocation2], %s408
          %s410 = smul.u32 %s35, 4
          %s411 = ssub.s32 %s410, 1
          %p412 = scmp.gt.s32.totalorder %s411, 0
          %s413 = scalar_select %p412, %s411, 0
          %s415 = ssub.s32 1024, 1024
          %416 = vsyncadd %s406, %s415
          %s417 = smul.addr %s413, 8
          %s418 = smul.addr %s34, 64
          %s419 = sadd.s32 %s417, %s418
          %s420 = smul.addr %s419, 128
          %s421 = scalar_lea.hbm %s0, %s420
          %s422 = sshll.u32 %s409, 4
          %s423 = int_to_ptr.vmem [resolvable:$true] %s422
          %428 = dma.hbm_to_vmem [thread:$0]  %s421, 1024, %s423, %s406, 128, 128, 8
        $region56: #{bottleneck_forward.1} parent=51 // pred_fallthru
          _
        // Predicated region
        $region57: #{bottleneck_forward.1} parent=51 // pred_check
          %p429 = pneg %p97
        $region58: #{bottleneck_forward.1} parent=51 // pred_check_branch
          %431 = sbr.rel (%p429) target = $region60
        $region59: #{bottleneck_forward.1} parent=51 // pred_region
          %s432 = sand.u32 %s27, 1
          %s433 = scalar_lea.sflag [#allocation6], %s432
          %s434 = sand.u32 %s87, 1
          %s435 = smul.addr %s434, 256
          %s436 = scalar_lea.vmem [#allocation5], %s435
          %s437 = smul.u32 4, %s35
          %s439 = ssub.s32 4096, 4096
          %440 = vsyncadd %s433, %s439
          %s441 = smul.addr %s437, 8
          %s442 = smul.addr %s34, 64
          %s443 = sadd.s32 %s441, %s442
          %s444 = smul.addr %s443, 128
          %s445 = scalar_lea.hbm %s1, %s444
          %s446 = sshll.u32 %s436, 4
          %s447 = int_to_ptr.vmem [resolvable:$true] %s446
          %452 = dma.hbm_to_vmem [thread:$0]  %s445, 4096, %s447, %s433, 128, 128, 8
        $region60: #{bottleneck_forward.1} parent=51 // pred_fallthru
          _
        // Predicated region
        $region61: #{bottleneck_forward.1} parent=51 // pred_check
          %p453 = pneg %p133
        $region62: #{bottleneck_forward.1} parent=51 // pred_check_branch
          %455 = sbr.rel (%p453) target = $region64
        $region63: #{bottleneck_forward.1} parent=51 // pred_region
          %s456 = sand.u32 %s27, 1
          %s457 = scalar_lea.sflag [#allocation6], %s456
          %s458 = sand.u32 %s123, 1
          %s459 = smul.addr %s458, 64
          %s460 = scalar_lea.vmem [#allocation7], %s459
          %s461 = sadd.s32 %s35, 1
          %s462 = smul.u32 %s461, 4
          %p463 = scmp.lt.s32.totalorder %s462, 7
          %s464 = scalar_select %p463, %s462, 7
          %s466 = ssub.s32 1024, 1024
          %467 = vsyncadd %s457, %s466
          %s468 = smul.addr %s464, 8
          %s469 = smul.addr %s34, 64
          %s470 = sadd.s32 %s468, %s469
          %s471 = smul.addr %s470, 128
          %s472 = scalar_lea.hbm %s2, %s471
          %s473 = sshll.u32 %s460, 4
          %s474 = int_to_ptr.vmem [resolvable:$true] %s473
          %479 = dma.hbm_to_vmem [thread:$0]  %s472, 1024, %s474, %s457, 128, 128, 8
        $region64: #{bottleneck_forward.1} parent=51 // pred_fallthru
          _
      $region52: #{bottleneck_forward.1} parent=5 // pred_fallthru
        _
      %p480 = scmp.le.s32.totalorder 1, %s27
      %p481 = scmp.lt.s32.totalorder %s27, 5
      %p482 = pnand %p480, %p481
      %p483 = pneg %p482
      // Predicated region
      $region65: #{bottleneck_forward.1} parent=5 // pred_check
        _
      $region66: #{bottleneck_forward.1} parent=5 // pred_check_branch
        %485 = sbr.rel (%p482) target = $region68
      $region67: #{bottleneck_forward.1} parent=5 // pred_region
        %s486 = ssub.s32 %s27, 1
        %s487 = sand.u32 %s62, 1
        %s488 = scalar_lea.sflag [#allocation3], %s487
        %s489 = sand.u32 %s62, 1
        %s490 = smul.addr %s489, 64
        %s491 = scalar_lea.vmem [#allocation2], %s490
        // Predicated region
        $region69: #{bottleneck_forward.1} parent=67 // pred_check
          %p492 = pneg %p75
        $region70: #{bottleneck_forward.1} parent=67 // pred_check_branch
          %494 = sbr.rel (%p492) target = $region72
        $region71: #{bottleneck_forward.1} parent=67 // pred_region
          %495 = dma.done %s488, 1024
        $region72: #{bottleneck_forward.1} parent=67 // pred_fallthru
          _
        %s496 = sand.u32 %s32, 1
        %s497 = scalar_lea.sflag [#allocation6], %s496
        %s498 = sand.u32 %s90, 1
        %s499 = smul.addr %s498, 256
        %s500 = scalar_lea.vmem [#allocation5], %s499
        // Predicated region
        $region73: #{bottleneck_forward.1} parent=67 // pred_check
          %p501 = pneg %p103
        $region74: #{bottleneck_forward.1} parent=67 // pred_check_branch
          %503 = sbr.rel (%p501) target = $region76
        $region75: #{bottleneck_forward.1} parent=67 // pred_region
          %504 = dma.done %s497, 4096
        $region76: #{bottleneck_forward.1} parent=67 // pred_fallthru
          _
        %s505 = sand.u32 %s32, 1
        %s506 = scalar_lea.sflag [#allocation6], %s505
        %s507 = sand.u32 %s126, 1
        %s508 = smul.addr %s507, 64
        %s509 = scalar_lea.vmem [#allocation7], %s508
        // Predicated region
        $region77: #{bottleneck_forward.1} parent=67 // pred_check
          %p510 = pneg %p139
        $region78: #{bottleneck_forward.1} parent=67 // pred_check_branch
          %512 = sbr.rel (%p510) target = $region80
        $region79: #{bottleneck_forward.1} parent=67 // pred_region
          %513 = dma.done %s506, 1024
        $region80: #{bottleneck_forward.1} parent=67 // pred_fallthru
          _
        %s514 = sand.u32 %s62, 1
        %s515 = scalar_lea.sflag [#allocation3], %s514
        %s516 = sand.u32 %s62, 1
        %s517 = smul.addr %s516, 64
        %s518 = scalar_lea.vmem [#allocation2], %s517
        %p519 = pneg %p75
        %p520 = pneg %p72
        %s521 = sand.u32 %s32, 1
        %s522 = scalar_lea.sflag [#allocation6], %s521
        %s523 = sand.u32 %s90, 1
        %s524 = smul.addr %s523, 256
        %s525 = scalar_lea.vmem [#allocation5], %s524
        %p526 = pneg %p103
        %p527 = pneg %p100
        %s528 = sand.u32 %s32, 1
        %s529 = scalar_lea.sflag [#allocation6], %s528
        %s530 = sand.u32 %s126, 1
        %s531 = smul.addr %s530, 64
        %s532 = scalar_lea.vmem [#allocation7], %s531
        %p533 = pneg %p139
        %p534 = pneg %p136
        %p535 = pneg %p160
        %p536 = pneg %p157
        %p537 = pneg %p181
        %p538 = pneg %p178
        %p539 = pneg %p202
        %p540 = pneg %p199
        %p541 = pneg %p223
        %p542 = pneg %p220
        %p543 = pneg %p244
        %p544 = pneg %p241
        %p545 = pneg %p265
        %p546 = pneg %p262
        %p547 = pneg %p286
        %p548 = pneg %p283
        %p549 = pneg %p307
        %p550 = pneg %p304
        %p551 = pneg %p328
        %p552 = pneg %p325
        %p553 = pneg %p356
        %p554 = pneg %p353
        %s555 = sand.u32 %s343, 1
        %s556 = scalar_lea.sflag [#allocation4], %s555
        %s557 = sand.u32 %s343, 1
        %s558 = smul.addr %s557, 256
        %s559 = scalar_lea.vmem [#allocation8], %s558
        %s560 = smul.u32 %s37, 4
        %s561 = ssub.s32 %s560, 1
        %p562 = scmp.gt.s32.totalorder %s561, 0
        %s563 = scalar_select %p562, %s561, 0
        %s564 = smul.u32 4, %s37
        %s565 = sadd.s32 %s37, 1
        %s566 = smul.u32 %s565, 4
        %p567 = scmp.lt.s32.totalorder %s566, 7
        %s568 = scalar_select %p567, %s566, 7
        %s569 = smul.u32 4, %s37
        %v571 = vld [vmem:[%s500] sm:$0xff]
        %v572 = vld [vmem:[%s500 + $0x8] sm:$0xff]
        %v573 = vld [vmem:[%s500 + $0x10] sm:$0xff]
        %v574 = vld [vmem:[%s500 + $0x18] sm:$0xff]
        %v575 = vld [vmem:[%s500 + $0x20] sm:$0xff]
        %v576 = vld [vmem:[%s500 + $0x28] sm:$0xff]
        %v577 = vld [vmem:[%s500 + $0x30] sm:$0xff]
        %v578 = vld [vmem:[%s500 + $0x38] sm:$0xff]
        %v579 = vld [vmem:[%s500 + $0x40] sm:$0xff]
        %v580 = vld [vmem:[%s500 + $0x48] sm:$0xff]
        %v581 = vld [vmem:[%s500 + $0x50] sm:$0xff]
        %v582 = vld [vmem:[%s500 + $0x58] sm:$0xff]
        %v583 = vld [vmem:[%s500 + $0x60] sm:$0xff]
        %v584 = vld [vmem:[%s500 + $0x68] sm:$0xff]
        %v585 = vld [vmem:[%s500 + $0x70] sm:$0xff]
        %v586 = vld [vmem:[%s500 + $0x78] sm:$0xff]
        %v587 = vld [vmem:[%s500 + $0x80] sm:$0xff]
        %v588 = vld [vmem:[%s500 + $0x88] sm:$0xff]
        %v589 = vld [vmem:[%s500 + $0x90] sm:$0xff]
        %v590 = vld [vmem:[%s500 + $0x98] sm:$0xff]
        %v591 = vld [vmem:[%s500 + $0xa0] sm:$0xff]
        %v592 = vld [vmem:[%s500 + $0xa8] sm:$0xff]
        %v593 = vld [vmem:[%s500 + $0xb0] sm:$0xff]
        %v594 = vld [vmem:[%s500 + $0xb8] sm:$0xff]
        %v595 = vld [vmem:[%s500 + $0xc0] sm:$0xff]
        %v596 = vld [vmem:[%s500 + $0xc8] sm:$0xff]
        %v597 = vld [vmem:[%s500 + $0xd0] sm:$0xff]
        %v598 = vld [vmem:[%s500 + $0xd8] sm:$0xff]
        %v599 = vld [vmem:[%s500 + $0xe0] sm:$0xff]
        %v600 = vld [vmem:[%s500 + $0xe8] sm:$0xff]
        %v601 = vld [vmem:[%s500 + $0xf0] sm:$0xff]
        %v602 = vld [vmem:[%s500 + $0xf8] sm:$0xff]
        %v603 = vld [vmem:[%s491] sm:$0xff]
        %v604 = vld [vmem:[%s491 + $0x8] sm:$0xff]
        %v605 = vld [vmem:[%s491 + $0x10] sm:$0xff]
        %v606 = vld [vmem:[%s491 + $0x18] sm:$0xff]
        %v607 = vld [vmem:[%s491 + $0x20] sm:$0xff]
        %v608 = vld [vmem:[%s491 + $0x28] sm:$0xff]
        %v609 = vld [vmem:[%s491 + $0x30] sm:$0xff]
        %v610 = vld [vmem:[%s491 + $0x38] sm:$0xff]
        %v611 = vld [vmem:[%s509] sm:$0xff]
        %v612 = vld [vmem:[%s509 + $0x8] sm:$0xff]
        %v613 = vld [vmem:[%s509 + $0x10] sm:$0xff]
        %v614 = vld [vmem:[%s509 + $0x18] sm:$0xff]
        %v615 = vld [vmem:[%s509 + $0x20] sm:$0xff]
        %v616 = vld [vmem:[%s509 + $0x28] sm:$0xff]
        %v617 = vld [vmem:[%s509 + $0x30] sm:$0xff]
        %v618 = vld [vmem:[%s509 + $0x38] sm:$0xff]
        %v619 = vpack.c.bf16 %v604, %v603
        %v620 = vpack.c.bf16 %v606, %v605
        %v621 = vpack.c.bf16 %v608, %v607
        %v622 = vpack.c.bf16 %v610, %v609
        %v623 = vpack.c.bf16 %v572, %v571
        %v624 = vpack.c.bf16 %v574, %v573
        %v625 = vpack.c.bf16 %v576, %v575
        %v626 = vpack.c.bf16 %v578, %v577
        %v627 = vpack.c.bf16 %v580, %v579
        %v628 = vpack.c.bf16 %v582, %v581
        %v629 = vpack.c.bf16 %v584, %v583
        %v630 = vpack.c.bf16 %v586, %v585
        %v631 = vpack.c.bf16 %v588, %v587
        %v632 = vpack.c.bf16 %v590, %v589
        %v633 = vpack.c.bf16 %v592, %v591
        %v634 = vpack.c.bf16 %v594, %v593
        %v635 = vpack.c.bf16 %v596, %v595
        %v636 = vpack.c.bf16 %v598, %v597
        %v637 = vpack.c.bf16 %v600, %v599
        %v638 = vpack.c.bf16 %v602, %v601
        %v639 = vpack.c.bf16 %v612, %v611
        %v640 = vpack.c.bf16 %v614, %v613
        %v641 = vpack.c.bf16 %v616, %v615
        %v642 = vpack.c.bf16 %v618, %v617
        %v643 = vld [vmem:[%s3] sm:$0xf]
        %v644 = vld [vmem:[%s3 + $0x4] sm:$0xf]
        %v645 = vld [vmem:[%s3 + $0x8] sm:$0xf]
        %v646 = vld [vmem:[%s3 + $0xc] sm:$0xf]
        %v647 = vld [vmem:[%s3 + $0x10] sm:$0xf]
        %v648 = vld [vmem:[%s3 + $0x14] sm:$0xf]
        %v649 = vld [vmem:[%s3 + $0x18] sm:$0xf]
        %v650 = vld [vmem:[%s3 + $0x1c] sm:$0xf]
        %v651 = vld [vmem:[%s3 + $0x20] sm:$0xf]
        %v652 = vld [vmem:[%s3 + $0x24] sm:$0xf]
        %v653 = vld [vmem:[%s3 + $0x28] sm:$0xf]
        %v654 = vld [vmem:[%s3 + $0x2c] sm:$0xf]
        %v655 = vld [vmem:[%s3 + $0x30] sm:$0xf]
        %v656 = vld [vmem:[%s3 + $0x34] sm:$0xf]
        %v657 = vld [vmem:[%s3 + $0x38] sm:$0xf]
        %v658 = vld [vmem:[%s3 + $0x3c] sm:$0xf]
        %v675 = vunpack.c.l.b16 %v643
        %v676 = vunpack.c.l.b16 %v644
        %v677 = vunpack.c.l.b16 %v645
        %v678 = vunpack.c.l.b16 %v646
        %v679 = vunpack.c.l.b16 %v647
        %v680 = vunpack.c.l.b16 %v648
        %v681 = vunpack.c.l.b16 %v649
        %v682 = vunpack.c.l.b16 %v650
        %v683 = vunpack.c.l.b16 %v651
        %v684 = vunpack.c.l.b16 %v652
        %v685 = vunpack.c.l.b16 %v653
        %v686 = vunpack.c.l.b16 %v654
        %v687 = vunpack.c.l.b16 %v655
        %v688 = vunpack.c.l.b16 %v656
        %v689 = vunpack.c.l.b16 %v657
        %v690 = vunpack.c.l.b16 %v658
        %v691 = vpack.c.b16 %v676, %v675
        %v692 = vpack.c.b16 %v678, %v677
        %v693 = vpack.c.b16 %v680, %v679
        %v694 = vpack.c.b16 %v682, %v681
        %v695 = vpack.c.b16 %v684, %v683
        %v696 = vpack.c.b16 %v686, %v685
        %v697 = vpack.c.b16 %v688, %v687
        %v698 = vpack.c.b16 %v690, %v689
        %707 = vmatprep.subr.bf16.mxu0 0
        %708 = vmatpush1.bf16.msra.mxu0 %v691
        %709 = vmatprep.subr.bf16.mxu0 0
        %710 = vmatpush1.bf16.msra.mxu0 %v692
        %711 = vmatprep.subr.bf16.mxu0 0
        %712 = vmatpush1.bf16.msra.mxu0 %v693
        %713 = vmatprep.subr.bf16.mxu0 0
        %714 = vmatpush1.bf16.msra.mxu0 %v694
        %715 = vmatprep.subr.bf16.mxu0 0
        %716 = vmatpush1.bf16.msra.mxu0 %v695
        %717 = vmatprep.subr.bf16.mxu0 0
        %718 = vmatpush1.bf16.msra.mxu0 %v696
        %719 = vmatprep.subr.bf16.mxu0 0
        %720 = vmatpush1.bf16.msra.mxu0 %v697
        %721 = vmatprep.subr.bf16.mxu0 0
        %722 = vmatpush1.bf16.msra.mxu0 %v698
        %723 = vmatprep.subr.bf16.mxu0 0
        %724 = vmatpush1.bf16.msra.mxu0 0
        %725 = vmatprep.subr.bf16.mxu0 0
        %726 = vmatpush1.bf16.msra.mxu0 0
        %727 = vmatprep.subr.bf16.mxu0 0
        %728 = vmatpush1.bf16.msra.mxu0 0
        %729 = vmatprep.subr.bf16.mxu0 0
        %730 = vmatpush1.bf16.msra.mxu0 0
        %731 = vmatprep.subr.bf16.mxu0 0
        %732 = vmatpush1.bf16.msra.mxu0 0
        %733 = vmatprep.subr.bf16.mxu0 0
        %734 = vmatpush1.bf16.msra.mxu0 0
        %735 = vmatprep.subr.bf16.mxu0 0
        %736 = vmatpush1.bf16.msra.mxu0 0
        %737 = vmatprep.subr.bf16.mxu0 0
        %738 = vmatpush1.bf16.msra.mxu0 0
        %739 = vmatprep.mubr.bf16.mxu0 0
        %740 = vmatmul.mubr.bf16.gmra.mrb[0].mxu0 %v619
        %v741 = vpop.f32.mrb[0].mxu0
        %v742 = vadd.f32 0.0, %v741
        %v743 = vpop.f32.mrb[0].mxu0
        %v744 = vpop.f32.mrb[0].mxu0
        %v745 = vadd.f32 0.0, %v744
        %v746 = vpop.f32.mrb[0].mxu0
        %747 = vmatprep.mubr.bf16.mxu0 0
        %748 = vmatmul.mubr.bf16.gmra.mrb[0].mxu0 %v620
        %v749 = vpop.f32.mrb[0].mxu0
        %v750 = vadd.f32 0.0, %v749
        %v751 = vpop.f32.mrb[0].mxu0
        %v752 = vpop.f32.mrb[0].mxu0
        %v753 = vadd.f32 0.0, %v752
        %v754 = vpop.f32.mrb[0].mxu0
        %755 = vmatprep.mubr.bf16.mxu0 0
        %756 = vmatmul.mubr.bf16.gmra.mrb[0].mxu0 %v621
        %v757 = vpop.f32.mrb[0].mxu0
        %v758 = vadd.f32 0.0, %v757
        %v759 = vpop.f32.mrb[0].mxu0
        %v760 = vpop.f32.mrb[0].mxu0
        %v761 = vadd.f32 0.0, %v760
        %v762 = vpop.f32.mrb[0].mxu0
        %763 = vmatprep.mubr.bf16.mxu0 0
        %764 = vmatmul.mubr.bf16.gmra.mrb[0].mxu0 %v622
        %v765 = vpop.f32.mrb[0].mxu0
        %v766 = vadd.f32 0.0, %v765
        %v767 = vpop.f32.mrb[0].mxu0
        %v768 = vpop.f32.mrb[0].mxu0
        %v769 = vadd.f32 0.0, %v768
        %v770 = vpop.f32.mrb[0].mxu0
        %771 = vmatprep.mubr.bf16.mxu0 0
        %772 = vmatmul.mubr.bf16.gmra.mrb[0].mxu0 %v623
        %v773 = vpop.f32.mrb[0].mxu0
        %v774 = vadd.f32 0.0, %v773
        %v775 = vpop.f32.mrb[0].mxu0
        %v776 = vpop.f32.mrb[0].mxu0
        %v777 = vadd.f32 0.0, %v776
        %v778 = vpop.f32.mrb[0].mxu0
        %779 = vmatprep.mubr.bf16.mxu0 0
        %780 = vmatmul.mubr.bf16.gmra.mrb[0].mxu0 %v624
        %v781 = vpop.f32.mrb[0].mxu0
        %v782 = vadd.f32 0.0, %v781
        %v783 = vpop.f32.mrb[0].mxu0
        %v784 = vpop.f32.mrb[0].mxu0
        %v785 = vadd.f32 0.0, %v784
        %v786 = vpop.f32.mrb[0].mxu0
        %787 = vmatprep.mubr.bf16.mxu0 0
        %788 = vmatmul.mubr.bf16.gmra.mrb[0].mxu0 %v625
        %v789 = vpop.f32.mrb[0].mxu0
        %v790 = vadd.f32 0.0, %v789
        %v791 = vpop.f32.mrb[0].mxu0
        %v792 = vpop.f32.mrb[0].mxu0
        %v793 = vadd.f32 0.0, %v792
        %v794 = vpop.f32.mrb[0].mxu0
        %795 = vmatprep.mubr.bf16.mxu0 0
        %796 = vmatmul.mubr.bf16.gmra.mrb[0].mxu0 %v626
        %v797 = vpop.f32.mrb[0].mxu0
        %v798 = vadd.f32 0.0, %v797
        %v799 = vpop.f32.mrb[0].mxu0
        %v800 = vpop.f32.mrb[0].mxu0
        %v801 = vadd.f32 0.0, %v800
        %v802 = vpop.f32.mrb[0].mxu0
        %803 = vmatprep.mubr.bf16.mxu0 0
        %804 = vmatmul.mubr.bf16.gmra.mrb[0].mxu0 %v627
        %v805 = vpop.f32.mrb[0].mxu0
        %v806 = vadd.f32 0.0, %v805
        %v807 = vpop.f32.mrb[0].mxu0
        %v808 = vpop.f32.mrb[0].mxu0
        %v809 = vadd.f32 0.0, %v808
        %v810 = vpop.f32.mrb[0].mxu0
        %811 = vmatprep.mubr.bf16.mxu0 0
        %812 = vmatmul.mubr.bf16.gmra.mrb[0].mxu0 %v628
        %v813 = vpop.f32.mrb[0].mxu0
        %v814 = vadd.f32 0.0, %v813
        %v815 = vpop.f32.mrb[0].mxu0
        %v816 = vpop.f32.mrb[0].mxu0
        %v817 = vadd.f32 0.0, %v816
        %v818 = vpop.f32.mrb[0].mxu0
        %819 = vmatprep.mubr.bf16.mxu0 0
        %820 = vmatmul.mubr.bf16.gmra.mrb[0].mxu0 %v629
        %v821 = vpop.f32.mrb[0].mxu0
        %v822 = vadd.f32 0.0, %v821
        %v823 = vpop.f32.mrb[0].mxu0
        %v824 = vpop.f32.mrb[0].mxu0
        %v825 = vadd.f32 0.0, %v824
        %v826 = vpop.f32.mrb[0].mxu0
        %827 = vmatprep.mubr.bf16.mxu0 0
        %828 = vmatmul.mubr.bf16.gmra.mrb[0].mxu0 %v630
        %v829 = vpop.f32.mrb[0].mxu0
        %v830 = vadd.f32 0.0, %v829
        %v831 = vpop.f32.mrb[0].mxu0
        %v832 = vpop.f32.mrb[0].mxu0
        %v833 = vadd.f32 0.0, %v832
        %v834 = vpop.f32.mrb[0].mxu0
        %835 = vmatprep.mubr.bf16.mxu0 0
        %836 = vmatmul.mubr.bf16.gmra.mrb[0].mxu0 %v631
        %v837 = vpop.f32.mrb[0].mxu0
        %v838 = vadd.f32 0.0, %v837
        %v839 = vpop.f32.mrb[0].mxu0
        %v840 = vpop.f32.mrb[0].mxu0
        %v841 = vadd.f32 0.0, %v840
        %v842 = vpop.f32.mrb[0].mxu0
        %843 = vmatprep.mubr.bf16.mxu0 0
        %844 = vmatmul.mubr.bf16.gmra.mrb[0].mxu0 %v632
        %v845 = vpop.f32.mrb[0].mxu0
        %v846 = vadd.f32 0.0, %v845
        %v847 = vpop.f32.mrb[0].mxu0
        %v848 = vpop.f32.mrb[0].mxu0
        %v849 = vadd.f32 0.0, %v848
        %v850 = vpop.f32.mrb[0].mxu0
        %851 = vmatprep.mubr.bf16.mxu0 0
        %852 = vmatmul.mubr.bf16.gmra.mrb[0].mxu0 %v633
        %v853 = vpop.f32.mrb[0].mxu0
        %v854 = vadd.f32 0.0, %v853
        %v855 = vpop.f32.mrb[0].mxu0
        %v856 = vpop.f32.mrb[0].mxu0
        %v857 = vadd.f32 0.0, %v856
        %v858 = vpop.f32.mrb[0].mxu0
        %859 = vmatprep.mubr.bf16.mxu0 0
        %860 = vmatmul.mubr.bf16.gmra.mrb[0].mxu0 %v634
        %v861 = vpop.f32.mrb[0].mxu0
        %v862 = vadd.f32 0.0, %v861
        %v863 = vpop.f32.mrb[0].mxu0
        %v864 = vpop.f32.mrb[0].mxu0
        %v865 = vadd.f32 0.0, %v864
        %v866 = vpop.f32.mrb[0].mxu0
        %867 = vmatprep.mubr.bf16.mxu0 0
        %868 = vmatmul.mubr.bf16.gmra.mrb[0].mxu0 %v635
        %v869 = vpop.f32.mrb[0].mxu0
        %v870 = vadd.f32 0.0, %v869
        %v871 = vpop.f32.mrb[0].mxu0
        %v872 = vpop.f32.mrb[0].mxu0
        %v873 = vadd.f32 0.0, %v872
        %v874 = vpop.f32.mrb[0].mxu0
        %875 = vmatprep.mubr.bf16.mxu0 0
        %876 = vmatmul.mubr.bf16.gmra.mrb[0].mxu0 %v636
        %v877 = vpop.f32.mrb[0].mxu0
        %v878 = vadd.f32 0.0, %v877
        %v879 = vpop.f32.mrb[0].mxu0
        %v880 = vpop.f32.mrb[0].mxu0
        %v881 = vadd.f32 0.0, %v880
        %v882 = vpop.f32.mrb[0].mxu0
        %883 = vmatprep.mubr.bf16.mxu0 0
        %884 = vmatmul.mubr.bf16.gmra.mrb[0].mxu0 %v637
        %v885 = vpop.f32.mrb[0].mxu0
        %v886 = vadd.f32 0.0, %v885
        %v887 = vpop.f32.mrb[0].mxu0
        %v888 = vpop.f32.mrb[0].mxu0
        %v889 = vadd.f32 0.0, %v888
        %v890 = vpop.f32.mrb[0].mxu0
        %891 = vmatprep.mubr.bf16.mxu0 0
        %892 = vmatmul.mubr.bf16.gmra.mrb[0].mxu0 %v638
        %v893 = vpop.f32.mrb[0].mxu0
        %v894 = vadd.f32 0.0, %v893
        %v895 = vpop.f32.mrb[0].mxu0
        %v896 = vpop.f32.mrb[0].mxu0
        %v897 = vadd.f32 0.0, %v896
        %v898 = vpop.f32.mrb[0].mxu0
        %899 = vmatprep.mubr.bf16.mxu0 0
        %900 = vmatmul.mubr.bf16.gmra.mrb[0].mxu0 %v639
        %v901 = vpop.f32.mrb[0].mxu0
        %v902 = vadd.f32 0.0, %v901
        %v903 = vpop.f32.mrb[0].mxu0
        %v904 = vpop.f32.mrb[0].mxu0
        %v905 = vadd.f32 0.0, %v904
        %v906 = vpop.f32.mrb[0].mxu0
        %907 = vmatprep.mubr.bf16.mxu0 0
        %908 = vmatmul.mubr.bf16.gmra.mrb[0].mxu0 %v640
        %v909 = vpop.f32.mrb[0].mxu0
        %v910 = vadd.f32 0.0, %v909
        %v911 = vpop.f32.mrb[0].mxu0
        %v912 = vpop.f32.mrb[0].mxu0
        %v913 = vadd.f32 0.0, %v912
        %v914 = vpop.f32.mrb[0].mxu0
        %915 = vmatprep.mubr.bf16.mxu0 0
        %916 = vmatmul.mubr.bf16.gmra.mrb[0].mxu0 %v641
        %v917 = vpop.f32.mrb[0].mxu0
        %v918 = vadd.f32 0.0, %v917
        %v919 = vpop.f32.mrb[0].mxu0
        %v920 = vpop.f32.mrb[0].mxu0
        %v921 = vadd.f32 0.0, %v920
        %v922 = vpop.f32.mrb[0].mxu0
        %923 = vmatprep.mubr.bf16.mxu0 0
        %924 = vmatmul.mubr.bf16.gmra.mrb[0].mxu0 %v642
        %v925 = vpop.f32.mrb[0].mxu0
        %v926 = vadd.f32 0.0, %v925
        %v927 = vpop.f32.mrb[0].mxu0
        %v928 = vpop.f32.mrb[0].mxu0
        %v929 = vadd.f32 0.0, %v928
        %v930 = vpop.f32.mrb[0].mxu0
        %931 = vdwg.mxu0
        %v932 = vld [vmem:[%s4] sm:$0x1]
        %v934 = vlaneseq
        %v935 = vshrl.u32 %v934, 7
        %v936 = vsub.s32 0, %v935
        %v937 = vrot.slane %v932, %v936
        %v939 = vmul.f32 %v742, %v937
        %v940 = vmul.f32 %v745, %v937
        %v941 = vmul.f32 %v750, %v937
        %v942 = vmul.f32 %v753, %v937
        %v943 = vmul.f32 %v758, %v937
        %v944 = vmul.f32 %v761, %v937
        %v945 = vmul.f32 %v766, %v937
        %v946 = vmul.f32 %v769, %v937
        %v947 = vmul.f32 %v774, %v937
        %v948 = vmul.f32 %v777, %v937
        %v949 = vmul.f32 %v782, %v937
        %v950 = vmul.f32 %v785, %v937
        %v951 = vmul.f32 %v790, %v937
        %v952 = vmul.f32 %v793, %v937
        %v953 = vmul.f32 %v798, %v937
        %v954 = vmul.f32 %v801, %v937
        %v955 = vmul.f32 %v806, %v937
        %v956 = vmul.f32 %v809, %v937
        %v957 = vmul.f32 %v814, %v937
        %v958 = vmul.f32 %v817, %v937
        %v959 = vmul.f32 %v822, %v937
        %v960 = vmul.f32 %v825, %v937
        %v961 = vmul.f32 %v830, %v937
        %v962 = vmul.f32 %v833, %v937
        %v963 = vmul.f32 %v838, %v937
        %v964 = vmul.f32 %v841, %v937
        %v965 = vmul.f32 %v846, %v937
        %v966 = vmul.f32 %v849, %v937
        %v967 = vmul.f32 %v854, %v937
        %v968 = vmul.f32 %v857, %v937
        %v969 = vmul.f32 %v862, %v937
        %v970 = vmul.f32 %v865, %v937
        %v971 = vmul.f32 %v870, %v937
        %v972 = vmul.f32 %v873, %v937
        %v973 = vmul.f32 %v878, %v937
        %v974 = vmul.f32 %v881, %v937
        %v975 = vmul.f32 %v886, %v937
        %v976 = vmul.f32 %v889, %v937
        %v977 = vmul.f32 %v894, %v937
        %v978 = vmul.f32 %v897, %v937
        %v979 = vmul.f32 %v902, %v937
        %v980 = vmul.f32 %v905, %v937
        %v981 = vmul.f32 %v910, %v937
        %v982 = vmul.f32 %v913, %v937
        %v983 = vmul.f32 %v918, %v937
        %v984 = vmul.f32 %v921, %v937
        %v985 = vmul.f32 %v926, %v937
        %v986 = vmul.f32 %v929, %v937
        %v987 = vld [vmem:[%s5] sm:$0x1]
        %v989 = vlaneseq
        %v990 = vshrl.u32 %v989, 7
        %v991 = vsub.s32 0, %v990
        %v992 = vrot.slane %v987, %v991
        %v994 = vadd.f32 %v939, %v992
        %v995 = vadd.f32 %v940, %v992
        %v996 = vadd.f32 %v941, %v992
        %v997 = vadd.f32 %v942, %v992
        %v998 = vadd.f32 %v943, %v992
        %v999 = vadd.f32 %v944, %v992
        %v1000 = vadd.f32 %v945, %v992
        %v1001 = vadd.f32 %v946, %v992
        %v1002 = vadd.f32 %v947, %v992
        %v1003 = vadd.f32 %v948, %v992
        %v1004 = vadd.f32 %v949, %v992
        %v1005 = vadd.f32 %v950, %v992
        %v1006 = vadd.f32 %v951, %v992
        %v1007 = vadd.f32 %v952, %v992
        %v1008 = vadd.f32 %v953, %v992
        %v1009 = vadd.f32 %v954, %v992
        %v1010 = vadd.f32 %v955, %v992
        %v1011 = vadd.f32 %v956, %v992
        %v1012 = vadd.f32 %v957, %v992
        %v1013 = vadd.f32 %v958, %v992
        %v1014 = vadd.f32 %v959, %v992
        %v1015 = vadd.f32 %v960, %v992
        %v1016 = vadd.f32 %v961, %v992
        %v1017 = vadd.f32 %v962, %v992
        %v1018 = vadd.f32 %v963, %v992
        %v1019 = vadd.f32 %v964, %v992
        %v1020 = vadd.f32 %v965, %v992
        %v1021 = vadd.f32 %v966, %v992
        %v1022 = vadd.f32 %v967, %v992
        %v1023 = vadd.f32 %v968, %v992
        %v1024 = vadd.f32 %v969, %v992
        %v1025 = vadd.f32 %v970, %v992
        %v1026 = vadd.f32 %v971, %v992
        %v1027 = vadd.f32 %v972, %v992
        %v1028 = vadd.f32 %v973, %v992
        %v1029 = vadd.f32 %v974, %v992
        %v1030 = vadd.f32 %v975, %v992
        %v1031 = vadd.f32 %v976, %v992
        %v1032 = vadd.f32 %v977, %v992
        %v1033 = vadd.f32 %v978, %v992
        %v1034 = vadd.f32 %v979, %v992
        %v1035 = vadd.f32 %v980, %v992
        %v1036 = vadd.f32 %v981, %v992
        %v1037 = vadd.f32 %v982, %v992
        %v1038 = vadd.f32 %v983, %v992
        %v1039 = vadd.f32 %v984, %v992
        %v1040 = vadd.f32 %v985, %v992
        %v1041 = vadd.f32 %v986, %v992
        %v1042 = vmax.f32 %v994, 0.0
        %v1043 = vmax.f32 %v995, 0.0
        %v1044 = vmax.f32 %v996, 0.0
        %v1045 = vmax.f32 %v997, 0.0
        %v1046 = vmax.f32 %v998, 0.0
        %v1047 = vmax.f32 %v999, 0.0
        %v1048 = vmax.f32 %v1000, 0.0
        %v1049 = vmax.f32 %v1001, 0.0
        %v1050 = vmax.f32 %v1002, 0.0
        %v1051 = vmax.f32 %v1003, 0.0
        %v1052 = vmax.f32 %v1004, 0.0
        %v1053 = vmax.f32 %v1005, 0.0
        %v1054 = vmax.f32 %v1006, 0.0
        %v1055 = vmax.f32 %v1007, 0.0
        %v1056 = vmax.f32 %v1008, 0.0
        %v1057 = vmax.f32 %v1009, 0.0
        %v1058 = vmax.f32 %v1010, 0.0
        %v1059 = vmax.f32 %v1011, 0.0
        %v1060 = vmax.f32 %v1012, 0.0
        %v1061 = vmax.f32 %v1013, 0.0
        %v1062 = vmax.f32 %v1014, 0.0
        %v1063 = vmax.f32 %v1015, 0.0
        %v1064 = vmax.f32 %v1016, 0.0
        %v1065 = vmax.f32 %v1017, 0.0
        %v1066 = vmax.f32 %v1018, 0.0
        %v1067 = vmax.f32 %v1019, 0.0
        %v1068 = vmax.f32 %v1020, 0.0
        %v1069 = vmax.f32 %v1021, 0.0
        %v1070 = vmax.f32 %v1022, 0.0
        %v1071 = vmax.f32 %v1023, 0.0
        %v1072 = vmax.f32 %v1024, 0.0
        %v1073 = vmax.f32 %v1025, 0.0
        %v1074 = vmax.f32 %v1026, 0.0
        %v1075 = vmax.f32 %v1027, 0.0
        %v1076 = vmax.f32 %v1028, 0.0
        %v1077 = vmax.f32 %v1029, 0.0
        %v1078 = vmax.f32 %v1030, 0.0
        %v1079 = vmax.f32 %v1031, 0.0
        %v1080 = vmax.f32 %v1032, 0.0
        %v1081 = vmax.f32 %v1033, 0.0
        %v1082 = vmax.f32 %v1034, 0.0
        %v1083 = vmax.f32 %v1035, 0.0
        %v1084 = vmax.f32 %v1036, 0.0
        %v1085 = vmax.f32 %v1037, 0.0
        %v1086 = vmax.f32 %v1038, 0.0
        %v1087 = vmax.f32 %v1039, 0.0
        %v1088 = vmax.f32 %v1040, 0.0
        %v1089 = vmax.f32 %v1041, 0.0
        %v1090 = vlaneseq
        %v1091 = vshrl.u32 %v1090, 7
        %v1092 = vadd.s32 %v1091, 8
        %v1093 = vadd.s32 %v1091, 16
        %v1094 = vadd.s32 %v1091, 24
        %v1095 = vadd.s32 %v1091, 32
        %v1096 = vadd.s32 %v1091, 40
        %v1097 = vadd.s32 %v1091, 48
        %v1098 = vadd.s32 %v1091, 56
        %v1099 = vadd.s32 %v1091, 64
        %v1100 = vadd.s32 %v1091, 72
        %v1101 = vadd.s32 %v1091, 80
        %v1102 = vadd.s32 %v1091, 88
        %v1103 = vadd.s32 %v1091, 96
        %v1104 = vadd.s32 %v1091, 104
        %v1105 = vadd.s32 %v1091, 112
        %v1106 = vadd.s32 %v1091, 120
        %v1107 = vadd.s32 %v1091, 128
        %v1108 = vadd.s32 %v1091, 136
        %v1109 = vadd.s32 %v1091, 144
        %v1110 = vadd.s32 %v1091, 152
        %v1111 = vadd.s32 %v1091, 160
        %v1112 = vadd.s32 %v1091, 168
        %v1113 = vadd.s32 %v1091, 176
        %v1114 = vadd.s32 %v1091, 184
        %v1115 = vadd.s32 %v1091, 192
        %v1116 = vadd.s32 %v1091, 200
        %v1117 = vadd.s32 %v1091, 208
        %v1118 = vadd.s32 %v1091, 216
        %v1119 = vadd.s32 %v1091, 224
        %v1120 = vadd.s32 %v1091, 232
        %v1121 = vadd.s32 %v1091, 240
        %v1122 = vadd.s32 %v1091, 248
        %v1123 = vadd.s32 %v1091, 256
        %v1124 = vadd.s32 %v1091, 264
        %v1125 = vadd.s32 %v1091, 272
        %v1126 = vadd.s32 %v1091, 280
        %v1127 = vadd.s32 %v1091, 288
        %v1128 = vadd.s32 %v1091, 296
        %v1129 = vadd.s32 %v1091, 304
        %v1130 = vadd.s32 %v1091, 312
        %v1131 = vadd.s32 %v1091, 320
        %v1132 = vadd.s32 %v1091, 328
        %v1133 = vadd.s32 %v1091, 336
        %v1134 = vadd.s32 %v1091, 344
        %v1135 = vadd.s32 %v1091, 352
        %v1136 = vadd.s32 %v1091, 360
        %v1137 = vadd.s32 %v1091, 368
        %v1138 = vadd.s32 %v1091, 376
        %vm1139 = vcmp.ge.s32.totalorder %v1091, 64
        %vm1140 = vcmp.ge.s32.totalorder %v1092, 64
        %vm1141 = vcmp.ge.s32.totalorder %v1093, 64
        %vm1142 = vcmp.ge.s32.totalorder %v1094, 64
        %vm1143 = vcmp.ge.s32.totalorder %v1095, 64
        %vm1144 = vcmp.ge.s32.totalorder %v1096, 64
        %vm1145 = vcmp.ge.s32.totalorder %v1097, 64
        %vm1146 = vcmp.ge.s32.totalorder %v1098, 64
        %vm1147 = vcmp.ge.s32.totalorder %v1099, 64
        %vm1148 = vcmp.ge.s32.totalorder %v1100, 64
        %vm1149 = vcmp.ge.s32.totalorder %v1101, 64
        %vm1150 = vcmp.ge.s32.totalorder %v1102, 64
        %vm1151 = vcmp.ge.s32.totalorder %v1103, 64
        %vm1152 = vcmp.ge.s32.totalorder %v1104, 64
        %vm1153 = vcmp.ge.s32.totalorder %v1105, 64
        %vm1154 = vcmp.ge.s32.totalorder %v1106, 64
        %vm1155 = vcmp.ge.s32.totalorder %v1107, 64
        %vm1156 = vcmp.ge.s32.totalorder %v1108, 64
        %vm1157 = vcmp.ge.s32.totalorder %v1109, 64
        %vm1158 = vcmp.ge.s32.totalorder %v1110, 64
        %vm1159 = vcmp.ge.s32.totalorder %v1111, 64
        %vm1160 = vcmp.ge.s32.totalorder %v1112, 64
        %vm1161 = vcmp.ge.s32.totalorder %v1113, 64
        %vm1162 = vcmp.ge.s32.totalorder %v1114, 64
        %vm1163 = vcmp.ge.s32.totalorder %v1115, 64
        %vm1164 = vcmp.ge.s32.totalorder %v1116, 64
        %vm1165 = vcmp.ge.s32.totalorder %v1117, 64
        %vm1166 = vcmp.ge.s32.totalorder %v1118, 64
        %vm1167 = vcmp.ge.s32.totalorder %v1119, 64
        %vm1168 = vcmp.ge.s32.totalorder %v1120, 64
        %vm1169 = vcmp.ge.s32.totalorder %v1121, 64
        %vm1170 = vcmp.ge.s32.totalorder %v1122, 64
        %vm1171 = vcmp.ge.s32.totalorder %v1123, 64
        %vm1172 = vcmp.ge.s32.totalorder %v1124, 64
        %vm1173 = vcmp.ge.s32.totalorder %v1125, 64
        %vm1174 = vcmp.ge.s32.totalorder %v1126, 64
        %vm1175 = vcmp.ge.s32.totalorder %v1127, 64
        %vm1176 = vcmp.ge.s32.totalorder %v1128, 64
        %vm1177 = vcmp.ge.s32.totalorder %v1129, 64
        %vm1178 = vcmp.ge.s32.totalorder %v1130, 64
        %vm1179 = vcmp.ge.s32.totalorder %v1131, 64
        %vm1180 = vcmp.ge.s32.totalorder %v1132, 64
        %vm1181 = vcmp.ge.s32.totalorder %v1133, 64
        %vm1182 = vcmp.ge.s32.totalorder %v1134, 64
        %vm1183 = vcmp.ge.s32.totalorder %v1135, 64
        %vm1184 = vcmp.ge.s32.totalorder %v1136, 64
        %vm1185 = vcmp.ge.s32.totalorder %v1137, 64
        %vm1186 = vcmp.ge.s32.totalorder %v1138, 64
        %p1187 = scmp.gt.s32.totalorder %s37, 0
        %s1188 = scalar_select %p1187, 1, 0
        %v1189 = vstv %s1188
        %vm1190 = vcmp.eq.s32.totalorder %v1189, 1
        %vm1191 = vmor %vm1139, %vm1190
        %vm1192 = vmor %vm1140, %vm1190
        %vm1193 = vmor %vm1141, %vm1190
        %vm1194 = vmor %vm1142, %vm1190
        %vm1195 = vmor %vm1143, %vm1190
        %vm1196 = vmor %vm1144, %vm1190
        %vm1197 = vmor %vm1145, %vm1190
        %vm1198 = vmor %vm1146, %vm1190
        %vm1199 = vmor %vm1147, %vm1190
        %vm1200 = vmor %vm1148, %vm1190
        %vm1201 = vmor %vm1149, %vm1190
        %vm1202 = vmor %vm1150, %vm1190
        %vm1203 = vmor %vm1151, %vm1190
        %vm1204 = vmor %vm1152, %vm1190
        %vm1205 = vmor %vm1153, %vm1190
        %vm1206 = vmor %vm1154, %vm1190
        %vm1207 = vmor %vm1155, %vm1190
        %vm1208 = vmor %vm1156, %vm1190
        %vm1209 = vmor %vm1157, %vm1190
        %vm1210 = vmor %vm1158, %vm1190
        %vm1211 = vmor %vm1159, %vm1190
        %vm1212 = vmor %vm1160, %vm1190
        %vm1213 = vmor %vm1161, %vm1190
        %vm1214 = vmor %vm1162, %vm1190
        %vm1215 = vmor %vm1163, %vm1190
        %vm1216 = vmor %vm1164, %vm1190
        %vm1217 = vmor %vm1165, %vm1190
        %vm1218 = vmor %vm1166, %vm1190
        %vm1219 = vmor %vm1167, %vm1190
        %vm1220 = vmor %vm1168, %vm1190
        %vm1221 = vmor %vm1169, %vm1190
        %vm1222 = vmor %vm1170, %vm1190
        %vm1223 = vmor %vm1171, %vm1190
        %vm1224 = vmor %vm1172, %vm1190
        %vm1225 = vmor %vm1173, %vm1190
        %vm1226 = vmor %vm1174, %vm1190
        %vm1227 = vmor %vm1175, %vm1190
        %vm1228 = vmor %vm1176, %vm1190
        %vm1229 = vmor %vm1177, %vm1190
        %vm1230 = vmor %vm1178, %vm1190
        %vm1231 = vmor %vm1179, %vm1190
        %vm1232 = vmor %vm1180, %vm1190
        %vm1233 = vmor %vm1181, %vm1190
        %vm1234 = vmor %vm1182, %vm1190
        %vm1235 = vmor %vm1183, %vm1190
        %vm1236 = vmor %vm1184, %vm1190
        %vm1237 = vmor %vm1185, %vm1190
        %vm1238 = vmor %vm1186, %vm1190
        %vm1239 = vcmp.lt.s32.totalorder %v1091, 320
        %vm1240 = vcmp.lt.s32.totalorder %v1092, 320
        %vm1241 = vcmp.lt.s32.totalorder %v1093, 320
        %vm1242 = vcmp.lt.s32.totalorder %v1094, 320
        %vm1243 = vcmp.lt.s32.totalorder %v1095, 320
        %vm1244 = vcmp.lt.s32.totalorder %v1096, 320
        %vm1245 = vcmp.lt.s32.totalorder %v1097, 320
        %vm1246 = vcmp.lt.s32.totalorder %v1098, 320
        %vm1247 = vcmp.lt.s32.totalorder %v1099, 320
        %vm1248 = vcmp.lt.s32.totalorder %v1100, 320
        %vm1249 = vcmp.lt.s32.totalorder %v1101, 320
        %vm1250 = vcmp.lt.s32.totalorder %v1102, 320
        %vm1251 = vcmp.lt.s32.totalorder %v1103, 320
        %vm1252 = vcmp.lt.s32.totalorder %v1104, 320
        %vm1253 = vcmp.lt.s32.totalorder %v1105, 320
        %vm1254 = vcmp.lt.s32.totalorder %v1106, 320
        %vm1255 = vcmp.lt.s32.totalorder %v1107, 320
        %vm1256 = vcmp.lt.s32.totalorder %v1108, 320
        %vm1257 = vcmp.lt.s32.totalorder %v1109, 320
        %vm1258 = vcmp.lt.s32.totalorder %v1110, 320
        %vm1259 = vcmp.lt.s32.totalorder %v1111, 320
        %vm1260 = vcmp.lt.s32.totalorder %v1112, 320
        %vm1261 = vcmp.lt.s32.totalorder %v1113, 320
        %vm1262 = vcmp.lt.s32.totalorder %v1114, 320
        %vm1263 = vcmp.lt.s32.totalorder %v1115, 320
        %vm1264 = vcmp.lt.s32.totalorder %v1116, 320
        %vm1265 = vcmp.lt.s32.totalorder %v1117, 320
        %vm1266 = vcmp.lt.s32.totalorder %v1118, 320
        %vm1267 = vcmp.lt.s32.totalorder %v1119, 320
        %vm1268 = vcmp.lt.s32.totalorder %v1120, 320
        %vm1269 = vcmp.lt.s32.totalorder %v1121, 320
        %vm1270 = vcmp.lt.s32.totalorder %v1122, 320
        %vm1271 = vcmp.lt.s32.totalorder %v1123, 320
        %vm1272 = vcmp.lt.s32.totalorder %v1124, 320
        %vm1273 = vcmp.lt.s32.totalorder %v1125, 320
        %vm1274 = vcmp.lt.s32.totalorder %v1126, 320
        %vm1275 = vcmp.lt.s32.totalorder %v1127, 320
        %vm1276 = vcmp.lt.s32.totalorder %v1128, 320
        %vm1277 = vcmp.lt.s32.totalorder %v1129, 320
        %vm1278 = vcmp.lt.s32.totalorder %v1130, 320
        %vm1279 = vcmp.lt.s32.totalorder %v1131, 320
        %vm1280 = vcmp.lt.s32.totalorder %v1132, 320
        %vm1281 = vcmp.lt.s32.totalorder %v1133, 320
        %vm1282 = vcmp.lt.s32.totalorder %v1134, 320
        %vm1283 = vcmp.lt.s32.totalorder %v1135, 320
        %vm1284 = vcmp.lt.s32.totalorder %v1136, 320
        %vm1285 = vcmp.lt.s32.totalorder %v1137, 320
        %vm1286 = vcmp.lt.s32.totalorder %v1138, 320
        %p1287 = scmp.lt.s32.totalorder %s37, 1
        %s1288 = scalar_select %p1287, 1, 0
        %v1289 = vstv %s1288
        %vm1290 = vcmp.eq.s32.totalorder %v1289, 1
        %vm1291 = vmor %vm1239, %vm1290
        %vm1292 = vmor %vm1240, %vm1290
        %vm1293 = vmor %vm1241, %vm1290
        %vm1294 = vmor %vm1242, %vm1290
        %vm1295 = vmor %vm1243, %vm1290
        %vm1296 = vmor %vm1244, %vm1290
        %vm1297 = vmor %vm1245, %vm1290
        %vm1298 = vmor %vm1246, %vm1290
        %vm1299 = vmor %vm1247, %vm1290
        %vm1300 = vmor %vm1248, %vm1290
        %vm1301 = vmor %vm1249, %vm1290
        %vm1302 = vmor %vm1250, %vm1290
        %vm1303 = vmor %vm1251, %vm1290
        %vm1304 = vmor %vm1252, %vm1290
        %vm1305 = vmor %vm1253, %vm1290
        %vm1306 = vmor %vm1254, %vm1290
        %vm1307 = vmor %vm1255, %vm1290
        %vm1308 = vmor %vm1256, %vm1290
        %vm1309 = vmor %vm1257, %vm1290
        %vm1310 = vmor %vm1258, %vm1290
        %vm1311 = vmor %vm1259, %vm1290
        %vm1312 = vmor %vm1260, %vm1290
        %vm1313 = vmor %vm1261, %vm1290
        %vm1314 = vmor %vm1262, %vm1290
        %vm1315 = vmor %vm1263, %vm1290
        %vm1316 = vmor %vm1264, %vm1290
        %vm1317 = vmor %vm1265, %vm1290
        %vm1318 = vmor %vm1266, %vm1290
        %vm1319 = vmor %vm1267, %vm1290
        %vm1320 = vmor %vm1268, %vm1290
        %vm1321 = vmor %vm1269, %vm1290
        %vm1322 = vmor %vm1270, %vm1290
        %vm1323 = vmor %vm1271, %vm1290
        %vm1324 = vmor %vm1272, %vm1290
        %vm1325 = vmor %vm1273, %vm1290
        %vm1326 = vmor %vm1274, %vm1290
        %vm1327 = vmor %vm1275, %vm1290
        %vm1328 = vmor %vm1276, %vm1290
        %vm1329 = vmor %vm1277, %vm1290
        %vm1330 = vmor %vm1278, %vm1290
        %vm1331 = vmor %vm1279, %vm1290
        %vm1332 = vmor %vm1280, %vm1290
        %vm1333 = vmor %vm1281, %vm1290
        %vm1334 = vmor %vm1282, %vm1290
        %vm1335 = vmor %vm1283, %vm1290
        %vm1336 = vmor %vm1284, %vm1290
        %vm1337 = vmor %vm1285, %vm1290
        %vm1338 = vmor %vm1286, %vm1290
        %vm1339 = vmand %vm1191, %vm1291
        %vm1340 = vmand %vm1192, %vm1292
        %vm1341 = vmand %vm1193, %vm1293
        %vm1342 = vmand %vm1194, %vm1294
        %vm1343 = vmand %vm1195, %vm1295
        %vm1344 = vmand %vm1196, %vm1296
        %vm1345 = vmand %vm1197, %vm1297
        %vm1346 = vmand %vm1198, %vm1298
        %vm1347 = vmand %vm1199, %vm1299
        %vm1348 = vmand %vm1200, %vm1300
        %vm1349 = vmand %vm1201, %vm1301
        %vm1350 = vmand %vm1202, %vm1302
        %vm1351 = vmand %vm1203, %vm1303
        %vm1352 = vmand %vm1204, %vm1304
        %vm1353 = vmand %vm1205, %vm1305
        %vm1354 = vmand %vm1206, %vm1306
        %vm1355 = vmand %vm1207, %vm1307
        %vm1356 = vmand %vm1208, %vm1308
        %vm1357 = vmand %vm1209, %vm1309
        %vm1358 = vmand %vm1210, %vm1310
        %vm1359 = vmand %vm1211, %vm1311
        %vm1360 = vmand %vm1212, %vm1312
        %vm1361 = vmand %vm1213, %vm1313
        %vm1362 = vmand %vm1214, %vm1314
        %vm1363 = vmand %vm1215, %vm1315
        %vm1364 = vmand %vm1216, %vm1316
        %vm1365 = vmand %vm1217, %vm1317
        %vm1366 = vmand %vm1218, %vm1318
        %vm1367 = vmand %vm1219, %vm1319
        %vm1368 = vmand %vm1220, %vm1320
        %vm1369 = vmand %vm1221, %vm1321
        %vm1370 = vmand %vm1222, %vm1322
        %vm1371 = vmand %vm1223, %vm1323
        %vm1372 = vmand %vm1224, %vm1324
        %vm1373 = vmand %vm1225, %vm1325
        %vm1374 = vmand %vm1226, %vm1326
        %vm1375 = vmand %vm1227, %vm1327
        %vm1376 = vmand %vm1228, %vm1328
        %vm1377 = vmand %vm1229, %vm1329
        %vm1378 = vmand %vm1230, %vm1330
        %vm1379 = vmand %vm1231, %vm1331
        %vm1380 = vmand %vm1232, %vm1332
        %vm1381 = vmand %vm1233, %vm1333
        %vm1382 = vmand %vm1234, %vm1334
        %vm1383 = vmand %vm1235, %vm1335
        %vm1384 = vmand %vm1236, %vm1336
        %vm1385 = vmand %vm1237, %vm1337
        %vm1386 = vmand %vm1238, %vm1338
        %v1387 = vsel %vm1339, 1, 0
        %v1388 = vsel %vm1340, 1, 0
        %v1389 = vsel %vm1341, 1, 0
        %v1390 = vsel %vm1342, 1, 0
        %v1391 = vsel %vm1343, 1, 0
        %v1392 = vsel %vm1344, 1, 0
        %v1393 = vsel %vm1345, 1, 0
        %v1394 = vsel %vm1346, 1, 0
        %v1395 = vsel %vm1347, 1, 0
        %v1396 = vsel %vm1348, 1, 0
        %v1397 = vsel %vm1349, 1, 0
        %v1398 = vsel %vm1350, 1, 0
        %v1399 = vsel %vm1351, 1, 0
        %v1400 = vsel %vm1352, 1, 0
        %v1401 = vsel %vm1353, 1, 0
        %v1402 = vsel %vm1354, 1, 0
        %v1403 = vsel %vm1355, 1, 0
        %v1404 = vsel %vm1356, 1, 0
        %v1405 = vsel %vm1357, 1, 0
        %v1406 = vsel %vm1358, 1, 0
        %v1407 = vsel %vm1359, 1, 0
        %v1408 = vsel %vm1360, 1, 0
        %v1409 = vsel %vm1361, 1, 0
        %v1410 = vsel %vm1362, 1, 0
        %v1411 = vsel %vm1363, 1, 0
        %v1412 = vsel %vm1364, 1, 0
        %v1413 = vsel %vm1365, 1, 0
        %v1414 = vsel %vm1366, 1, 0
        %v1415 = vsel %vm1367, 1, 0
        %v1416 = vsel %vm1368, 1, 0
        %v1417 = vsel %vm1369, 1, 0
        %v1418 = vsel %vm1370, 1, 0
        %v1419 = vsel %vm1371, 1, 0
        %v1420 = vsel %vm1372, 1, 0
        %v1421 = vsel %vm1373, 1, 0
        %v1422 = vsel %vm1374, 1, 0
        %v1423 = vsel %vm1375, 1, 0
        %v1424 = vsel %vm1376, 1, 0
        %v1425 = vsel %vm1377, 1, 0
        %v1426 = vsel %vm1378, 1, 0
        %v1427 = vsel %vm1379, 1, 0
        %v1428 = vsel %vm1380, 1, 0
        %v1429 = vsel %vm1381, 1, 0
        %v1430 = vsel %vm1382, 1, 0
        %v1431 = vsel %vm1383, 1, 0
        %v1432 = vsel %vm1384, 1, 0
        %v1433 = vsel %vm1385, 1, 0
        %v1434 = vsel %vm1386, 1, 0
        %vm1435 = vcmp.eq.s32.totalorder %v1387, 1
        %vm1436 = vcmp.eq.s32.totalorder %v1388, 1
        %vm1437 = vcmp.eq.s32.totalorder %v1389, 1
        %vm1438 = vcmp.eq.s32.totalorder %v1390, 1
        %vm1439 = vcmp.eq.s32.totalorder %v1391, 1
        %vm1440 = vcmp.eq.s32.totalorder %v1392, 1
        %vm1441 = vcmp.eq.s32.totalorder %v1393, 1
        %vm1442 = vcmp.eq.s32.totalorder %v1394, 1
        %vm1443 = vcmp.eq.s32.totalorder %v1395, 1
        %vm1444 = vcmp.eq.s32.totalorder %v1396, 1
        %vm1445 = vcmp.eq.s32.totalorder %v1397, 1
        %vm1446 = vcmp.eq.s32.totalorder %v1398, 1
        %vm1447 = vcmp.eq.s32.totalorder %v1399, 1
        %vm1448 = vcmp.eq.s32.totalorder %v1400, 1
        %vm1449 = vcmp.eq.s32.totalorder %v1401, 1
        %vm1450 = vcmp.eq.s32.totalorder %v1402, 1
        %vm1451 = vcmp.eq.s32.totalorder %v1403, 1
        %vm1452 = vcmp.eq.s32.totalorder %v1404, 1
        %vm1453 = vcmp.eq.s32.totalorder %v1405, 1
        %vm1454 = vcmp.eq.s32.totalorder %v1406, 1
        %vm1455 = vcmp.eq.s32.totalorder %v1407, 1
        %vm1456 = vcmp.eq.s32.totalorder %v1408, 1
        %vm1457 = vcmp.eq.s32.totalorder %v1409, 1
        %vm1458 = vcmp.eq.s32.totalorder %v1410, 1
        %vm1459 = vcmp.eq.s32.totalorder %v1411, 1
        %vm1460 = vcmp.eq.s32.totalorder %v1412, 1
        %vm1461 = vcmp.eq.s32.totalorder %v1413, 1
        %vm1462 = vcmp.eq.s32.totalorder %v1414, 1
        %vm1463 = vcmp.eq.s32.totalorder %v1415, 1
        %vm1464 = vcmp.eq.s32.totalorder %v1416, 1
        %vm1465 = vcmp.eq.s32.totalorder %v1417, 1
        %vm1466 = vcmp.eq.s32.totalorder %v1418, 1
        %vm1467 = vcmp.eq.s32.totalorder %v1419, 1
        %vm1468 = vcmp.eq.s32.totalorder %v1420, 1
        %vm1469 = vcmp.eq.s32.totalorder %v1421, 1
        %vm1470 = vcmp.eq.s32.totalorder %v1422, 1
        %vm1471 = vcmp.eq.s32.totalorder %v1423, 1
        %vm1472 = vcmp.eq.s32.totalorder %v1424, 1
        %vm1473 = vcmp.eq.s32.totalorder %v1425, 1
        %vm1474 = vcmp.eq.s32.totalorder %v1426, 1
        %vm1475 = vcmp.eq.s32.totalorder %v1427, 1
        %vm1476 = vcmp.eq.s32.totalorder %v1428, 1
        %vm1477 = vcmp.eq.s32.totalorder %v1429, 1
        %vm1478 = vcmp.eq.s32.totalorder %v1430, 1
        %vm1479 = vcmp.eq.s32.totalorder %v1431, 1
        %vm1480 = vcmp.eq.s32.totalorder %v1432, 1
        %vm1481 = vcmp.eq.s32.totalorder %v1433, 1
        %vm1482 = vcmp.eq.s32.totalorder %v1434, 1
        %v1483 = vsel %vm1435, %v1042, 0.0
        %v1484 = vsel %vm1436, %v1043, 0.0
        %v1485 = vsel %vm1437, %v1044, 0.0
        %v1486 = vsel %vm1438, %v1045, 0.0
        %v1487 = vsel %vm1439, %v1046, 0.0
        %v1488 = vsel %vm1440, %v1047, 0.0
        %v1489 = vsel %vm1441, %v1048, 0.0
        %v1490 = vsel %vm1442, %v1049, 0.0
        %v1491 = vsel %vm1443, %v1050, 0.0
        %v1492 = vsel %vm1444, %v1051, 0.0
        %v1493 = vsel %vm1445, %v1052, 0.0
        %v1494 = vsel %vm1446, %v1053, 0.0
        %v1495 = vsel %vm1447, %v1054, 0.0
        %v1496 = vsel %vm1448, %v1055, 0.0
        %v1497 = vsel %vm1449, %v1056, 0.0
        %v1498 = vsel %vm1450, %v1057, 0.0
        %v1499 = vsel %vm1451, %v1058, 0.0
        %v1500 = vsel %vm1452, %v1059, 0.0
        %v1501 = vsel %vm1453, %v1060, 0.0
        %v1502 = vsel %vm1454, %v1061, 0.0
        %v1503 = vsel %vm1455, %v1062, 0.0
        %v1504 = vsel %vm1456, %v1063, 0.0
        %v1505 = vsel %vm1457, %v1064, 0.0
        %v1506 = vsel %vm1458, %v1065, 0.0
        %v1507 = vsel %vm1459, %v1066, 0.0
        %v1508 = vsel %vm1460, %v1067, 0.0
        %v1509 = vsel %vm1461, %v1068, 0.0
        %v1510 = vsel %vm1462, %v1069, 0.0
        %v1511 = vsel %vm1463, %v1070, 0.0
        %v1512 = vsel %vm1464, %v1071, 0.0
        %v1513 = vsel %vm1465, %v1072, 0.0
        %v1514 = vsel %vm1466, %v1073, 0.0
        %v1515 = vsel %vm1467, %v1074, 0.0
        %v1516 = vsel %vm1468, %v1075, 0.0
        %v1517 = vsel %vm1469, %v1076, 0.0
        %v1518 = vsel %vm1470, %v1077, 0.0
        %v1519 = vsel %vm1471, %v1078, 0.0
        %v1520 = vsel %vm1472, %v1079, 0.0
        %v1521 = vsel %vm1473, %v1080, 0.0
        %v1522 = vsel %vm1474, %v1081, 0.0
        %v1523 = vsel %vm1475, %v1082, 0.0
        %v1524 = vsel %vm1476, %v1083, 0.0
        %v1525 = vsel %vm1477, %v1084, 0.0
        %v1526 = vsel %vm1478, %v1085, 0.0
        %v1527 = vsel %vm1479, %v1086, 0.0
        %v1528 = vsel %vm1480, %v1087, 0.0
        %v1529 = vsel %vm1481, %v1088, 0.0
        %v1530 = vsel %vm1482, %v1089, 0.0
        %v1531 = vpack.c.bf16 %v1484, %v1483
        %v1532 = vpack.c.bf16 %v1486, %v1485
        %v1533 = vpack.c.bf16 %v1488, %v1487
        %v1534 = vpack.c.bf16 %v1490, %v1489
        %v1535 = vpack.c.bf16 %v1492, %v1491
        %v1536 = vpack.c.bf16 %v1494, %v1493
        %v1537 = vpack.c.bf16 %v1496, %v1495
        %v1538 = vpack.c.bf16 %v1498, %v1497
        %v1539 = vpack.c.bf16 %v1500, %v1499
        %v1540 = vpack.c.bf16 %v1502, %v1501
        %v1541 = vpack.c.bf16 %v1504, %v1503
        %v1542 = vpack.c.bf16 %v1506, %v1505
        %v1543 = vpack.c.bf16 %v1508, %v1507
        %v1544 = vpack.c.bf16 %v1510, %v1509
        %v1545 = vpack.c.bf16 %v1512, %v1511
        %v1546 = vpack.c.bf16 %v1514, %v1513
        %v1547 = vpack.c.bf16 %v1516, %v1515
        %v1548 = vpack.c.bf16 %v1518, %v1517
        %v1549 = vpack.c.bf16 %v1520, %v1519
        %v1550 = vpack.c.bf16 %v1522, %v1521
        %v1551 = vpack.c.bf16 %v1524, %v1523
        %v1552 = vpack.c.bf16 %v1526, %v1525
        %v1553 = vpack.c.bf16 %v1528, %v1527
        %v1554 = vpack.c.bf16 %v1530, %v1529
        %v1579 = vunpack.c.l.b16 %v1531
        %v1580 = vunpack.c.h.b16 %v1531
        %v1581 = vunpack.c.l.b16 %v1532
        %v1582 = vunpack.c.h.b16 %v1532
        %v1583 = vunpack.c.l.b16 %v1533
        %v1584 = vunpack.c.h.b16 %v1533
        %v1585 = vunpack.c.l.b16 %v1534
        %v1586 = vunpack.c.h.b16 %v1534
        %v1587 = vunpack.c.l.b16 %v1535
        %v1588 = vunpack.c.h.b16 %v1535
        %v1589 = vunpack.c.l.b16 %v1536
        %v1590 = vunpack.c.h.b16 %v1536
        %v1591 = vunpack.c.l.b16 %v1537
        %v1592 = vunpack.c.h.b16 %v1537
        %v1593 = vunpack.c.l.b16 %v1538
        %v1594 = vunpack.c.h.b16 %v1538
        %v1595 = vunpack.c.l.b16 %v1539
        %v1596 = vunpack.c.h.b16 %v1539
        %v1597 = vunpack.c.l.b16 %v1540
        %v1598 = vunpack.c.h.b16 %v1540
        %v1599 = vunpack.c.l.b16 %v1541
        %v1600 = vunpack.c.h.b16 %v1541
        %v1601 = vunpack.c.l.b16 %v1542
        %v1602 = vunpack.c.h.b16 %v1542
        %v1603 = vunpack.c.l.b16 %v1543
        %v1604 = vunpack.c.h.b16 %v1543
        %v1605 = vunpack.c.l.b16 %v1544
        %v1606 = vunpack.c.h.b16 %v1544
        %v1607 = vunpack.c.l.b16 %v1545
        %v1608 = vunpack.c.h.b16 %v1545
        %v1609 = vunpack.c.l.b16 %v1546
        %v1610 = vunpack.c.h.b16 %v1546
        %v1611 = vunpack.c.l.b16 %v1547
        %v1612 = vunpack.c.h.b16 %v1547
        %v1613 = vunpack.c.l.b16 %v1548
        %v1614 = vunpack.c.h.b16 %v1548
        %v1615 = vunpack.c.l.b16 %v1549
        %v1616 = vunpack.c.h.b16 %v1549
        %v1617 = vunpack.c.l.b16 %v1550
        %v1618 = vunpack.c.h.b16 %v1550
        %v1619 = vunpack.c.l.b16 %v1551
        %v1620 = vunpack.c.h.b16 %v1551
        %v1621 = vunpack.c.l.b16 %v1552
        %v1622 = vunpack.c.h.b16 %v1552
        %v1623 = vunpack.c.l.b16 %v1553
        %v1624 = vunpack.c.h.b16 %v1553
        %v1625 = vunpack.c.l.b16 %v1554
        %v1626 = vunpack.c.h.b16 %v1554
        %v1627 = vpack.c.b16 %v1579, %v1579
        %v1628 = vpack.c.b16 %v1580, %v1580
        %v1629 = vpack.c.b16 %v1581, %v1581
        %v1630 = vpack.c.b16 %v1582, %v1582
        %v1631 = vpack.c.b16 %v1583, %v1583
        %v1632 = vpack.c.b16 %v1584, %v1584
        %v1633 = vpack.c.b16 %v1585, %v1585
        %v1634 = vpack.c.b16 %v1586, %v1586
        %v1635 = vpack.c.b16 %v1587, %v1587
        %v1636 = vpack.c.b16 %v1588, %v1588
        %v1637 = vpack.c.b16 %v1589, %v1589
        %v1638 = vpack.c.b16 %v1590, %v1590
        %v1639 = vpack.c.b16 %v1591, %v1591
        %v1640 = vpack.c.b16 %v1592, %v1592
        %v1641 = vpack.c.b16 %v1593, %v1593
        %v1642 = vpack.c.b16 %v1594, %v1594
        %v1643 = vpack.c.b16 %v1595, %v1595
        %v1644 = vpack.c.b16 %v1596, %v1596
        %v1645 = vpack.c.b16 %v1597, %v1597
        %v1646 = vpack.c.b16 %v1598, %v1598
        %v1647 = vpack.c.b16 %v1599, %v1599
        %v1648 = vpack.c.b16 %v1600, %v1600
        %v1649 = vpack.c.b16 %v1601, %v1601
        %v1650 = vpack.c.b16 %v1602, %v1602
        %v1651 = vpack.c.b16 %v1603, %v1603
        %v1652 = vpack.c.b16 %v1604, %v1604
        %v1653 = vpack.c.b16 %v1605, %v1605
        %v1654 = vpack.c.b16 %v1606, %v1606
        %v1655 = vpack.c.b16 %v1607, %v1607
        %v1656 = vpack.c.b16 %v1608, %v1608
        %v1657 = vpack.c.b16 %v1609, %v1609
        %v1658 = vpack.c.b16 %v1610, %v1610
        %v1659 = vpack.c.b16 %v1611, %v1611
        %v1660 = vpack.c.b16 %v1612, %v1612
        %v1661 = vpack.c.b16 %v1613, %v1613
        %v1662 = vpack.c.b16 %v1614, %v1614
        %v1663 = vpack.c.b16 %v1615, %v1615
        %v1664 = vpack.c.b16 %v1616, %v1616
        %v1665 = vpack.c.b16 %v1617, %v1617
        %v1666 = vpack.c.b16 %v1618, %v1618
        %v1667 = vpack.c.b16 %v1619, %v1619
        %v1668 = vpack.c.b16 %v1620, %v1620
        %v1669 = vpack.c.b16 %v1621, %v1621
        %v1670 = vpack.c.b16 %v1622, %v1622
        %v1671 = vpack.c.b16 %v1623, %v1623
        %v1672 = vpack.c.b16 %v1624, %v1624
        %v1673 = vpack.c.b16 %v1625, %v1625
        %v1674 = vpack.c.b16 %v1626, %v1626
        %v1676 = vshrl.u32 %v1627, 16
        %v1678 = vrot.slane %v1676, 7
        %v1679 = vshll.u32 %v1627, 16
        %v1681 = vor.u32 %v1678, %v1679
        %v1683 = vshrl.u32 %v1628, 16
        %v1685 = vrot.slane %v1683, 7
        %v1686 = vshll.u32 %v1628, 16
        %v1688 = vor.u32 %v1685, %v1686
        %v1690 = vshrl.u32 %v1629, 16
        %v1692 = vrot.slane %v1690, 7
        %v1693 = vshll.u32 %v1629, 16
        %v1695 = vor.u32 %v1692, %v1693
        %v1697 = vshrl.u32 %v1630, 16
        %v1699 = vrot.slane %v1697, 7
        %v1700 = vshll.u32 %v1630, 16
        %v1702 = vor.u32 %v1699, %v1700
        %v1704 = vshrl.u32 %v1631, 16
        %v1706 = vrot.slane %v1704, 7
        %v1707 = vshll.u32 %v1631, 16
        %v1709 = vor.u32 %v1706, %v1707
        %v1711 = vshrl.u32 %v1632, 16
        %v1713 = vrot.slane %v1711, 7
        %v1714 = vshll.u32 %v1632, 16
        %v1716 = vor.u32 %v1713, %v1714
        %v1718 = vshrl.u32 %v1633, 16
        %v1720 = vrot.slane %v1718, 7
        %v1721 = vshll.u32 %v1633, 16
        %v1723 = vor.u32 %v1720, %v1721
        %v1725 = vshrl.u32 %v1634, 16
        %v1727 = vrot.slane %v1725, 7
        %v1728 = vshll.u32 %v1634, 16
        %v1730 = vor.u32 %v1727, %v1728
        %v1732 = vshrl.u32 %v1635, 16
        %v1734 = vrot.slane %v1732, 7
        %v1735 = vshll.u32 %v1635, 16
        %v1737 = vor.u32 %v1734, %v1735
        %v1739 = vshrl.u32 %v1636, 16
        %v1741 = vrot.slane %v1739, 7
        %v1742 = vshll.u32 %v1636, 16
        %v1744 = vor.u32 %v1741, %v1742
        %v1746 = vshrl.u32 %v1637, 16
        %v1748 = vrot.slane %v1746, 7
        %v1749 = vshll.u32 %v1637, 16
        %v1751 = vor.u32 %v1748, %v1749
        %v1753 = vshrl.u32 %v1638, 16
        %v1755 = vrot.slane %v1753, 7
        %v1756 = vshll.u32 %v1638, 16
        %v1758 = vor.u32 %v1755, %v1756
        %v1760 = vshrl.u32 %v1639, 16
        %v1762 = vrot.slane %v1760, 7
        %v1763 = vshll.u32 %v1639, 16
        %v1765 = vor.u32 %v1762, %v1763
        %v1767 = vshrl.u32 %v1640, 16
        %v1769 = vrot.slane %v1767, 7
        %v1770 = vshll.u32 %v1640, 16
        %v1772 = vor.u32 %v1769, %v1770
        %v1774 = vshrl.u32 %v1641, 16
        %v1776 = vrot.slane %v1774, 7
        %v1777 = vshll.u32 %v1641, 16
        %v1779 = vor.u32 %v1776, %v1777
        %v1781 = vshrl.u32 %v1642, 16
        %v1783 = vrot.slane %v1781, 7
        %v1784 = vshll.u32 %v1642, 16
        %v1786 = vor.u32 %v1783, %v1784
        %v1788 = vshrl.u32 %v1643, 16
        %v1790 = vrot.slane %v1788, 7
        %v1791 = vshll.u32 %v1643, 16
        %v1793 = vor.u32 %v1790, %v1791
        %v1795 = vshrl.u32 %v1644, 16
        %v1797 = vrot.slane %v1795, 7
        %v1798 = vshll.u32 %v1644, 16
        %v1800 = vor.u32 %v1797, %v1798
        %v1802 = vshrl.u32 %v1645, 16
        %v1804 = vrot.slane %v1802, 7
        %v1805 = vshll.u32 %v1645, 16
        %v1807 = vor.u32 %v1804, %v1805
        %v1809 = vshrl.u32 %v1646, 16
        %v1811 = vrot.slane %v1809, 7
        %v1812 = vshll.u32 %v1646, 16
        %v1814 = vor.u32 %v1811, %v1812
        %v1816 = vshrl.u32 %v1647, 16
        %v1818 = vrot.slane %v1816, 7
        %v1819 = vshll.u32 %v1647, 16
        %v1821 = vor.u32 %v1818, %v1819
        %v1823 = vshrl.u32 %v1648, 16
        %v1825 = vrot.slane %v1823, 7
        %v1826 = vshll.u32 %v1648, 16
        %v1828 = vor.u32 %v1825, %v1826
        %v1830 = vshrl.u32 %v1649, 16
        %v1832 = vrot.slane %v1830, 7
        %v1833 = vshll.u32 %v1649, 16
        %v1835 = vor.u32 %v1832, %v1833
        %v1837 = vshrl.u32 %v1650, 16
        %v1839 = vrot.slane %v1837, 7
        %v1840 = vshll.u32 %v1650, 16
        %v1842 = vor.u32 %v1839, %v1840
        %v1844 = vshrl.u32 %v1651, 16
        %v1846 = vrot.slane %v1844, 7
        %v1847 = vshll.u32 %v1651, 16
        %v1849 = vor.u32 %v1846, %v1847
        %v1851 = vshrl.u32 %v1652, 16
        %v1853 = vrot.slane %v1851, 7
        %v1854 = vshll.u32 %v1652, 16
        %v1856 = vor.u32 %v1853, %v1854
        %v1858 = vshrl.u32 %v1653, 16
        %v1860 = vrot.slane %v1858, 7
        %v1861 = vshll.u32 %v1653, 16
        %v1863 = vor.u32 %v1860, %v1861
        %v1865 = vshrl.u32 %v1654, 16
        %v1867 = vrot.slane %v1865, 7
        %v1868 = vshll.u32 %v1654, 16
        %v1870 = vor.u32 %v1867, %v1868
        %v1872 = vshrl.u32 %v1655, 16
        %v1874 = vrot.slane %v1872, 7
        %v1875 = vshll.u32 %v1655, 16
        %v1877 = vor.u32 %v1874, %v1875
        %v1879 = vshrl.u32 %v1656, 16
        %v1881 = vrot.slane %v1879, 7
        %v1882 = vshll.u32 %v1656, 16
        %v1884 = vor.u32 %v1881, %v1882
        %v1886 = vshrl.u32 %v1657, 16
        %v1888 = vrot.slane %v1886, 7
        %v1889 = vshll.u32 %v1657, 16
        %v1891 = vor.u32 %v1888, %v1889
        %v1893 = vshrl.u32 %v1658, 16
        %v1895 = vrot.slane %v1893, 7
        %v1896 = vshll.u32 %v1658, 16
        %v1898 = vor.u32 %v1895, %v1896
        %v1900 = vshrl.u32 %v1659, 16
        %v1902 = vrot.slane %v1900, 7
        %v1903 = vshll.u32 %v1659, 16
        %v1905 = vor.u32 %v1902, %v1903
        %v1907 = vshrl.u32 %v1660, 16
        %v1909 = vrot.slane %v1907, 7
        %v1910 = vshll.u32 %v1660, 16
        %v1912 = vor.u32 %v1909, %v1910
        %v1914 = vshrl.u32 %v1661, 16
        %v1916 = vrot.slane %v1914, 7
        %v1917 = vshll.u32 %v1661, 16
        %v1919 = vor.u32 %v1916, %v1917
        %v1921 = vshrl.u32 %v1662, 16
        %v1923 = vrot.slane %v1921, 7
        %v1924 = vshll.u32 %v1662, 16
        %v1926 = vor.u32 %v1923, %v1924
        %v1928 = vshrl.u32 %v1663, 16
        %v1930 = vrot.slane %v1928, 7
        %v1931 = vshll.u32 %v1663, 16
        %v1933 = vor.u32 %v1930, %v1931
        %v1935 = vshrl.u32 %v1664, 16
        %v1937 = vrot.slane %v1935, 7
        %v1938 = vshll.u32 %v1664, 16
        %v1940 = vor.u32 %v1937, %v1938
        %v1942 = vshrl.u32 %v1665, 16
        %v1944 = vrot.slane %v1942, 7
        %v1945 = vshll.u32 %v1665, 16
        %v1947 = vor.u32 %v1944, %v1945
        %v1949 = vshrl.u32 %v1666, 16
        %v1951 = vrot.slane %v1949, 7
        %v1952 = vshll.u32 %v1666, 16
        %v1954 = vor.u32 %v1951, %v1952
        %v1956 = vshrl.u32 %v1667, 16
        %v1958 = vrot.slane %v1956, 7
        %v1959 = vshll.u32 %v1667, 16
        %v1961 = vor.u32 %v1958, %v1959
        %v1963 = vshrl.u32 %v1668, 16
        %v1965 = vrot.slane %v1963, 7
        %v1966 = vshll.u32 %v1668, 16
        %v1968 = vor.u32 %v1965, %v1966
        %v1970 = vshrl.u32 %v1669, 16
        %v1972 = vrot.slane %v1970, 7
        %v1973 = vshll.u32 %v1669, 16
        %v1975 = vor.u32 %v1972, %v1973
        %v1977 = vshrl.u32 %v1670, 16
        %v1979 = vrot.slane %v1977, 7
        %v1980 = vshll.u32 %v1670, 16
        %v1982 = vor.u32 %v1979, %v1980
        %v1984 = vshrl.u32 %v1671, 16
        %v1986 = vrot.slane %v1984, 7
        %v1987 = vshll.u32 %v1671, 16
        %v1989 = vor.u32 %v1986, %v1987
        %v1991 = vshrl.u32 %v1672, 16
        %v1993 = vrot.slane %v1991, 7
        %v1994 = vshll.u32 %v1672, 16
        %v1996 = vor.u32 %v1993, %v1994
        %v1998 = vshrl.u32 %v1673, 16
        %v2000 = vrot.slane %v1998, 7
        %v2001 = vshll.u32 %v1673, 16
        %v2003 = vor.u32 %v2000, %v2001
        %v2005 = vshrl.u32 %v1674, 16
        %v2007 = vrot.slane %v2005, 7
        %v2008 = vshll.u32 %v1674, 16
        %v2010 = vor.u32 %v2007, %v2008
        %vm2059 = vcmask 1040384
        %vm2060 = vsmask.f32 256
        %vm2061 = vmand %vm2059, %vm2060
        %v2062 = vsel %vm2061, 0, %v1681
        %v2063 = vsel %vm2061, 0, %v1688
        %v2064 = vsel %vm2061, 0, %v1695
        %v2065 = vsel %vm2061, 0, %v1702
        %v2066 = vsel %vm2061, 0, %v1709
        %v2067 = vsel %vm2061, 0, %v1716
        %v2068 = vsel %vm2061, 0, %v1723
        %v2069 = vsel %vm2061, 0, %v1730
        %v2070 = vsel %vm2061, 0, %v1737
        %v2071 = vsel %vm2061, 0, %v1744
        %v2072 = vsel %vm2061, 0, %v1751
        %v2073 = vsel %vm2061, 0, %v1758
        %v2074 = vsel %vm2061, 0, %v1765
        %v2075 = vsel %vm2061, 0, %v1772
        %v2076 = vsel %vm2061, 0, %v1779
        %v2077 = vsel %vm2061, 0, %v1786
        %v2078 = vsel %vm2061, 0, %v1793
        %v2079 = vsel %vm2061, 0, %v1800
        %v2080 = vsel %vm2061, 0, %v1807
        %v2081 = vsel %vm2061, 0, %v1814
        %v2082 = vsel %vm2061, 0, %v1821
        %v2083 = vsel %vm2061, 0, %v1828
        %v2084 = vsel %vm2061, 0, %v1835
        %v2085 = vsel %vm2061, 0, %v1842
        %v2086 = vsel %vm2061, 0, %v1849
        %v2087 = vsel %vm2061, 0, %v1856
        %v2088 = vsel %vm2061, 0, %v1863
        %v2089 = vsel %vm2061, 0, %v1870
        %v2090 = vsel %vm2061, 0, %v1877
        %v2091 = vsel %vm2061, 0, %v1884
        %v2092 = vsel %vm2061, 0, %v1891
        %v2093 = vsel %vm2061, 0, %v1898
        %v2094 = vsel %vm2061, 0, %v1905
        %v2095 = vsel %vm2061, 0, %v1912
        %v2096 = vsel %vm2061, 0, %v1919
        %v2097 = vsel %vm2061, 0, %v1926
        %v2098 = vsel %vm2061, 0, %v1933
        %v2099 = vsel %vm2061, 0, %v1940
        %v2100 = vsel %vm2061, 0, %v1947
        %v2101 = vsel %vm2061, 0, %v1954
        %v2102 = vsel %vm2061, 0, %v1961
        %v2103 = vsel %vm2061, 0, %v1968
        %v2104 = vsel %vm2061, 0, %v1975
        %v2105 = vsel %vm2061, 0, %v1982
        %v2106 = vsel %vm2061, 0, %v1989
        %v2107 = vsel %vm2061, 0, %v1996
        %v2108 = vsel %vm2061, 0, %v2003
        %v2109 = vsel %vm2061, 0, %v2010
        %vm2110 = vcmask 1044480
        %vm2111 = vsmask.f32 4352
        %vm2112 = vmand %vm2110, %vm2111
        %v2113 = vsel %vm2112, %v2062, 0
        %v2114 = vsel %vm2112, %v2063, 0
        %v2115 = vsel %vm2112, %v2064, 0
        %v2116 = vsel %vm2112, %v2065, 0
        %v2117 = vsel %vm2112, %v2066, 0
        %v2118 = vsel %vm2112, %v2067, 0
        %v2119 = vsel %vm2112, %v2068, 0
        %v2120 = vsel %vm2112, %v2069, 0
        %v2121 = vsel %vm2112, %v2070, 0
        %v2122 = vsel %vm2112, %v2071, 0
        %v2123 = vsel %vm2112, %v2072, 0
        %v2124 = vsel %vm2112, %v2073, 0
        %v2125 = vsel %vm2112, %v2074, 0
        %v2126 = vsel %vm2112, %v2075, 0
        %v2127 = vsel %vm2112, %v2076, 0
        %v2128 = vsel %vm2112, %v2077, 0
        %v2129 = vsel %vm2112, %v2078, 0
        %v2130 = vsel %vm2112, %v2079, 0
        %v2131 = vsel %vm2112, %v2080, 0
        %v2132 = vsel %vm2112, %v2081, 0
        %v2133 = vsel %vm2112, %v2082, 0
        %v2134 = vsel %vm2112, %v2083, 0
        %v2135 = vsel %vm2112, %v2084, 0
        %v2136 = vsel %vm2112, %v2085, 0
        %v2137 = vsel %vm2112, %v2086, 0
        %v2138 = vsel %vm2112, %v2087, 0
        %v2139 = vsel %vm2112, %v2088, 0
        %v2140 = vsel %vm2112, %v2089, 0
        %v2141 = vsel %vm2112, %v2090, 0
        %v2142 = vsel %vm2112, %v2091, 0
        %v2143 = vsel %vm2112, %v2092, 0
        %v2144 = vsel %vm2112, %v2093, 0
        %v2145 = vsel %vm2112, %v2094, 0
        %v2146 = vsel %vm2112, %v2095, 0
        %v2147 = vsel %vm2112, %v2096, 0
        %v2148 = vsel %vm2112, %v2097, 0
        %v2149 = vsel %vm2112, %v2098, 0
        %v2150 = vsel %vm2112, %v2099, 0
        %v2151 = vsel %vm2112, %v2100, 0
        %v2152 = vsel %vm2112, %v2101, 0
        %v2153 = vsel %vm2112, %v2102, 0
        %v2154 = vsel %vm2112, %v2103, 0
        %v2155 = vsel %vm2112, %v2104, 0
        %v2156 = vsel %vm2112, %v2105, 0
        %v2157 = vsel %vm2112, %v2106, 0
        %v2158 = vsel %vm2112, %v2107, 0
        %v2159 = vsel %vm2112, %v2108, 0
        %v2160 = vsel %vm2112, %v2109, 0
        %v2162 = vshrl.u32 0, 16
        %v2164 = vshll.u32 0, 16
        %v2166 = vrot.slane %v2164, 1
        %v2167 = vor.u32 %v2162, %v2166
        %v2169 = vshrl.u32 %v2113, 16
        %v2171 = vshll.u32 %v2113, 16
        %v2173 = vrot.slane %v2171, 1
        %v2174 = vor.u32 %v2169, %v2173
        %v2176 = vshrl.u32 %v2114, 16
        %v2178 = vshll.u32 %v2114, 16
        %v2180 = vrot.slane %v2178, 1
        %v2181 = vor.u32 %v2176, %v2180
        %v2183 = vshrl.u32 %v2115, 16
        %v2185 = vshll.u32 %v2115, 16
        %v2187 = vrot.slane %v2185, 1
        %v2188 = vor.u32 %v2183, %v2187
        %v2190 = vshrl.u32 %v2116, 16
        %v2192 = vshll.u32 %v2116, 16
        %v2194 = vrot.slane %v2192, 1
        %v2195 = vor.u32 %v2190, %v2194
        %v2197 = vshrl.u32 %v2117, 16
        %v2199 = vshll.u32 %v2117, 16
        %v2201 = vrot.slane %v2199, 1
        %v2202 = vor.u32 %v2197, %v2201
        %v2204 = vshrl.u32 %v2118, 16
        %v2206 = vshll.u32 %v2118, 16
        %v2208 = vrot.slane %v2206, 1
        %v2209 = vor.u32 %v2204, %v2208
        %v2211 = vshrl.u32 %v2119, 16
        %v2213 = vshll.u32 %v2119, 16
        %v2215 = vrot.slane %v2213, 1
        %v2216 = vor.u32 %v2211, %v2215
        %v2218 = vshrl.u32 %v2121, 16
        %v2220 = vshll.u32 %v2121, 16
        %v2222 = vrot.slane %v2220, 1
        %v2223 = vor.u32 %v2218, %v2222
        %v2225 = vshrl.u32 %v2122, 16
        %v2227 = vshll.u32 %v2122, 16
        %v2229 = vrot.slane %v2227, 1
        %v2230 = vor.u32 %v2225, %v2229
        %v2232 = vshrl.u32 %v2123, 16
        %v2234 = vshll.u32 %v2123, 16
        %v2236 = vrot.slane %v2234, 1
        %v2237 = vor.u32 %v2232, %v2236
        %v2239 = vshrl.u32 %v2124, 16
        %v2241 = vshll.u32 %v2124, 16
        %v2243 = vrot.slane %v2241, 1
        %v2244 = vor.u32 %v2239, %v2243
        %v2246 = vshrl.u32 %v2125, 16
        %v2248 = vshll.u32 %v2125, 16
        %v2250 = vrot.slane %v2248, 1
        %v2251 = vor.u32 %v2246, %v2250
        %v2253 = vshrl.u32 %v2126, 16
        %v2255 = vshll.u32 %v2126, 16
        %v2257 = vrot.slane %v2255, 1
        %v2258 = vor.u32 %v2253, %v2257
        %v2260 = vshrl.u32 %v2127, 16
        %v2262 = vshll.u32 %v2127, 16
        %v2264 = vrot.slane %v2262, 1
        %v2265 = vor.u32 %v2260, %v2264
        %v2267 = vshrl.u32 %v2129, 16
        %v2269 = vshll.u32 %v2129, 16
        %v2271 = vrot.slane %v2269, 1
        %v2272 = vor.u32 %v2267, %v2271
        %v2274 = vshrl.u32 %v2130, 16
        %v2276 = vshll.u32 %v2130, 16
        %v2278 = vrot.slane %v2276, 1
        %v2279 = vor.u32 %v2274, %v2278
        %v2281 = vshrl.u32 %v2131, 16
        %v2283 = vshll.u32 %v2131, 16
        %v2285 = vrot.slane %v2283, 1
        %v2286 = vor.u32 %v2281, %v2285
        %v2288 = vshrl.u32 %v2132, 16
        %v2290 = vshll.u32 %v2132, 16
        %v2292 = vrot.slane %v2290, 1
        %v2293 = vor.u32 %v2288, %v2292
        %v2295 = vshrl.u32 %v2133, 16
        %v2297 = vshll.u32 %v2133, 16
        %v2299 = vrot.slane %v2297, 1
        %v2300 = vor.u32 %v2295, %v2299
        %v2302 = vshrl.u32 %v2134, 16
        %v2304 = vshll.u32 %v2134, 16
        %v2306 = vrot.slane %v2304, 1
        %v2307 = vor.u32 %v2302, %v2306
        %v2309 = vshrl.u32 %v2135, 16
        %v2311 = vshll.u32 %v2135, 16
        %v2313 = vrot.slane %v2311, 1
        %v2314 = vor.u32 %v2309, %v2313
        %v2316 = vshrl.u32 %v2137, 16
        %v2318 = vshll.u32 %v2137, 16
        %v2320 = vrot.slane %v2318, 1
        %v2321 = vor.u32 %v2316, %v2320
        %v2323 = vshrl.u32 %v2138, 16
        %v2325 = vshll.u32 %v2138, 16
        %v2327 = vrot.slane %v2325, 1
        %v2328 = vor.u32 %v2323, %v2327
        %v2330 = vshrl.u32 %v2139, 16
        %v2332 = vshll.u32 %v2139, 16
        %v2334 = vrot.slane %v2332, 1
        %v2335 = vor.u32 %v2330, %v2334
        %v2337 = vshrl.u32 %v2140, 16
        %v2339 = vshll.u32 %v2140, 16
        %v2341 = vrot.slane %v2339, 1
        %v2342 = vor.u32 %v2337, %v2341
        %v2344 = vshrl.u32 %v2141, 16
        %v2346 = vshll.u32 %v2141, 16
        %v2348 = vrot.slane %v2346, 1
        %v2349 = vor.u32 %v2344, %v2348
        %v2351 = vshrl.u32 %v2142, 16
        %v2353 = vshll.u32 %v2142, 16
        %v2355 = vrot.slane %v2353, 1
        %v2356 = vor.u32 %v2351, %v2355
        %v2358 = vshrl.u32 %v2143, 16
        %v2360 = vshll.u32 %v2143, 16
        %v2362 = vrot.slane %v2360, 1
        %v2363 = vor.u32 %v2358, %v2362
        %2364 = vrot.lane.b32.xlu0 %v2167, 32
        %v2365 = vpop.permute.xlu0 %2364
        %2366 = vrot.lane.b32.xlu0 %v2174, 32
        %v2367 = vpop.permute.xlu0 %2366
        %2368 = vrot.lane.b32.xlu0 %v2181, 32
        %v2369 = vpop.permute.xlu0 %2368
        %2370 = vrot.lane.b32.xlu0 %v2188, 32
        %v2371 = vpop.permute.xlu0 %2370
        %2372 = vrot.lane.b32.xlu0 %v2195, 32
        %v2373 = vpop.permute.xlu0 %2372
        %2374 = vrot.lane.b32.xlu0 %v2202, 32
        %v2375 = vpop.permute.xlu0 %2374
        %2376 = vrot.lane.b32.xlu0 %v2209, 32
        %v2377 = vpop.permute.xlu0 %2376
        %2378 = vrot.lane.b32.xlu0 %v2216, 32
        %v2379 = vpop.permute.xlu0 %2378
        %2380 = vrot.lane.b32.xlu0 %v2223, 32
        %v2381 = vpop.permute.xlu0 %2380
        %2382 = vrot.lane.b32.xlu0 %v2230, 32
        %v2383 = vpop.permute.xlu0 %2382
        %2384 = vrot.lane.b32.xlu0 %v2237, 32
        %v2385 = vpop.permute.xlu0 %2384
        %2386 = vrot.lane.b32.xlu0 %v2244, 32
        %v2387 = vpop.permute.xlu0 %2386
        %2388 = vrot.lane.b32.xlu0 %v2251, 32
        %v2389 = vpop.permute.xlu0 %2388
        %2390 = vrot.lane.b32.xlu0 %v2258, 32
        %v2391 = vpop.permute.xlu0 %2390
        %2392 = vrot.lane.b32.xlu0 %v2265, 32
        %v2393 = vpop.permute.xlu0 %2392
        %2394 = vrot.lane.b32.xlu0 %v2272, 32
        %v2395 = vpop.permute.xlu0 %2394
        %2396 = vrot.lane.b32.xlu0 %v2279, 32
        %v2397 = vpop.permute.xlu0 %2396
        %2398 = vrot.lane.b32.xlu0 %v2286, 32
        %v2399 = vpop.permute.xlu0 %2398
        %2400 = vrot.lane.b32.xlu0 %v2293, 32
        %v2401 = vpop.permute.xlu0 %2400
        %2402 = vrot.lane.b32.xlu0 %v2300, 32
        %v2403 = vpop.permute.xlu0 %2402
        %2404 = vrot.lane.b32.xlu0 %v2307, 32
        %v2405 = vpop.permute.xlu0 %2404
        %2406 = vrot.lane.b32.xlu0 %v2314, 32
        %v2407 = vpop.permute.xlu0 %2406
        %2408 = vrot.lane.b32.xlu0 %v2321, 32
        %v2409 = vpop.permute.xlu0 %2408
        %2410 = vrot.lane.b32.xlu0 %v2328, 32
        %v2411 = vpop.permute.xlu0 %2410
        %2412 = vrot.lane.b32.xlu0 %v2335, 32
        %v2413 = vpop.permute.xlu0 %2412
        %2414 = vrot.lane.b32.xlu0 %v2342, 32
        %v2415 = vpop.permute.xlu0 %2414
        %2416 = vrot.lane.b32.xlu0 %v2349, 32
        %v2417 = vpop.permute.xlu0 %2416
        %2418 = vrot.lane.b32.xlu0 %v2356, 32
        %v2419 = vpop.permute.xlu0 %2418
        %2420 = vrot.lane.b32.xlu0 %v2363, 32
        %v2421 = vpop.permute.xlu0 %2420
        %v2451 = vrot.slane 0, 1
        %v2452 = vrot.slane %v2113, 1
        %v2453 = vrot.slane %v2114, 1
        %v2454 = vrot.slane %v2115, 1
        %v2455 = vrot.slane %v2116, 1
        %v2456 = vrot.slane %v2117, 1
        %v2457 = vrot.slane %v2118, 1
        %v2458 = vrot.slane %v2119, 1
        %v2459 = vrot.slane %v2121, 1
        %v2460 = vrot.slane %v2122, 1
        %v2461 = vrot.slane %v2123, 1
        %v2462 = vrot.slane %v2124, 1
        %v2463 = vrot.slane %v2125, 1
        %v2464 = vrot.slane %v2126, 1
        %v2465 = vrot.slane %v2127, 1
        %v2466 = vrot.slane %v2129, 1
        %v2467 = vrot.slane %v2130, 1
        %v2468 = vrot.slane %v2131, 1
        %v2469 = vrot.slane %v2132, 1
        %v2470 = vrot.slane %v2133, 1
        %v2471 = vrot.slane %v2134, 1
        %v2472 = vrot.slane %v2135, 1
        %v2473 = vrot.slane %v2137, 1
        %v2474 = vrot.slane %v2138, 1
        %v2475 = vrot.slane %v2139, 1
        %v2476 = vrot.slane %v2140, 1
        %v2477 = vrot.slane %v2141, 1
        %v2478 = vrot.slane %v2142, 1
        %v2479 = vrot.slane %v2143, 1
        %2480 = vrot.lane.b32.xlu0 %v2451, 64
        %v2481 = vpop.permute.xlu0 %2480
        %2482 = vrot.lane.b32.xlu0 %v2452, 64
        %v2483 = vpop.permute.xlu0 %2482
        %2484 = vrot.lane.b32.xlu0 %v2453, 64
        %v2485 = vpop.permute.xlu0 %2484
        %2486 = vrot.lane.b32.xlu0 %v2454, 64
        %v2487 = vpop.permute.xlu0 %2486
        %2488 = vrot.lane.b32.xlu0 %v2455, 64
        %v2489 = vpop.permute.xlu0 %2488
        %2490 = vrot.lane.b32.xlu0 %v2456, 64
        %v2491 = vpop.permute.xlu0 %2490
        %2492 = vrot.lane.b32.xlu0 %v2457, 64
        %v2493 = vpop.permute.xlu0 %2492
        %2494 = vrot.lane.b32.xlu0 %v2458, 64
        %v2495 = vpop.permute.xlu0 %2494
        %2496 = vrot.lane.b32.xlu0 %v2459, 64
        %v2497 = vpop.permute.xlu0 %2496
        %2498 = vrot.lane.b32.xlu0 %v2460, 64
        %v2499 = vpop.permute.xlu0 %2498
        %2500 = vrot.lane.b32.xlu0 %v2461, 64
        %v2501 = vpop.permute.xlu0 %2500
        %2502 = vrot.lane.b32.xlu0 %v2462, 64
        %v2503 = vpop.permute.xlu0 %2502
        %2504 = vrot.lane.b32.xlu0 %v2463, 64
        %v2505 = vpop.permute.xlu0 %2504
        %2506 = vrot.lane.b32.xlu0 %v2464, 64
        %v2507 = vpop.permute.xlu0 %2506
        %2508 = vrot.lane.b32.xlu0 %v2465, 64
        %v2509 = vpop.permute.xlu0 %2508
        %2510 = vrot.lane.b32.xlu0 %v2466, 64
        %v2511 = vpop.permute.xlu0 %2510
        %2512 = vrot.lane.b32.xlu0 %v2467, 64
        %v2513 = vpop.permute.xlu0 %2512
        %2514 = vrot.lane.b32.xlu0 %v2468, 64
        %v2515 = vpop.permute.xlu0 %2514
        %2516 = vrot.lane.b32.xlu0 %v2469, 64
        %v2517 = vpop.permute.xlu0 %2516
        %2518 = vrot.lane.b32.xlu0 %v2470, 64
        %v2519 = vpop.permute.xlu0 %2518
        %2520 = vrot.lane.b32.xlu0 %v2471, 64
        %v2521 = vpop.permute.xlu0 %2520
        %2522 = vrot.lane.b32.xlu0 %v2472, 64
        %v2523 = vpop.permute.xlu0 %2522
        %2524 = vrot.lane.b32.xlu0 %v2473, 64
        %v2525 = vpop.permute.xlu0 %2524
        %2526 = vrot.lane.b32.xlu0 %v2474, 64
        %v2527 = vpop.permute.xlu0 %2526
        %2528 = vrot.lane.b32.xlu0 %v2475, 64
        %v2529 = vpop.permute.xlu0 %2528
        %2530 = vrot.lane.b32.xlu0 %v2476, 64
        %v2531 = vpop.permute.xlu0 %2530
        %2532 = vrot.lane.b32.xlu0 %v2477, 64
        %v2533 = vpop.permute.xlu0 %2532
        %2534 = vrot.lane.b32.xlu0 %v2478, 64
        %v2535 = vpop.permute.xlu0 %2534
        %2536 = vrot.lane.b32.xlu0 %v2479, 64
        %v2537 = vpop.permute.xlu0 %2536
        %2542 = vrot.lane.b32.xlu0 %v2113, 96
        %v2543 = vpop.permute.xlu0 %2542
        %2544 = vrot.lane.b32.xlu0 %v2114, 96
        %v2545 = vpop.permute.xlu0 %2544
        %2546 = vrot.lane.b32.xlu0 %v2115, 96
        %v2547 = vpop.permute.xlu0 %2546
        %2548 = vrot.lane.b32.xlu0 %v2116, 96
        %v2549 = vpop.permute.xlu0 %2548
        %2550 = vrot.lane.b32.xlu0 %v2117, 96
        %v2551 = vpop.permute.xlu0 %2550
        %2552 = vrot.lane.b32.xlu0 %v2118, 96
        %v2553 = vpop.permute.xlu0 %2552
        %2554 = vrot.lane.b32.xlu0 %v2119, 96
        %v2555 = vpop.permute.xlu0 %2554
        %2556 = vrot.lane.b32.xlu0 %v2120, 96
        %v2557 = vpop.permute.xlu0 %2556
        %2558 = vrot.lane.b32.xlu0 %v2121, 96
        %v2559 = vpop.permute.xlu0 %2558
        %2560 = vrot.lane.b32.xlu0 %v2122, 96
        %v2561 = vpop.permute.xlu0 %2560
        %2562 = vrot.lane.b32.xlu0 %v2123, 96
        %v2563 = vpop.permute.xlu0 %2562
        %2564 = vrot.lane.b32.xlu0 %v2124, 96
        %v2565 = vpop.permute.xlu0 %2564
        %2566 = vrot.lane.b32.xlu0 %v2125, 96
        %v2567 = vpop.permute.xlu0 %2566
        %2568 = vrot.lane.b32.xlu0 %v2126, 96
        %v2569 = vpop.permute.xlu0 %2568
        %2570 = vrot.lane.b32.xlu0 %v2127, 96
        %v2571 = vpop.permute.xlu0 %2570
        %2572 = vrot.lane.b32.xlu0 %v2128, 96
        %v2573 = vpop.permute.xlu0 %2572
        %2574 = vrot.lane.b32.xlu0 %v2129, 96
        %v2575 = vpop.permute.xlu0 %2574
        %2576 = vrot.lane.b32.xlu0 %v2130, 96
        %v2577 = vpop.permute.xlu0 %2576
        %2578 = vrot.lane.b32.xlu0 %v2131, 96
        %v2579 = vpop.permute.xlu0 %2578
        %2580 = vrot.lane.b32.xlu0 %v2132, 96
        %v2581 = vpop.permute.xlu0 %2580
        %2582 = vrot.lane.b32.xlu0 %v2133, 96
        %v2583 = vpop.permute.xlu0 %2582
        %2584 = vrot.lane.b32.xlu0 %v2134, 96
        %v2585 = vpop.permute.xlu0 %2584
        %2586 = vrot.lane.b32.xlu0 %v2135, 96
        %v2587 = vpop.permute.xlu0 %2586
        %2588 = vrot.lane.b32.xlu0 %v2136, 96
        %v2589 = vpop.permute.xlu0 %2588
        %2590 = vrot.lane.b32.xlu0 %v2137, 96
        %v2591 = vpop.permute.xlu0 %2590
        %2592 = vrot.lane.b32.xlu0 %v2138, 96
        %v2593 = vpop.permute.xlu0 %2592
        %2594 = vrot.lane.b32.xlu0 %v2139, 96
        %v2595 = vpop.permute.xlu0 %2594
        %2596 = vrot.lane.b32.xlu0 %v2140, 96
        %v2597 = vpop.permute.xlu0 %2596
        %2598 = vrot.lane.b32.xlu0 %v2141, 96
        %v2599 = vpop.permute.xlu0 %2598
        %2600 = vrot.lane.b32.xlu0 %v2142, 96
        %v2601 = vpop.permute.xlu0 %2600
        %2602 = vrot.lane.b32.xlu0 %v2143, 96
        %v2603 = vpop.permute.xlu0 %2602
        %2604 = vrot.lane.b32.xlu0 %v2144, 96
        %v2605 = vpop.permute.xlu0 %2604
        %v2607 = vshrl.u32 %v2120, 16
        %v2609 = vshll.u32 %v2120, 16
        %v2611 = vrot.slane %v2609, 1
        %v2612 = vor.u32 %v2607, %v2611
        %v2614 = vshrl.u32 %v2128, 16
        %v2616 = vshll.u32 %v2128, 16
        %v2618 = vrot.slane %v2616, 1
        %v2619 = vor.u32 %v2614, %v2618
        %v2621 = vshrl.u32 %v2136, 16
        %v2623 = vshll.u32 %v2136, 16
        %v2625 = vrot.slane %v2623, 1
        %v2626 = vor.u32 %v2621, %v2625
        %v2628 = vshrl.u32 %v2144, 16
        %v2630 = vshll.u32 %v2144, 16
        %v2632 = vrot.slane %v2630, 1
        %v2633 = vor.u32 %v2628, %v2632
        %v2634 = vrot.slane %v2120, 1
        %v2635 = vrot.slane %v2128, 1
        %v2636 = vrot.slane %v2136, 1
        %v2637 = vrot.slane %v2144, 1
        %2638 = vrot.lane.b32.xlu0 %v2452, 32
        %v2639 = vpop.permute.xlu0 %2638
        %2640 = vrot.lane.b32.xlu0 %v2453, 32
        %v2641 = vpop.permute.xlu0 %2640
        %2642 = vrot.lane.b32.xlu0 %v2454, 32
        %v2643 = vpop.permute.xlu0 %2642
        %2644 = vrot.lane.b32.xlu0 %v2455, 32
        %v2645 = vpop.permute.xlu0 %2644
        %2646 = vrot.lane.b32.xlu0 %v2456, 32
        %v2647 = vpop.permute.xlu0 %2646
        %2648 = vrot.lane.b32.xlu0 %v2457, 32
        %v2649 = vpop.permute.xlu0 %2648
        %2650 = vrot.lane.b32.xlu0 %v2458, 32
        %v2651 = vpop.permute.xlu0 %2650
        %2652 = vrot.lane.b32.xlu0 %v2634, 32
        %v2653 = vpop.permute.xlu0 %2652
        %2654 = vrot.lane.b32.xlu0 %v2459, 32
        %v2655 = vpop.permute.xlu0 %2654
        %2656 = vrot.lane.b32.xlu0 %v2460, 32
        %v2657 = vpop.permute.xlu0 %2656
        %2658 = vrot.lane.b32.xlu0 %v2461, 32
        %v2659 = vpop.permute.xlu0 %2658
        %2660 = vrot.lane.b32.xlu0 %v2462, 32
        %v2661 = vpop.permute.xlu0 %2660
        %2662 = vrot.lane.b32.xlu0 %v2463, 32
        %v2663 = vpop.permute.xlu0 %2662
        %2664 = vrot.lane.b32.xlu0 %v2464, 32
        %v2665 = vpop.permute.xlu0 %2664
        %2666 = vrot.lane.b32.xlu0 %v2465, 32
        %v2667 = vpop.permute.xlu0 %2666
        %2668 = vrot.lane.b32.xlu0 %v2635, 32
        %v2669 = vpop.permute.xlu0 %2668
        %2670 = vrot.lane.b32.xlu0 %v2466, 32
        %v2671 = vpop.permute.xlu0 %2670
        %2672 = vrot.lane.b32.xlu0 %v2467, 32
        %v2673 = vpop.permute.xlu0 %2672
        %2674 = vrot.lane.b32.xlu0 %v2468, 32
        %v2675 = vpop.permute.xlu0 %2674
        %2676 = vrot.lane.b32.xlu0 %v2469, 32
        %v2677 = vpop.permute.xlu0 %2676
        %2678 = vrot.lane.b32.xlu0 %v2470, 32
        %v2679 = vpop.permute.xlu0 %2678
        %2680 = vrot.lane.b32.xlu0 %v2471, 32
        %v2681 = vpop.permute.xlu0 %2680
        %2682 = vrot.lane.b32.xlu0 %v2472, 32
        %v2683 = vpop.permute.xlu0 %2682
        %2684 = vrot.lane.b32.xlu0 %v2636, 32
        %v2685 = vpop.permute.xlu0 %2684
        %2686 = vrot.lane.b32.xlu0 %v2473, 32
        %v2687 = vpop.permute.xlu0 %2686
        %2688 = vrot.lane.b32.xlu0 %v2474, 32
        %v2689 = vpop.permute.xlu0 %2688
        %2690 = vrot.lane.b32.xlu0 %v2475, 32
        %v2691 = vpop.permute.xlu0 %2690
        %2692 = vrot.lane.b32.xlu0 %v2476, 32
        %v2693 = vpop.permute.xlu0 %2692
        %2694 = vrot.lane.b32.xlu0 %v2477, 32
        %v2695 = vpop.permute.xlu0 %2694
        %2696 = vrot.lane.b32.xlu0 %v2478, 32
        %v2697 = vpop.permute.xlu0 %2696
        %2698 = vrot.lane.b32.xlu0 %v2479, 32
        %v2699 = vpop.permute.xlu0 %2698
        %2700 = vrot.lane.b32.xlu0 %v2637, 32
        %v2701 = vpop.permute.xlu0 %2700
        %2702 = vrot.lane.b32.xlu0 %v2114, 64
        %v2703 = vpop.permute.xlu0 %2702
        %2704 = vrot.lane.b32.xlu0 %v2115, 64
        %v2705 = vpop.permute.xlu0 %2704
        %2706 = vrot.lane.b32.xlu0 %v2116, 64
        %v2707 = vpop.permute.xlu0 %2706
        %2708 = vrot.lane.b32.xlu0 %v2117, 64
        %v2709 = vpop.permute.xlu0 %2708
        %2710 = vrot.lane.b32.xlu0 %v2118, 64
        %v2711 = vpop.permute.xlu0 %2710
        %2712 = vrot.lane.b32.xlu0 %v2119, 64
        %v2713 = vpop.permute.xlu0 %2712
        %2714 = vrot.lane.b32.xlu0 %v2120, 64
        %v2715 = vpop.permute.xlu0 %2714
        %2716 = vrot.lane.b32.xlu0 0, 64
        %v2717 = vpop.permute.xlu0 %2716
        %2718 = vrot.lane.b32.xlu0 %v2122, 64
        %v2719 = vpop.permute.xlu0 %2718
        %2720 = vrot.lane.b32.xlu0 %v2123, 64
        %v2721 = vpop.permute.xlu0 %2720
        %2722 = vrot.lane.b32.xlu0 %v2124, 64
        %v2723 = vpop.permute.xlu0 %2722
        %2724 = vrot.lane.b32.xlu0 %v2125, 64
        %v2725 = vpop.permute.xlu0 %2724
        %2726 = vrot.lane.b32.xlu0 %v2126, 64
        %v2727 = vpop.permute.xlu0 %2726
        %2728 = vrot.lane.b32.xlu0 %v2127, 64
        %v2729 = vpop.permute.xlu0 %2728
        %2730 = vrot.lane.b32.xlu0 %v2128, 64
        %v2731 = vpop.permute.xlu0 %2730
        %2732 = vrot.lane.b32.xlu0 %v2130, 64
        %v2733 = vpop.permute.xlu0 %2732
        %2734 = vrot.lane.b32.xlu0 %v2131, 64
        %v2735 = vpop.permute.xlu0 %2734
        %2736 = vrot.lane.b32.xlu0 %v2132, 64
        %v2737 = vpop.permute.xlu0 %2736
        %2738 = vrot.lane.b32.xlu0 %v2133, 64
        %v2739 = vpop.permute.xlu0 %2738
        %2740 = vrot.lane.b32.xlu0 %v2134, 64
        %v2741 = vpop.permute.xlu0 %2740
        %2742 = vrot.lane.b32.xlu0 %v2135, 64
        %v2743 = vpop.permute.xlu0 %2742
        %2744 = vrot.lane.b32.xlu0 %v2136, 64
        %v2745 = vpop.permute.xlu0 %2744
        %2746 = vrot.lane.b32.xlu0 %v2138, 64
        %v2747 = vpop.permute.xlu0 %2746
        %2748 = vrot.lane.b32.xlu0 %v2139, 64
        %v2749 = vpop.permute.xlu0 %2748
        %2750 = vrot.lane.b32.xlu0 %v2140, 64
        %v2751 = vpop.permute.xlu0 %2750
        %2752 = vrot.lane.b32.xlu0 %v2141, 64
        %v2753 = vpop.permute.xlu0 %2752
        %2754 = vrot.lane.b32.xlu0 %v2142, 64
        %v2755 = vpop.permute.xlu0 %2754
        %2756 = vrot.lane.b32.xlu0 %v2143, 64
        %v2757 = vpop.permute.xlu0 %2756
        %2758 = vrot.lane.b32.xlu0 %v2144, 64
        %v2759 = vpop.permute.xlu0 %2758
        %2760 = vrot.lane.b32.xlu0 %v2181, 96
        %v2761 = vpop.permute.xlu0 %2760
        %2762 = vrot.lane.b32.xlu0 %v2188, 96
        %v2763 = vpop.permute.xlu0 %2762
        %2764 = vrot.lane.b32.xlu0 %v2195, 96
        %v2765 = vpop.permute.xlu0 %2764
        %2766 = vrot.lane.b32.xlu0 %v2202, 96
        %v2767 = vpop.permute.xlu0 %2766
        %2768 = vrot.lane.b32.xlu0 %v2209, 96
        %v2769 = vpop.permute.xlu0 %2768
        %2770 = vrot.lane.b32.xlu0 %v2216, 96
        %v2771 = vpop.permute.xlu0 %2770
        %2772 = vrot.lane.b32.xlu0 %v2612, 96
        %v2773 = vpop.permute.xlu0 %2772
        %2774 = vrot.lane.b32.xlu0 %v2167, 96
        %v2775 = vpop.permute.xlu0 %2774
        %2776 = vrot.lane.b32.xlu0 %v2230, 96
        %v2777 = vpop.permute.xlu0 %2776
        %2778 = vrot.lane.b32.xlu0 %v2237, 96
        %v2779 = vpop.permute.xlu0 %2778
        %2780 = vrot.lane.b32.xlu0 %v2244, 96
        %v2781 = vpop.permute.xlu0 %2780
        %2782 = vrot.lane.b32.xlu0 %v2251, 96
        %v2783 = vpop.permute.xlu0 %2782
        %2784 = vrot.lane.b32.xlu0 %v2258, 96
        %v2785 = vpop.permute.xlu0 %2784
        %2786 = vrot.lane.b32.xlu0 %v2265, 96
        %v2787 = vpop.permute.xlu0 %2786
        %2788 = vrot.lane.b32.xlu0 %v2619, 96
        %v2789 = vpop.permute.xlu0 %2788
        %2790 = vrot.lane.b32.xlu0 %v2279, 96
        %v2791 = vpop.permute.xlu0 %2790
        %2792 = vrot.lane.b32.xlu0 %v2286, 96
        %v2793 = vpop.permute.xlu0 %2792
        %2794 = vrot.lane.b32.xlu0 %v2293, 96
        %v2795 = vpop.permute.xlu0 %2794
        %2796 = vrot.lane.b32.xlu0 %v2300, 96
        %v2797 = vpop.permute.xlu0 %2796
        %2798 = vrot.lane.b32.xlu0 %v2307, 96
        %v2799 = vpop.permute.xlu0 %2798
        %2800 = vrot.lane.b32.xlu0 %v2314, 96
        %v2801 = vpop.permute.xlu0 %2800
        %2802 = vrot.lane.b32.xlu0 %v2626, 96
        %v2803 = vpop.permute.xlu0 %2802
        %2804 = vrot.lane.b32.xlu0 %v2328, 96
        %v2805 = vpop.permute.xlu0 %2804
        %2806 = vrot.lane.b32.xlu0 %v2335, 96
        %v2807 = vpop.permute.xlu0 %2806
        %2808 = vrot.lane.b32.xlu0 %v2342, 96
        %v2809 = vpop.permute.xlu0 %2808
        %2810 = vrot.lane.b32.xlu0 %v2349, 96
        %v2811 = vpop.permute.xlu0 %2810
        %2812 = vrot.lane.b32.xlu0 %v2356, 96
        %v2813 = vpop.permute.xlu0 %2812
        %2814 = vrot.lane.b32.xlu0 %v2363, 96
        %v2815 = vpop.permute.xlu0 %2814
        %2816 = vrot.lane.b32.xlu0 %v2633, 96
        %v2817 = vpop.permute.xlu0 %2816
        %2825 = vrot.lane.b32.xlu0 0, 32
        %v2826 = vpop.permute.xlu0 %2825
        %2827 = vrot.lane.b32.xlu0 %v2121, 32
        %v2828 = vpop.permute.xlu0 %2827
        %2829 = vrot.lane.b32.xlu0 %v2122, 32
        %v2830 = vpop.permute.xlu0 %2829
        %2831 = vrot.lane.b32.xlu0 %v2123, 32
        %v2832 = vpop.permute.xlu0 %2831
        %2833 = vrot.lane.b32.xlu0 %v2124, 32
        %v2834 = vpop.permute.xlu0 %2833
        %2835 = vrot.lane.b32.xlu0 %v2125, 32
        %v2836 = vpop.permute.xlu0 %2835
        %2837 = vrot.lane.b32.xlu0 %v2126, 32
        %v2838 = vpop.permute.xlu0 %2837
        %2839 = vrot.lane.b32.xlu0 %v2127, 32
        %v2840 = vpop.permute.xlu0 %2839
        %2841 = vrot.lane.b32.xlu0 %v2129, 32
        %v2842 = vpop.permute.xlu0 %2841
        %2843 = vrot.lane.b32.xlu0 %v2130, 32
        %v2844 = vpop.permute.xlu0 %2843
        %2845 = vrot.lane.b32.xlu0 %v2131, 32
        %v2846 = vpop.permute.xlu0 %2845
        %2847 = vrot.lane.b32.xlu0 %v2132, 32
        %v2848 = vpop.permute.xlu0 %2847
        %2849 = vrot.lane.b32.xlu0 %v2133, 32
        %v2850 = vpop.permute.xlu0 %2849
        %2851 = vrot.lane.b32.xlu0 %v2134, 32
        %v2852 = vpop.permute.xlu0 %2851
        %2853 = vrot.lane.b32.xlu0 %v2135, 32
        %v2854 = vpop.permute.xlu0 %2853
        %2855 = vrot.lane.b32.xlu0 %v2137, 32
        %v2856 = vpop.permute.xlu0 %2855
        %2857 = vrot.lane.b32.xlu0 %v2138, 32
        %v2858 = vpop.permute.xlu0 %2857
        %2859 = vrot.lane.b32.xlu0 %v2139, 32
        %v2860 = vpop.permute.xlu0 %2859
        %2861 = vrot.lane.b32.xlu0 %v2140, 32
        %v2862 = vpop.permute.xlu0 %2861
        %2863 = vrot.lane.b32.xlu0 %v2141, 32
        %v2864 = vpop.permute.xlu0 %2863
        %2865 = vrot.lane.b32.xlu0 %v2142, 32
        %v2866 = vpop.permute.xlu0 %2865
        %2867 = vrot.lane.b32.xlu0 %v2143, 32
        %v2868 = vpop.permute.xlu0 %2867
        %2869 = vrot.lane.b32.xlu0 %v2145, 32
        %v2870 = vpop.permute.xlu0 %2869
        %2871 = vrot.lane.b32.xlu0 %v2146, 32
        %v2872 = vpop.permute.xlu0 %2871
        %2873 = vrot.lane.b32.xlu0 %v2147, 32
        %v2874 = vpop.permute.xlu0 %2873
        %2875 = vrot.lane.b32.xlu0 %v2148, 32
        %v2876 = vpop.permute.xlu0 %2875
        %2877 = vrot.lane.b32.xlu0 %v2149, 32
        %v2878 = vpop.permute.xlu0 %2877
        %2879 = vrot.lane.b32.xlu0 %v2150, 32
        %v2880 = vpop.permute.xlu0 %2879
        %2881 = vrot.lane.b32.xlu0 %v2151, 32
        %v2882 = vpop.permute.xlu0 %2881
        %v2884 = vshrl.u32 %v2145, 16
        %v2886 = vshll.u32 %v2145, 16
        %v2888 = vrot.slane %v2886, 1
        %v2889 = vor.u32 %v2884, %v2888
        %v2891 = vshrl.u32 %v2146, 16
        %v2893 = vshll.u32 %v2146, 16
        %v2895 = vrot.slane %v2893, 1
        %v2896 = vor.u32 %v2891, %v2895
        %v2898 = vshrl.u32 %v2147, 16
        %v2900 = vshll.u32 %v2147, 16
        %v2902 = vrot.slane %v2900, 1
        %v2903 = vor.u32 %v2898, %v2902
        %v2905 = vshrl.u32 %v2148, 16
        %v2907 = vshll.u32 %v2148, 16
        %v2909 = vrot.slane %v2907, 1
        %v2910 = vor.u32 %v2905, %v2909
        %v2912 = vshrl.u32 %v2149, 16
        %v2914 = vshll.u32 %v2149, 16
        %v2916 = vrot.slane %v2914, 1
        %v2917 = vor.u32 %v2912, %v2916
        %v2919 = vshrl.u32 %v2150, 16
        %v2921 = vshll.u32 %v2150, 16
        %v2923 = vrot.slane %v2921, 1
        %v2924 = vor.u32 %v2919, %v2923
        %v2926 = vshrl.u32 %v2151, 16
        %v2928 = vshll.u32 %v2151, 16
        %v2930 = vrot.slane %v2928, 1
        %v2931 = vor.u32 %v2926, %v2930
        %2932 = vrot.lane.b32.xlu0 %v2167, 64
        %v2933 = vpop.permute.xlu0 %2932
        %2934 = vrot.lane.b32.xlu0 %v2223, 64
        %v2935 = vpop.permute.xlu0 %2934
        %2936 = vrot.lane.b32.xlu0 %v2230, 64
        %v2937 = vpop.permute.xlu0 %2936
        %2938 = vrot.lane.b32.xlu0 %v2237, 64
        %v2939 = vpop.permute.xlu0 %2938
        %2940 = vrot.lane.b32.xlu0 %v2244, 64
        %v2941 = vpop.permute.xlu0 %2940
        %2942 = vrot.lane.b32.xlu0 %v2251, 64
        %v2943 = vpop.permute.xlu0 %2942
        %2944 = vrot.lane.b32.xlu0 %v2258, 64
        %v2945 = vpop.permute.xlu0 %2944
        %2946 = vrot.lane.b32.xlu0 %v2265, 64
        %v2947 = vpop.permute.xlu0 %2946
        %2948 = vrot.lane.b32.xlu0 %v2272, 64
        %v2949 = vpop.permute.xlu0 %2948
        %2950 = vrot.lane.b32.xlu0 %v2279, 64
        %v2951 = vpop.permute.xlu0 %2950
        %2952 = vrot.lane.b32.xlu0 %v2286, 64
        %v2953 = vpop.permute.xlu0 %2952
        %2954 = vrot.lane.b32.xlu0 %v2293, 64
        %v2955 = vpop.permute.xlu0 %2954
        %2956 = vrot.lane.b32.xlu0 %v2300, 64
        %v2957 = vpop.permute.xlu0 %2956
        %2958 = vrot.lane.b32.xlu0 %v2307, 64
        %v2959 = vpop.permute.xlu0 %2958
        %2960 = vrot.lane.b32.xlu0 %v2314, 64
        %v2961 = vpop.permute.xlu0 %2960
        %2962 = vrot.lane.b32.xlu0 %v2321, 64
        %v2963 = vpop.permute.xlu0 %2962
        %2964 = vrot.lane.b32.xlu0 %v2328, 64
        %v2965 = vpop.permute.xlu0 %2964
        %2966 = vrot.lane.b32.xlu0 %v2335, 64
        %v2967 = vpop.permute.xlu0 %2966
        %2968 = vrot.lane.b32.xlu0 %v2342, 64
        %v2969 = vpop.permute.xlu0 %2968
        %2970 = vrot.lane.b32.xlu0 %v2349, 64
        %v2971 = vpop.permute.xlu0 %2970
        %2972 = vrot.lane.b32.xlu0 %v2356, 64
        %v2973 = vpop.permute.xlu0 %2972
        %2974 = vrot.lane.b32.xlu0 %v2363, 64
        %v2975 = vpop.permute.xlu0 %2974
        %2976 = vrot.lane.b32.xlu0 %v2889, 64
        %v2977 = vpop.permute.xlu0 %2976
        %2978 = vrot.lane.b32.xlu0 %v2896, 64
        %v2979 = vpop.permute.xlu0 %2978
        %2980 = vrot.lane.b32.xlu0 %v2903, 64
        %v2981 = vpop.permute.xlu0 %2980
        %2982 = vrot.lane.b32.xlu0 %v2910, 64
        %v2983 = vpop.permute.xlu0 %2982
        %2984 = vrot.lane.b32.xlu0 %v2917, 64
        %v2985 = vpop.permute.xlu0 %2984
        %2986 = vrot.lane.b32.xlu0 %v2924, 64
        %v2987 = vpop.permute.xlu0 %2986
        %2988 = vrot.lane.b32.xlu0 %v2931, 64
        %v2989 = vpop.permute.xlu0 %2988
        %v2990 = vrot.slane %v2145, 1
        %v2991 = vrot.slane %v2146, 1
        %v2992 = vrot.slane %v2147, 1
        %v2993 = vrot.slane %v2148, 1
        %v2994 = vrot.slane %v2149, 1
        %v2995 = vrot.slane %v2150, 1
        %v2996 = vrot.slane %v2151, 1
        %2997 = vrot.lane.b32.xlu0 %v2451, 96
        %v2998 = vpop.permute.xlu0 %2997
        %2999 = vrot.lane.b32.xlu0 %v2459, 96
        %v3000 = vpop.permute.xlu0 %2999
        %3001 = vrot.lane.b32.xlu0 %v2460, 96
        %v3002 = vpop.permute.xlu0 %3001
        %3003 = vrot.lane.b32.xlu0 %v2461, 96
        %v3004 = vpop.permute.xlu0 %3003
        %3005 = vrot.lane.b32.xlu0 %v2462, 96
        %v3006 = vpop.permute.xlu0 %3005
        %3007 = vrot.lane.b32.xlu0 %v2463, 96
        %v3008 = vpop.permute.xlu0 %3007
        %3009 = vrot.lane.b32.xlu0 %v2464, 96
        %v3010 = vpop.permute.xlu0 %3009
        %3011 = vrot.lane.b32.xlu0 %v2465, 96
        %v3012 = vpop.permute.xlu0 %3011
        %3013 = vrot.lane.b32.xlu0 %v2466, 96
        %v3014 = vpop.permute.xlu0 %3013
        %3015 = vrot.lane.b32.xlu0 %v2467, 96
        %v3016 = vpop.permute.xlu0 %3015
        %3017 = vrot.lane.b32.xlu0 %v2468, 96
        %v3018 = vpop.permute.xlu0 %3017
        %3019 = vrot.lane.b32.xlu0 %v2469, 96
        %v3020 = vpop.permute.xlu0 %3019
        %3021 = vrot.lane.b32.xlu0 %v2470, 96
        %v3022 = vpop.permute.xlu0 %3021
        %3023 = vrot.lane.b32.xlu0 %v2471, 96
        %v3024 = vpop.permute.xlu0 %3023
        %3025 = vrot.lane.b32.xlu0 %v2472, 96
        %v3026 = vpop.permute.xlu0 %3025
        %3027 = vrot.lane.b32.xlu0 %v2473, 96
        %v3028 = vpop.permute.xlu0 %3027
        %3029 = vrot.lane.b32.xlu0 %v2474, 96
        %v3030 = vpop.permute.xlu0 %3029
        %3031 = vrot.lane.b32.xlu0 %v2475, 96
        %v3032 = vpop.permute.xlu0 %3031
        %3033 = vrot.lane.b32.xlu0 %v2476, 96
        %v3034 = vpop.permute.xlu0 %3033
        %3035 = vrot.lane.b32.xlu0 %v2477, 96
        %v3036 = vpop.permute.xlu0 %3035
        %3037 = vrot.lane.b32.xlu0 %v2478, 96
        %v3038 = vpop.permute.xlu0 %3037
        %3039 = vrot.lane.b32.xlu0 %v2479, 96
        %v3040 = vpop.permute.xlu0 %3039
        %3041 = vrot.lane.b32.xlu0 %v2990, 96
        %v3042 = vpop.permute.xlu0 %3041
        %3043 = vrot.lane.b32.xlu0 %v2991, 96
        %v3044 = vpop.permute.xlu0 %3043
        %3045 = vrot.lane.b32.xlu0 %v2992, 96
        %v3046 = vpop.permute.xlu0 %3045
        %3047 = vrot.lane.b32.xlu0 %v2993, 96
        %v3048 = vpop.permute.xlu0 %3047
        %3049 = vrot.lane.b32.xlu0 %v2994, 96
        %v3050 = vpop.permute.xlu0 %3049
        %3051 = vrot.lane.b32.xlu0 %v2995, 96
        %v3052 = vpop.permute.xlu0 %3051
        %3053 = vrot.lane.b32.xlu0 %v2996, 96
        %v3054 = vpop.permute.xlu0 %3053
        %v3056 = vshrl.u32 %v2152, 16
        %v3058 = vshll.u32 %v2152, 16
        %v3060 = vrot.slane %v3058, 1
        %v3061 = vor.u32 %v3056, %v3060
        %3062 = vrot.lane.b32.xlu0 %v2619, 32
        %v3063 = vpop.permute.xlu0 %3062
        %3064 = vrot.lane.b32.xlu0 %v2626, 32
        %v3065 = vpop.permute.xlu0 %3064
        %3066 = vrot.lane.b32.xlu0 %v2633, 32
        %v3067 = vpop.permute.xlu0 %3066
        %3068 = vrot.lane.b32.xlu0 %v2889, 32
        %v3069 = vpop.permute.xlu0 %3068
        %3070 = vrot.lane.b32.xlu0 %v2896, 32
        %v3071 = vpop.permute.xlu0 %3070
        %3072 = vrot.lane.b32.xlu0 %v2903, 32
        %v3073 = vpop.permute.xlu0 %3072
        %3074 = vrot.lane.b32.xlu0 %v2910, 32
        %v3075 = vpop.permute.xlu0 %3074
        %3076 = vrot.lane.b32.xlu0 %v2917, 32
        %v3077 = vpop.permute.xlu0 %3076
        %3078 = vrot.lane.b32.xlu0 %v2924, 32
        %v3079 = vpop.permute.xlu0 %3078
        %3080 = vrot.lane.b32.xlu0 %v2931, 32
        %v3081 = vpop.permute.xlu0 %3080
        %3082 = vrot.lane.b32.xlu0 %v3061, 32
        %v3083 = vpop.permute.xlu0 %3082
        %v3085 = vrot.slane %v2152, 1
        %3086 = vrot.lane.b32.xlu0 %v2635, 64
        %v3087 = vpop.permute.xlu0 %3086
        %3088 = vrot.lane.b32.xlu0 %v2636, 64
        %v3089 = vpop.permute.xlu0 %3088
        %3090 = vrot.lane.b32.xlu0 %v2637, 64
        %v3091 = vpop.permute.xlu0 %3090
        %3092 = vrot.lane.b32.xlu0 %v2990, 64
        %v3093 = vpop.permute.xlu0 %3092
        %3094 = vrot.lane.b32.xlu0 %v2991, 64
        %v3095 = vpop.permute.xlu0 %3094
        %3096 = vrot.lane.b32.xlu0 %v2992, 64
        %v3097 = vpop.permute.xlu0 %3096
        %3098 = vrot.lane.b32.xlu0 %v2993, 64
        %v3099 = vpop.permute.xlu0 %3098
        %3100 = vrot.lane.b32.xlu0 %v2994, 64
        %v3101 = vpop.permute.xlu0 %3100
        %3102 = vrot.lane.b32.xlu0 %v2995, 64
        %v3103 = vpop.permute.xlu0 %3102
        %3104 = vrot.lane.b32.xlu0 %v2996, 64
        %v3105 = vpop.permute.xlu0 %3104
        %3106 = vrot.lane.b32.xlu0 %v3085, 64
        %v3107 = vpop.permute.xlu0 %3106
        %3108 = vrot.lane.b32.xlu0 0, 96
        %v3109 = vpop.permute.xlu0 %3108
        %3110 = vrot.lane.b32.xlu0 %v2146, 96
        %v3111 = vpop.permute.xlu0 %3110
        %3112 = vrot.lane.b32.xlu0 %v2147, 96
        %v3113 = vpop.permute.xlu0 %3112
        %3114 = vrot.lane.b32.xlu0 %v2148, 96
        %v3115 = vpop.permute.xlu0 %3114
        %3116 = vrot.lane.b32.xlu0 %v2149, 96
        %v3117 = vpop.permute.xlu0 %3116
        %3118 = vrot.lane.b32.xlu0 %v2150, 96
        %v3119 = vpop.permute.xlu0 %3118
        %3120 = vrot.lane.b32.xlu0 %v2151, 96
        %v3121 = vpop.permute.xlu0 %3120
        %3122 = vrot.lane.b32.xlu0 %v2152, 96
        %v3123 = vpop.permute.xlu0 %3122
        %vm3124 = vcmask 261120
        %v3126 = vsel %vm3124, 0, %v2365
        %v3128 = vsel %vm3124, %v2113, %v2367
        %v3130 = vsel %vm3124, %v2114, %v2369
        %v3132 = vsel %vm3124, %v2115, %v2371
        %v3134 = vsel %vm3124, %v2116, %v2373
        %v3136 = vsel %vm3124, %v2117, %v2375
        %v3138 = vsel %vm3124, %v2118, %v2377
        %v3140 = vsel %vm3124, %v2119, %v2379
        %v3142 = vsel %vm3124, %v2121, %v2381
        %v3144 = vsel %vm3124, %v2122, %v2383
        %v3146 = vsel %vm3124, %v2123, %v2385
        %v3148 = vsel %vm3124, %v2124, %v2387
        %v3150 = vsel %vm3124, %v2125, %v2389
        %v3152 = vsel %vm3124, %v2126, %v2391
        %v3154 = vsel %vm3124, %v2127, %v2393
        %v3156 = vsel %vm3124, %v2129, %v2395
        %v3158 = vsel %vm3124, %v2130, %v2397
        %v3160 = vsel %vm3124, %v2131, %v2399
        %v3162 = vsel %vm3124, %v2132, %v2401
        %v3164 = vsel %vm3124, %v2133, %v2403
        %v3166 = vsel %vm3124, %v2134, %v2405
        %v3168 = vsel %vm3124, %v2135, %v2407
        %v3170 = vsel %vm3124, %v2137, %v2409
        %v3172 = vsel %vm3124, %v2138, %v2411
        %v3174 = vsel %vm3124, %v2139, %v2413
        %v3176 = vsel %vm3124, %v2140, %v2415
        %v3178 = vsel %vm3124, %v2141, %v2417
        %v3180 = vsel %vm3124, %v2142, %v2419
        %v3182 = vsel %vm3124, %v2143, %v2421
        %vm3183 = vcmask 523264
        %v3185 = vsel %vm3183, %v3126, %v2481
        %v3187 = vsel %vm3183, %v3128, %v2483
        %v3189 = vsel %vm3183, %v3130, %v2485
        %v3191 = vsel %vm3183, %v3132, %v2487
        %v3193 = vsel %vm3183, %v3134, %v2489
        %v3195 = vsel %vm3183, %v3136, %v2491
        %v3197 = vsel %vm3183, %v3138, %v2493
        %v3199 = vsel %vm3183, %v3140, %v2495
        %v3201 = vsel %vm3183, %v3142, %v2497
        %v3203 = vsel %vm3183, %v3144, %v2499
        %v3205 = vsel %vm3183, %v3146, %v2501
        %v3207 = vsel %vm3183, %v3148, %v2503
        %v3209 = vsel %vm3183, %v3150, %v2505
        %v3211 = vsel %vm3183, %v3152, %v2507
        %v3213 = vsel %vm3183, %v3154, %v2509
        %v3215 = vsel %vm3183, %v3156, %v2511
        %v3217 = vsel %vm3183, %v3158, %v2513
        %v3219 = vsel %vm3183, %v3160, %v2515
        %v3221 = vsel %vm3183, %v3162, %v2517
        %v3223 = vsel %vm3183, %v3164, %v2519
        %v3225 = vsel %vm3183, %v3166, %v2521
        %v3227 = vsel %vm3183, %v3168, %v2523
        %v3229 = vsel %vm3183, %v3170, %v2525
        %v3231 = vsel %vm3183, %v3172, %v2527
        %v3233 = vsel %vm3183, %v3174, %v2529
        %v3235 = vsel %vm3183, %v3176, %v2531
        %v3237 = vsel %vm3183, %v3178, %v2533
        %v3239 = vsel %vm3183, %v3180, %v2535
        %v3241 = vsel %vm3183, %v3182, %v2537
        %vm3242 = vcmask 785408
        %v3244 = vsel %vm3242, %v3185, %v2543
        %v3246 = vsel %vm3242, %v3187, %v2545
        %v3248 = vsel %vm3242, %v3189, %v2547
        %v3250 = vsel %vm3242, %v3191, %v2549
        %v3252 = vsel %vm3242, %v3193, %v2551
        %v3254 = vsel %vm3242, %v3195, %v2553
        %v3256 = vsel %vm3242, %v3197, %v2555
        %v3258 = vsel %vm3242, %v3199, %v2557
        %v3260 = vsel %vm3242, %v3185, %v2559
        %v3262 = vsel %vm3242, %v3201, %v2561
        %v3264 = vsel %vm3242, %v3203, %v2563
        %v3266 = vsel %vm3242, %v3205, %v2565
        %v3268 = vsel %vm3242, %v3207, %v2567
        %v3270 = vsel %vm3242, %v3209, %v2569
        %v3272 = vsel %vm3242, %v3211, %v2571
        %v3274 = vsel %vm3242, %v3213, %v2573
        %v3276 = vsel %vm3242, %v3185, %v2575
        %v3278 = vsel %vm3242, %v3215, %v2577
        %v3280 = vsel %vm3242, %v3217, %v2579
        %v3282 = vsel %vm3242, %v3219, %v2581
        %v3284 = vsel %vm3242, %v3221, %v2583
        %v3286 = vsel %vm3242, %v3223, %v2585
        %v3288 = vsel %vm3242, %v3225, %v2587
        %v3290 = vsel %vm3242, %v3227, %v2589
        %v3292 = vsel %vm3242, %v3185, %v2591
        %v3294 = vsel %vm3242, %v3229, %v2593
        %v3296 = vsel %vm3242, %v3231, %v2595
        %v3298 = vsel %vm3242, %v3233, %v2597
        %v3300 = vsel %vm3242, %v3235, %v2599
        %v3302 = vsel %vm3242, %v3237, %v2601
        %v3304 = vsel %vm3242, %v3239, %v2603
        %v3306 = vsel %vm3242, %v3241, %v2605
        %v3309 = vsel %vm3124, %v2174, %v2639
        %v3312 = vsel %vm3124, %v2181, %v2641
        %v3315 = vsel %vm3124, %v2188, %v2643
        %v3318 = vsel %vm3124, %v2195, %v2645
        %v3321 = vsel %vm3124, %v2202, %v2647
        %v3324 = vsel %vm3124, %v2209, %v2649
        %v3327 = vsel %vm3124, %v2216, %v2651
        %v3330 = vsel %vm3124, %v2612, %v2653
        %v3333 = vsel %vm3124, %v2223, %v2655
        %v3336 = vsel %vm3124, %v2230, %v2657
        %v3339 = vsel %vm3124, %v2237, %v2659
        %v3342 = vsel %vm3124, %v2244, %v2661
        %v3345 = vsel %vm3124, %v2251, %v2663
        %v3348 = vsel %vm3124, %v2258, %v2665
        %v3351 = vsel %vm3124, %v2265, %v2667
        %v3354 = vsel %vm3124, %v2619, %v2669
        %v3357 = vsel %vm3124, %v2272, %v2671
        %v3360 = vsel %vm3124, %v2279, %v2673
        %v3363 = vsel %vm3124, %v2286, %v2675
        %v3366 = vsel %vm3124, %v2293, %v2677
        %v3369 = vsel %vm3124, %v2300, %v2679
        %v3372 = vsel %vm3124, %v2307, %v2681
        %v3375 = vsel %vm3124, %v2314, %v2683
        %v3378 = vsel %vm3124, %v2626, %v2685
        %v3381 = vsel %vm3124, %v2321, %v2687
        %v3384 = vsel %vm3124, %v2328, %v2689
        %v3387 = vsel %vm3124, %v2335, %v2691
        %v3390 = vsel %vm3124, %v2342, %v2693
        %v3393 = vsel %vm3124, %v2349, %v2695
        %v3396 = vsel %vm3124, %v2356, %v2697
        %v3399 = vsel %vm3124, %v2363, %v2699
        %v3402 = vsel %vm3124, %v2633, %v2701
        %v3404 = vsel %vm3183, %v3309, %v2703
        %v3406 = vsel %vm3183, %v3312, %v2705
        %v3408 = vsel %vm3183, %v3315, %v2707
        %v3410 = vsel %vm3183, %v3318, %v2709
        %v3412 = vsel %vm3183, %v3321, %v2711
        %v3414 = vsel %vm3183, %v3324, %v2713
        %v3416 = vsel %vm3183, %v3327, %v2715
        %v3418 = vsel %vm3183, %v3330, %v2717
        %v3420 = vsel %vm3183, %v3333, %v2719
        %v3422 = vsel %vm3183, %v3336, %v2721
        %v3424 = vsel %vm3183, %v3339, %v2723
        %v3426 = vsel %vm3183, %v3342, %v2725
        %v3428 = vsel %vm3183, %v3345, %v2727
        %v3430 = vsel %vm3183, %v3348, %v2729
        %v3432 = vsel %vm3183, %v3351, %v2731
        %v3433 = vsel %vm3183, %v3354, %v2717
        %v3435 = vsel %vm3183, %v3357, %v2733
        %v3437 = vsel %vm3183, %v3360, %v2735
        %v3439 = vsel %vm3183, %v3363, %v2737
        %v3441 = vsel %vm3183, %v3366, %v2739
        %v3443 = vsel %vm3183, %v3369, %v2741
        %v3445 = vsel %vm3183, %v3372, %v2743
        %v3447 = vsel %vm3183, %v3375, %v2745
        %v3448 = vsel %vm3183, %v3378, %v2717
        %v3450 = vsel %vm3183, %v3381, %v2747
        %v3452 = vsel %vm3183, %v3384, %v2749
        %v3454 = vsel %vm3183, %v3387, %v2751
        %v3456 = vsel %vm3183, %v3390, %v2753
        %v3458 = vsel %vm3183, %v3393, %v2755
        %v3460 = vsel %vm3183, %v3396, %v2757
        %v3462 = vsel %vm3183, %v3399, %v2759
        %v3463 = vsel %vm3183, %v3402, %v2717
        %v3465 = vsel %vm3242, %v3404, %v2761
        %v3467 = vsel %vm3242, %v3406, %v2763
        %v3469 = vsel %vm3242, %v3408, %v2765
        %v3471 = vsel %vm3242, %v3410, %v2767
        %v3473 = vsel %vm3242, %v3412, %v2769
        %v3475 = vsel %vm3242, %v3414, %v2771
        %v3477 = vsel %vm3242, %v3416, %v2773
        %v3479 = vsel %vm3242, %v3418, %v2775
        %v3481 = vsel %vm3242, %v3420, %v2777
        %v3483 = vsel %vm3242, %v3422, %v2779
        %v3485 = vsel %vm3242, %v3424, %v2781
        %v3487 = vsel %vm3242, %v3426, %v2783
        %v3489 = vsel %vm3242, %v3428, %v2785
        %v3491 = vsel %vm3242, %v3430, %v2787
        %v3493 = vsel %vm3242, %v3432, %v2789
        %v3494 = vsel %vm3242, %v3433, %v2775
        %v3496 = vsel %vm3242, %v3435, %v2791
        %v3498 = vsel %vm3242, %v3437, %v2793
        %v3500 = vsel %vm3242, %v3439, %v2795
        %v3502 = vsel %vm3242, %v3441, %v2797
        %v3504 = vsel %vm3242, %v3443, %v2799
        %v3506 = vsel %vm3242, %v3445, %v2801
        %v3508 = vsel %vm3242, %v3447, %v2803
        %v3509 = vsel %vm3242, %v3448, %v2775
        %v3511 = vsel %vm3242, %v3450, %v2805
        %v3513 = vsel %vm3242, %v3452, %v2807
        %v3515 = vsel %vm3242, %v3454, %v2809
        %v3517 = vsel %vm3242, %v3456, %v2811
        %v3519 = vsel %vm3242, %v3458, %v2813
        %v3521 = vsel %vm3242, %v3460, %v2815
        %v3523 = vsel %vm3242, %v3462, %v2817
        %v3524 = vsel %vm3242, %v3463, %v2775
        %v3527 = vsel %vm3124, %v2453, %v2826
        %v3530 = vsel %vm3124, %v2454, %v2828
        %v3533 = vsel %vm3124, %v2455, %v2830
        %v3536 = vsel %vm3124, %v2456, %v2832
        %v3539 = vsel %vm3124, %v2457, %v2834
        %v3542 = vsel %vm3124, %v2458, %v2836
        %v3545 = vsel %vm3124, %v2634, %v2838
        %v3548 = vsel %vm3124, %v2451, %v2840
        %v3550 = vsel %vm3124, %v2460, %v2826
        %v3553 = vsel %vm3124, %v2461, %v2842
        %v3556 = vsel %vm3124, %v2462, %v2844
        %v3559 = vsel %vm3124, %v2463, %v2846
        %v3562 = vsel %vm3124, %v2464, %v2848
        %v3565 = vsel %vm3124, %v2465, %v2850
        %v3568 = vsel %vm3124, %v2635, %v2852
        %v3570 = vsel %vm3124, %v2451, %v2854
        %v3572 = vsel %vm3124, %v2467, %v2826
        %v3575 = vsel %vm3124, %v2468, %v2856
        %v3578 = vsel %vm3124, %v2469, %v2858
        %v3581 = vsel %vm3124, %v2470, %v2860
        %v3584 = vsel %vm3124, %v2471, %v2862
        %v3587 = vsel %vm3124, %v2472, %v2864
        %v3590 = vsel %vm3124, %v2636, %v2866
        %v3592 = vsel %vm3124, %v2451, %v2868
        %v3594 = vsel %vm3124, %v2474, %v2826
        %v3597 = vsel %vm3124, %v2475, %v2870
        %v3600 = vsel %vm3124, %v2476, %v2872
        %v3603 = vsel %vm3124, %v2477, %v2874
        %v3606 = vsel %vm3124, %v2478, %v2876
        %v3609 = vsel %vm3124, %v2479, %v2878
        %v3612 = vsel %vm3124, %v2637, %v2880
        %v3614 = vsel %vm3124, %v2451, %v2882
        %v3616 = vsel %vm3183, %v3527, %v2933
        %v3618 = vsel %vm3183, %v3530, %v2935
        %v3620 = vsel %vm3183, %v3533, %v2937
        %v3622 = vsel %vm3183, %v3536, %v2939
        %v3624 = vsel %vm3183, %v3539, %v2941
        %v3626 = vsel %vm3183, %v3542, %v2943
        %v3628 = vsel %vm3183, %v3545, %v2945
        %v3630 = vsel %vm3183, %v3548, %v2947
        %v3631 = vsel %vm3183, %v3550, %v2933
        %v3633 = vsel %vm3183, %v3553, %v2949
        %v3635 = vsel %vm3183, %v3556, %v2951
        %v3637 = vsel %vm3183, %v3559, %v2953
        %v3639 = vsel %vm3183, %v3562, %v2955
        %v3641 = vsel %vm3183, %v3565, %v2957
        %v3643 = vsel %vm3183, %v3568, %v2959
        %v3645 = vsel %vm3183, %v3570, %v2961
        %v3646 = vsel %vm3183, %v3572, %v2933
        %v3648 = vsel %vm3183, %v3575, %v2963
        %v3650 = vsel %vm3183, %v3578, %v2965
        %v3652 = vsel %vm3183, %v3581, %v2967
        %v3654 = vsel %vm3183, %v3584, %v2969
        %v3656 = vsel %vm3183, %v3587, %v2971
        %v3658 = vsel %vm3183, %v3590, %v2973
        %v3660 = vsel %vm3183, %v3592, %v2975
        %v3661 = vsel %vm3183, %v3594, %v2933
        %v3663 = vsel %vm3183, %v3597, %v2977
        %v3665 = vsel %vm3183, %v3600, %v2979
        %v3667 = vsel %vm3183, %v3603, %v2981
        %v3669 = vsel %vm3183, %v3606, %v2983
        %v3671 = vsel %vm3183, %v3609, %v2985
        %v3673 = vsel %vm3183, %v3612, %v2987
        %v3675 = vsel %vm3183, %v3614, %v2989
        %v3677 = vsel %vm3242, %v3616, %v2998
        %v3679 = vsel %vm3242, %v3618, %v3000
        %v3681 = vsel %vm3242, %v3620, %v3002
        %v3683 = vsel %vm3242, %v3622, %v3004
        %v3685 = vsel %vm3242, %v3624, %v3006
        %v3687 = vsel %vm3242, %v3626, %v3008
        %v3689 = vsel %vm3242, %v3628, %v3010
        %v3691 = vsel %vm3242, %v3630, %v3012
        %v3692 = vsel %vm3242, %v3631, %v2998
        %v3694 = vsel %vm3242, %v3633, %v3014
        %v3696 = vsel %vm3242, %v3635, %v3016
        %v3698 = vsel %vm3242, %v3637, %v3018
        %v3700 = vsel %vm3242, %v3639, %v3020
        %v3702 = vsel %vm3242, %v3641, %v3022
        %v3704 = vsel %vm3242, %v3643, %v3024
        %v3706 = vsel %vm3242, %v3645, %v3026
        %v3707 = vsel %vm3242, %v3646, %v2998
        %v3709 = vsel %vm3242, %v3648, %v3028
        %v3711 = vsel %vm3242, %v3650, %v3030
        %v3713 = vsel %vm3242, %v3652, %v3032
        %v3715 = vsel %vm3242, %v3654, %v3034
        %v3717 = vsel %vm3242, %v3656, %v3036
        %v3719 = vsel %vm3242, %v3658, %v3038
        %v3721 = vsel %vm3242, %v3660, %v3040
        %v3722 = vsel %vm3242, %v3661, %v2998
        %v3724 = vsel %vm3242, %v3663, %v3042
        %v3726 = vsel %vm3242, %v3665, %v3044
        %v3728 = vsel %vm3242, %v3667, %v3046
        %v3730 = vsel %vm3242, %v3669, %v3048
        %v3732 = vsel %vm3242, %v3671, %v3050
        %v3734 = vsel %vm3242, %v3673, %v3052
        %v3736 = vsel %vm3242, %v3675, %v3054
        %v3738 = vsel %vm3124, %v2128, %v3063
        %v3740 = vsel %vm3124, %v2136, %v3065
        %v3742 = vsel %vm3124, %v2144, %v3067
        %v3744 = vsel %vm3124, %v2145, %v3069
        %v3746 = vsel %vm3124, %v2146, %v3071
        %v3748 = vsel %vm3124, %v2147, %v3073
        %v3750 = vsel %vm3124, %v2148, %v3075
        %v3752 = vsel %vm3124, %v2149, %v3077
        %v3754 = vsel %vm3124, %v2150, %v3079
        %v3756 = vsel %vm3124, %v2151, %v3081
        %v3758 = vsel %vm3124, %v2152, %v3083
        %v3760 = vsel %vm3183, %v3738, %v3087
        %v3762 = vsel %vm3183, %v3740, %v3089
        %v3764 = vsel %vm3183, %v3742, %v3091
        %v3766 = vsel %vm3183, %v3744, %v3093
        %v3768 = vsel %vm3183, %v3746, %v3095
        %v3770 = vsel %vm3183, %v3748, %v3097
        %v3772 = vsel %vm3183, %v3750, %v3099
        %v3774 = vsel %vm3183, %v3752, %v3101
        %v3776 = vsel %vm3183, %v3754, %v3103
        %v3778 = vsel %vm3183, %v3756, %v3105
        %v3780 = vsel %vm3183, %v3758, %v3107
        %v3782 = vsel %vm3242, %v3760, %v3109
        %v3783 = vsel %vm3242, %v3762, %v3109
        %v3784 = vsel %vm3242, %v3764, %v3109
        %v3786 = vsel %vm3242, %v3766, %v3111
        %v3788 = vsel %vm3242, %v3768, %v3113
        %v3790 = vsel %vm3242, %v3770, %v3115
        %v3792 = vsel %vm3242, %v3772, %v3117
        %v3794 = vsel %vm3242, %v3774, %v3119
        %v3796 = vsel %vm3242, %v3776, %v3121
        %v3798 = vsel %vm3242, %v3778, %v3123
        %v3799 = vsel %vm3242, %v3780, %v3109
        %v3800 = vrot.slane %v2162, 7
        %v3801 = vor.u32 %v3800, %v2164
        %v3802 = vrot.slane %v2267, 7
        %v3803 = vor.u32 %v3802, %v2269
        %v3804 = vrot.slane %v2274, 7
        %v3805 = vor.u32 %v3804, %v2276
        %v3806 = vrot.slane %v2281, 7
        %v3807 = vor.u32 %v3806, %v2283
        %v3808 = vrot.slane %v2288, 7
        %v3809 = vor.u32 %v3808, %v2290
        %v3810 = vrot.slane %v2295, 7
        %v3811 = vor.u32 %v3810, %v2297
        %v3812 = vrot.slane %v2302, 7
        %v3813 = vor.u32 %v3812, %v2304
        %v3814 = vrot.slane %v2309, 7
        %v3815 = vor.u32 %v3814, %v2311
        %v3816 = vrot.slane %v2316, 7
        %v3817 = vor.u32 %v3816, %v2318
        %v3818 = vrot.slane %v2323, 7
        %v3819 = vor.u32 %v3818, %v2325
        %v3820 = vrot.slane %v2330, 7
        %v3821 = vor.u32 %v3820, %v2332
        %v3822 = vrot.slane %v2337, 7
        %v3823 = vor.u32 %v3822, %v2339
        %v3824 = vrot.slane %v2344, 7
        %v3825 = vor.u32 %v3824, %v2346
        %v3826 = vrot.slane %v2351, 7
        %v3827 = vor.u32 %v3826, %v2353
        %v3828 = vrot.slane %v2358, 7
        %v3829 = vor.u32 %v3828, %v2360
        %v3830 = vrot.slane %v2884, 7
        %v3831 = vor.u32 %v3830, %v2886
        %v3832 = vrot.slane %v2891, 7
        %v3833 = vor.u32 %v3832, %v2893
        %v3834 = vrot.slane %v2898, 7
        %v3835 = vor.u32 %v3834, %v2900
        %v3836 = vrot.slane %v2905, 7
        %v3837 = vor.u32 %v3836, %v2907
        %v3838 = vrot.slane %v2912, 7
        %v3839 = vor.u32 %v3838, %v2914
        %v3840 = vrot.slane %v2919, 7
        %v3841 = vor.u32 %v3840, %v2921
        %v3842 = vrot.slane %v2926, 7
        %v3843 = vor.u32 %v3842, %v2928
        %v3845 = vshrl.u32 %v2153, 16
        %v3847 = vrot.slane %v3845, 7
        %v3848 = vshll.u32 %v2153, 16
        %v3850 = vor.u32 %v3847, %v3848
        %v3852 = vshrl.u32 %v2154, 16
        %v3854 = vrot.slane %v3852, 7
        %v3855 = vshll.u32 %v2154, 16
        %v3857 = vor.u32 %v3854, %v3855
        %v3859 = vshrl.u32 %v2155, 16
        %v3861 = vrot.slane %v3859, 7
        %v3862 = vshll.u32 %v2155, 16
        %v3864 = vor.u32 %v3861, %v3862
        %v3866 = vshrl.u32 %v2156, 16
        %v3868 = vrot.slane %v3866, 7
        %v3869 = vshll.u32 %v2156, 16
        %v3871 = vor.u32 %v3868, %v3869
        %v3873 = vshrl.u32 %v2157, 16
        %v3875 = vrot.slane %v3873, 7
        %v3876 = vshll.u32 %v2157, 16
        %v3878 = vor.u32 %v3875, %v3876
        %v3880 = vshrl.u32 %v2158, 16
        %v3882 = vrot.slane %v3880, 7
        %v3883 = vshll.u32 %v2158, 16
        %v3885 = vor.u32 %v3882, %v3883
        %v3887 = vshrl.u32 %v2159, 16
        %v3889 = vrot.slane %v3887, 7
        %v3890 = vshll.u32 %v2159, 16
        %v3892 = vor.u32 %v3889, %v3890
        %3893 = vrot.lane.b32.xlu0 %v3801, 64
        %v3894 = vpop.permute.xlu0 %3893
        %3895 = vrot.lane.b32.xlu0 %v3803, 64
        %v3896 = vpop.permute.xlu0 %3895
        %3897 = vrot.lane.b32.xlu0 %v3805, 64
        %v3898 = vpop.permute.xlu0 %3897
        %3899 = vrot.lane.b32.xlu0 %v3807, 64
        %v3900 = vpop.permute.xlu0 %3899
        %3901 = vrot.lane.b32.xlu0 %v3809, 64
        %v3902 = vpop.permute.xlu0 %3901
        %3903 = vrot.lane.b32.xlu0 %v3811, 64
        %v3904 = vpop.permute.xlu0 %3903
        %3905 = vrot.lane.b32.xlu0 %v3813, 64
        %v3906 = vpop.permute.xlu0 %3905
        %3907 = vrot.lane.b32.xlu0 %v3815, 64
        %v3908 = vpop.permute.xlu0 %3907
        %3909 = vrot.lane.b32.xlu0 %v3817, 64
        %v3910 = vpop.permute.xlu0 %3909
        %3911 = vrot.lane.b32.xlu0 %v3819, 64
        %v3912 = vpop.permute.xlu0 %3911
        %3913 = vrot.lane.b32.xlu0 %v3821, 64
        %v3914 = vpop.permute.xlu0 %3913
        %3915 = vrot.lane.b32.xlu0 %v3823, 64
        %v3916 = vpop.permute.xlu0 %3915
        %3917 = vrot.lane.b32.xlu0 %v3825, 64
        %v3918 = vpop.permute.xlu0 %3917
        %3919 = vrot.lane.b32.xlu0 %v3827, 64
        %v3920 = vpop.permute.xlu0 %3919
        %3921 = vrot.lane.b32.xlu0 %v3829, 64
        %v3922 = vpop.permute.xlu0 %3921
        %3923 = vrot.lane.b32.xlu0 %v3831, 64
        %v3924 = vpop.permute.xlu0 %3923
        %3925 = vrot.lane.b32.xlu0 %v3833, 64
        %v3926 = vpop.permute.xlu0 %3925
        %3927 = vrot.lane.b32.xlu0 %v3835, 64
        %v3928 = vpop.permute.xlu0 %3927
        %3929 = vrot.lane.b32.xlu0 %v3837, 64
        %v3930 = vpop.permute.xlu0 %3929
        %3931 = vrot.lane.b32.xlu0 %v3839, 64
        %v3932 = vpop.permute.xlu0 %3931
        %3933 = vrot.lane.b32.xlu0 %v3841, 64
        %v3934 = vpop.permute.xlu0 %3933
        %3935 = vrot.lane.b32.xlu0 %v3843, 64
        %v3936 = vpop.permute.xlu0 %3935
        %3937 = vrot.lane.b32.xlu0 %v3850, 64
        %v3938 = vpop.permute.xlu0 %3937
        %3939 = vrot.lane.b32.xlu0 %v3857, 64
        %v3940 = vpop.permute.xlu0 %3939
        %3941 = vrot.lane.b32.xlu0 %v3864, 64
        %v3942 = vpop.permute.xlu0 %3941
        %3943 = vrot.lane.b32.xlu0 %v3871, 64
        %v3944 = vpop.permute.xlu0 %3943
        %3945 = vrot.lane.b32.xlu0 %v3878, 64
        %v3946 = vpop.permute.xlu0 %3945
        %3947 = vrot.lane.b32.xlu0 %v3885, 64
        %v3948 = vpop.permute.xlu0 %3947
        %3949 = vrot.lane.b32.xlu0 %v3892, 64
        %v3950 = vpop.permute.xlu0 %3949
        %3958 = vrot.lane.b32.xlu0 %v2145, 96
        %v3959 = vpop.permute.xlu0 %3958
        %3960 = vrot.lane.b32.xlu0 %v2153, 96
        %v3961 = vpop.permute.xlu0 %3960
        %3962 = vrot.lane.b32.xlu0 %v2154, 96
        %v3963 = vpop.permute.xlu0 %3962
        %3964 = vrot.lane.b32.xlu0 %v2155, 96
        %v3965 = vpop.permute.xlu0 %3964
        %3966 = vrot.lane.b32.xlu0 %v2156, 96
        %v3967 = vpop.permute.xlu0 %3966
        %3968 = vrot.lane.b32.xlu0 %v2157, 96
        %v3969 = vpop.permute.xlu0 %3968
        %3970 = vrot.lane.b32.xlu0 %v2158, 96
        %v3971 = vpop.permute.xlu0 %3970
        %3972 = vrot.lane.b32.xlu0 %v2159, 96
        %v3973 = vpop.permute.xlu0 %3972
        %v3974 = vrot.slane %v3848, 1
        %v3975 = vor.u32 %v3845, %v3974
        %v3976 = vrot.slane %v3855, 1
        %v3977 = vor.u32 %v3852, %v3976
        %v3978 = vrot.slane %v3862, 1
        %v3979 = vor.u32 %v3859, %v3978
        %v3980 = vrot.slane %v3869, 1
        %v3981 = vor.u32 %v3866, %v3980
        %v3982 = vrot.slane %v3876, 1
        %v3983 = vor.u32 %v3873, %v3982
        %v3984 = vrot.slane %v3883, 1
        %v3985 = vor.u32 %v3880, %v3984
        %v3986 = vrot.slane %v3890, 1
        %v3987 = vor.u32 %v3887, %v3986
        %v3988 = vrot.slane %v2621, 7
        %v3989 = vor.u32 %v3988, %v2623
        %v3990 = vrot.slane %v2628, 7
        %v3991 = vor.u32 %v3990, %v2630
        %v3992 = vrot.slane %v3056, 7
        %v3993 = vor.u32 %v3992, %v3058
        %v3995 = vshrl.u32 %v2160, 16
        %v3997 = vrot.slane %v3995, 7
        %v3998 = vshll.u32 %v2160, 16
        %v4000 = vor.u32 %v3997, %v3998
        %4001 = vrot.lane.b32.xlu0 %v3803, 32
        %v4002 = vpop.permute.xlu0 %4001
        %4003 = vrot.lane.b32.xlu0 %v3805, 32
        %v4004 = vpop.permute.xlu0 %4003
        %4005 = vrot.lane.b32.xlu0 %v3807, 32
        %v4006 = vpop.permute.xlu0 %4005
        %4007 = vrot.lane.b32.xlu0 %v3809, 32
        %v4008 = vpop.permute.xlu0 %4007
        %4009 = vrot.lane.b32.xlu0 %v3811, 32
        %v4010 = vpop.permute.xlu0 %4009
        %4011 = vrot.lane.b32.xlu0 %v3813, 32
        %v4012 = vpop.permute.xlu0 %4011
        %4013 = vrot.lane.b32.xlu0 %v3815, 32
        %v4014 = vpop.permute.xlu0 %4013
        %4015 = vrot.lane.b32.xlu0 %v3989, 32
        %v4016 = vpop.permute.xlu0 %4015
        %4017 = vrot.lane.b32.xlu0 %v3817, 32
        %v4018 = vpop.permute.xlu0 %4017
        %4019 = vrot.lane.b32.xlu0 %v3819, 32
        %v4020 = vpop.permute.xlu0 %4019
        %4021 = vrot.lane.b32.xlu0 %v3821, 32
        %v4022 = vpop.permute.xlu0 %4021
        %4023 = vrot.lane.b32.xlu0 %v3823, 32
        %v4024 = vpop.permute.xlu0 %4023
        %4025 = vrot.lane.b32.xlu0 %v3825, 32
        %v4026 = vpop.permute.xlu0 %4025
        %4027 = vrot.lane.b32.xlu0 %v3827, 32
        %v4028 = vpop.permute.xlu0 %4027
        %4029 = vrot.lane.b32.xlu0 %v3829, 32
        %v4030 = vpop.permute.xlu0 %4029
        %4031 = vrot.lane.b32.xlu0 %v3991, 32
        %v4032 = vpop.permute.xlu0 %4031
        %4033 = vrot.lane.b32.xlu0 %v3831, 32
        %v4034 = vpop.permute.xlu0 %4033
        %4035 = vrot.lane.b32.xlu0 %v3833, 32
        %v4036 = vpop.permute.xlu0 %4035
        %4037 = vrot.lane.b32.xlu0 %v3835, 32
        %v4038 = vpop.permute.xlu0 %4037
        %4039 = vrot.lane.b32.xlu0 %v3837, 32
        %v4040 = vpop.permute.xlu0 %4039
        %4041 = vrot.lane.b32.xlu0 %v3839, 32
        %v4042 = vpop.permute.xlu0 %4041
        %4043 = vrot.lane.b32.xlu0 %v3841, 32
        %v4044 = vpop.permute.xlu0 %4043
        %4045 = vrot.lane.b32.xlu0 %v3843, 32
        %v4046 = vpop.permute.xlu0 %4045
        %4047 = vrot.lane.b32.xlu0 %v3993, 32
        %v4048 = vpop.permute.xlu0 %4047
        %4049 = vrot.lane.b32.xlu0 %v3850, 32
        %v4050 = vpop.permute.xlu0 %4049
        %4051 = vrot.lane.b32.xlu0 %v3857, 32
        %v4052 = vpop.permute.xlu0 %4051
        %4053 = vrot.lane.b32.xlu0 %v3864, 32
        %v4054 = vpop.permute.xlu0 %4053
        %4055 = vrot.lane.b32.xlu0 %v3871, 32
        %v4056 = vpop.permute.xlu0 %4055
        %4057 = vrot.lane.b32.xlu0 %v3878, 32
        %v4058 = vpop.permute.xlu0 %4057
        %4059 = vrot.lane.b32.xlu0 %v3885, 32
        %v4060 = vpop.permute.xlu0 %4059
        %4061 = vrot.lane.b32.xlu0 %v3892, 32
        %v4062 = vpop.permute.xlu0 %4061
        %4063 = vrot.lane.b32.xlu0 %v4000, 32
        %v4064 = vpop.permute.xlu0 %4063
        %4066 = vrot.lane.b32.xlu0 %v2129, 64
        %v4067 = vpop.permute.xlu0 %4066
        %4068 = vrot.lane.b32.xlu0 %v2137, 64
        %v4069 = vpop.permute.xlu0 %4068
        %4070 = vrot.lane.b32.xlu0 %v2145, 64
        %v4071 = vpop.permute.xlu0 %4070
        %4072 = vrot.lane.b32.xlu0 %v2146, 64
        %v4073 = vpop.permute.xlu0 %4072
        %4074 = vrot.lane.b32.xlu0 %v2147, 64
        %v4075 = vpop.permute.xlu0 %4074
        %4076 = vrot.lane.b32.xlu0 %v2148, 64
        %v4077 = vpop.permute.xlu0 %4076
        %4078 = vrot.lane.b32.xlu0 %v2149, 64
        %v4079 = vpop.permute.xlu0 %4078
        %4080 = vrot.lane.b32.xlu0 %v2150, 64
        %v4081 = vpop.permute.xlu0 %4080
        %4082 = vrot.lane.b32.xlu0 %v2151, 64
        %v4083 = vpop.permute.xlu0 %4082
        %4084 = vrot.lane.b32.xlu0 %v2152, 64
        %v4085 = vpop.permute.xlu0 %4084
        %4086 = vrot.lane.b32.xlu0 %v2153, 64
        %v4087 = vpop.permute.xlu0 %4086
        %4088 = vrot.lane.b32.xlu0 %v2154, 64
        %v4089 = vpop.permute.xlu0 %4088
        %4090 = vrot.lane.b32.xlu0 %v2155, 64
        %v4091 = vpop.permute.xlu0 %4090
        %4092 = vrot.lane.b32.xlu0 %v2156, 64
        %v4093 = vpop.permute.xlu0 %4092
        %4094 = vrot.lane.b32.xlu0 %v2157, 64
        %v4095 = vpop.permute.xlu0 %4094
        %4096 = vrot.lane.b32.xlu0 %v2158, 64
        %v4097 = vpop.permute.xlu0 %4096
        %4098 = vrot.lane.b32.xlu0 %v2159, 64
        %v4099 = vpop.permute.xlu0 %4098
        %4100 = vrot.lane.b32.xlu0 %v2160, 64
        %v4101 = vpop.permute.xlu0 %4100
        %v4102 = vrot.slane %v3998, 1
        %v4103 = vor.u32 %v3995, %v4102
        %4104 = vrot.lane.b32.xlu0 %v2272, 96
        %v4105 = vpop.permute.xlu0 %4104
        %4106 = vrot.lane.b32.xlu0 %v2321, 96
        %v4107 = vpop.permute.xlu0 %4106
        %4108 = vrot.lane.b32.xlu0 %v2889, 96
        %v4109 = vpop.permute.xlu0 %4108
        %4110 = vrot.lane.b32.xlu0 %v2896, 96
        %v4111 = vpop.permute.xlu0 %4110
        %4112 = vrot.lane.b32.xlu0 %v2903, 96
        %v4113 = vpop.permute.xlu0 %4112
        %4114 = vrot.lane.b32.xlu0 %v2910, 96
        %v4115 = vpop.permute.xlu0 %4114
        %4116 = vrot.lane.b32.xlu0 %v2917, 96
        %v4117 = vpop.permute.xlu0 %4116
        %4118 = vrot.lane.b32.xlu0 %v2924, 96
        %v4119 = vpop.permute.xlu0 %4118
        %4120 = vrot.lane.b32.xlu0 %v2931, 96
        %v4121 = vpop.permute.xlu0 %4120
        %4122 = vrot.lane.b32.xlu0 %v3061, 96
        %v4123 = vpop.permute.xlu0 %4122
        %4124 = vrot.lane.b32.xlu0 %v3975, 96
        %v4125 = vpop.permute.xlu0 %4124
        %4126 = vrot.lane.b32.xlu0 %v3977, 96
        %v4127 = vpop.permute.xlu0 %4126
        %4128 = vrot.lane.b32.xlu0 %v3979, 96
        %v4129 = vpop.permute.xlu0 %4128
        %4130 = vrot.lane.b32.xlu0 %v3981, 96
        %v4131 = vpop.permute.xlu0 %4130
        %4132 = vrot.lane.b32.xlu0 %v3983, 96
        %v4133 = vpop.permute.xlu0 %4132
        %4134 = vrot.lane.b32.xlu0 %v3985, 96
        %v4135 = vpop.permute.xlu0 %4134
        %4136 = vrot.lane.b32.xlu0 %v3987, 96
        %v4137 = vpop.permute.xlu0 %4136
        %4138 = vrot.lane.b32.xlu0 %v4103, 96
        %v4139 = vpop.permute.xlu0 %4138
        %4140 = vrot.lane.b32.xlu0 %v2136, 32
        %v4141 = vpop.permute.xlu0 %4140
        %4142 = vrot.lane.b32.xlu0 %v2144, 32
        %v4143 = vpop.permute.xlu0 %4142
        %4144 = vrot.lane.b32.xlu0 %v2152, 32
        %v4145 = vpop.permute.xlu0 %4144
        %4146 = vrot.lane.b32.xlu0 %v2154, 32
        %v4147 = vpop.permute.xlu0 %4146
        %4148 = vrot.lane.b32.xlu0 %v2155, 32
        %v4149 = vpop.permute.xlu0 %4148
        %4150 = vrot.lane.b32.xlu0 %v2156, 32
        %v4151 = vpop.permute.xlu0 %4150
        %4152 = vrot.lane.b32.xlu0 %v2157, 32
        %v4153 = vpop.permute.xlu0 %4152
        %4154 = vrot.lane.b32.xlu0 %v2158, 32
        %v4155 = vpop.permute.xlu0 %4154
        %4156 = vrot.lane.b32.xlu0 %v2159, 32
        %v4157 = vpop.permute.xlu0 %4156
        %4158 = vrot.lane.b32.xlu0 %v2160, 32
        %v4159 = vpop.permute.xlu0 %4158
        %4160 = vrot.lane.b32.xlu0 %v2626, 64
        %v4161 = vpop.permute.xlu0 %4160
        %4162 = vrot.lane.b32.xlu0 %v2633, 64
        %v4163 = vpop.permute.xlu0 %4162
        %4164 = vrot.lane.b32.xlu0 %v3061, 64
        %v4165 = vpop.permute.xlu0 %4164
        %4166 = vrot.lane.b32.xlu0 %v3977, 64
        %v4167 = vpop.permute.xlu0 %4166
        %4168 = vrot.lane.b32.xlu0 %v3979, 64
        %v4169 = vpop.permute.xlu0 %4168
        %4170 = vrot.lane.b32.xlu0 %v3981, 64
        %v4171 = vpop.permute.xlu0 %4170
        %4172 = vrot.lane.b32.xlu0 %v3983, 64
        %v4173 = vpop.permute.xlu0 %4172
        %4174 = vrot.lane.b32.xlu0 %v3985, 64
        %v4175 = vpop.permute.xlu0 %4174
        %4176 = vrot.lane.b32.xlu0 %v3987, 64
        %v4177 = vpop.permute.xlu0 %4176
        %4178 = vrot.lane.b32.xlu0 %v4103, 64
        %v4179 = vpop.permute.xlu0 %4178
        %v4181 = vsel %vm3183, %v3144, %v3894
        %v4183 = vsel %vm3183, %v3146, %v3896
        %v4185 = vsel %vm3183, %v3148, %v3898
        %v4187 = vsel %vm3183, %v3150, %v3900
        %v4189 = vsel %vm3183, %v3152, %v3902
        %v4191 = vsel %vm3183, %v3154, %v3904
        %v4193 = vsel %vm3183, %v3738, %v3906
        %v4195 = vsel %vm3183, %v3126, %v3908
        %v4196 = vsel %vm3183, %v3158, %v3894
        %v4198 = vsel %vm3183, %v3160, %v3910
        %v4200 = vsel %vm3183, %v3162, %v3912
        %v4202 = vsel %vm3183, %v3164, %v3914
        %v4204 = vsel %vm3183, %v3166, %v3916
        %v4206 = vsel %vm3183, %v3168, %v3918
        %v4208 = vsel %vm3183, %v3740, %v3920
        %v4210 = vsel %vm3183, %v3126, %v3922
        %v4211 = vsel %vm3183, %v3172, %v3894
        %v4213 = vsel %vm3183, %v3174, %v3924
        %v4215 = vsel %vm3183, %v3176, %v3926
        %v4217 = vsel %vm3183, %v3178, %v3928
        %v4219 = vsel %vm3183, %v3180, %v3930
        %v4221 = vsel %vm3183, %v3182, %v3932
        %v4223 = vsel %vm3183, %v3742, %v3934
        %v4225 = vsel %vm3183, %v3126, %v3936
        %v4226 = vsel %vm3183, %v3746, %v3894
        %v4228 = vsel %vm3183, %v3748, %v3938
        %v4230 = vsel %vm3183, %v3750, %v3940
        %v4232 = vsel %vm3183, %v3752, %v3942
        %v4234 = vsel %vm3183, %v3754, %v3944
        %v4236 = vsel %vm3183, %v3756, %v3946
        %v4238 = vsel %vm3183, %v3758, %v3948
        %v4240 = vsel %vm3183, %v3126, %v3950
        %v4241 = vsel %vm3242, %v4181, %v3109
        %v4242 = vsel %vm3242, %v4183, %v2575
        %v4243 = vsel %vm3242, %v4185, %v2577
        %v4244 = vsel %vm3242, %v4187, %v2579
        %v4245 = vsel %vm3242, %v4189, %v2581
        %v4246 = vsel %vm3242, %v4191, %v2583
        %v4247 = vsel %vm3242, %v4193, %v2585
        %v4248 = vsel %vm3242, %v4195, %v2587
        %v4249 = vsel %vm3242, %v4196, %v3109
        %v4250 = vsel %vm3242, %v4198, %v2591
        %v4251 = vsel %vm3242, %v4200, %v2593
        %v4252 = vsel %vm3242, %v4202, %v2595
        %v4253 = vsel %vm3242, %v4204, %v2597
        %v4254 = vsel %vm3242, %v4206, %v2599
        %v4255 = vsel %vm3242, %v4208, %v2601
        %v4256 = vsel %vm3242, %v4210, %v2603
        %v4257 = vsel %vm3242, %v4211, %v3109
        %v4259 = vsel %vm3242, %v4213, %v3959
        %v4260 = vsel %vm3242, %v4215, %v3111
        %v4261 = vsel %vm3242, %v4217, %v3113
        %v4262 = vsel %vm3242, %v4219, %v3115
        %v4263 = vsel %vm3242, %v4221, %v3117
        %v4264 = vsel %vm3242, %v4223, %v3119
        %v4265 = vsel %vm3242, %v4225, %v3121
        %v4266 = vsel %vm3242, %v4226, %v3109
        %v4268 = vsel %vm3242, %v4228, %v3961
        %v4270 = vsel %vm3242, %v4230, %v3963
        %v4272 = vsel %vm3242, %v4232, %v3965
        %v4274 = vsel %vm3242, %v4234, %v3967
        %v4276 = vsel %vm3242, %v4236, %v3969
        %v4278 = vsel %vm3242, %v4238, %v3971
        %v4280 = vsel %vm3242, %v4240, %v3973
        %v4283 = vsel %vm3124, %v2167, %v4002
        %v4285 = vsel %vm3124, %v2272, %v4004
        %v4287 = vsel %vm3124, %v2279, %v4006
        %v4289 = vsel %vm3124, %v2286, %v4008
        %v4291 = vsel %vm3124, %v2293, %v4010
        %v4293 = vsel %vm3124, %v2300, %v4012
        %v4295 = vsel %vm3124, %v2307, %v4014
        %v4297 = vsel %vm3124, %v2314, %v4016
        %v4299 = vsel %vm3124, %v2167, %v4018
        %v4301 = vsel %vm3124, %v2321, %v4020
        %v4303 = vsel %vm3124, %v2328, %v4022
        %v4305 = vsel %vm3124, %v2335, %v4024
        %v4307 = vsel %vm3124, %v2342, %v4026
        %v4309 = vsel %vm3124, %v2349, %v4028
        %v4311 = vsel %vm3124, %v2356, %v4030
        %v4313 = vsel %vm3124, %v2363, %v4032
        %v4315 = vsel %vm3124, %v2167, %v4034
        %v4318 = vsel %vm3124, %v2889, %v4036
        %v4321 = vsel %vm3124, %v2896, %v4038
        %v4324 = vsel %vm3124, %v2903, %v4040
        %v4327 = vsel %vm3124, %v2910, %v4042
        %v4330 = vsel %vm3124, %v2917, %v4044
        %v4333 = vsel %vm3124, %v2924, %v4046
        %v4336 = vsel %vm3124, %v2931, %v4048
        %v4338 = vsel %vm3124, %v2167, %v4050
        %v4341 = vsel %vm3124, %v3975, %v4052
        %v4344 = vsel %vm3124, %v3977, %v4054
        %v4347 = vsel %vm3124, %v3979, %v4056
        %v4350 = vsel %vm3124, %v3981, %v4058
        %v4353 = vsel %vm3124, %v3983, %v4060
        %v4356 = vsel %vm3124, %v3985, %v4062
        %v4359 = vsel %vm3124, %v3987, %v4064
        %v4361 = vsel %vm3183, %v4283, %v4067
        %v4362 = vsel %vm3183, %v4285, %v2733
        %v4363 = vsel %vm3183, %v4287, %v2735
        %v4364 = vsel %vm3183, %v4289, %v2737
        %v4365 = vsel %vm3183, %v4291, %v2739
        %v4366 = vsel %vm3183, %v4293, %v2741
        %v4367 = vsel %vm3183, %v4295, %v2743
        %v4368 = vsel %vm3183, %v4297, %v2745
        %v4370 = vsel %vm3183, %v4299, %v4069
        %v4371 = vsel %vm3183, %v4301, %v2747
        %v4372 = vsel %vm3183, %v4303, %v2749
        %v4373 = vsel %vm3183, %v4305, %v2751
        %v4374 = vsel %vm3183, %v4307, %v2753
        %v4375 = vsel %vm3183, %v4309, %v2755
        %v4376 = vsel %vm3183, %v4311, %v2757
        %v4377 = vsel %vm3183, %v4313, %v2759
        %v4379 = vsel %vm3183, %v4315, %v4071
        %v4381 = vsel %vm3183, %v4318, %v4073
        %v4383 = vsel %vm3183, %v4321, %v4075
        %v4385 = vsel %vm3183, %v4324, %v4077
        %v4387 = vsel %vm3183, %v4327, %v4079
        %v4389 = vsel %vm3183, %v4330, %v4081
        %v4391 = vsel %vm3183, %v4333, %v4083
        %v4393 = vsel %vm3183, %v4336, %v4085
        %v4395 = vsel %vm3183, %v4338, %v4087
        %v4397 = vsel %vm3183, %v4341, %v4089
        %v4399 = vsel %vm3183, %v4344, %v4091
        %v4401 = vsel %vm3183, %v4347, %v4093
        %v4403 = vsel %vm3183, %v4350, %v4095
        %v4405 = vsel %vm3183, %v4353, %v4097
        %v4407 = vsel %vm3183, %v4356, %v4099
        %v4409 = vsel %vm3183, %v4359, %v4101
        %v4411 = vsel %vm3242, %v4361, %v4105
        %v4412 = vsel %vm3242, %v4362, %v2791
        %v4413 = vsel %vm3242, %v4363, %v2793
        %v4414 = vsel %vm3242, %v4364, %v2795
        %v4415 = vsel %vm3242, %v4365, %v2797
        %v4416 = vsel %vm3242, %v4366, %v2799
        %v4417 = vsel %vm3242, %v4367, %v2801
        %v4418 = vsel %vm3242, %v4368, %v2803
        %v4420 = vsel %vm3242, %v4370, %v4107
        %v4421 = vsel %vm3242, %v4371, %v2805
        %v4422 = vsel %vm3242, %v4372, %v2807
        %v4423 = vsel %vm3242, %v4373, %v2809
        %v4424 = vsel %vm3242, %v4374, %v2811
        %v4425 = vsel %vm3242, %v4375, %v2813
        %v4426 = vsel %vm3242, %v4376, %v2815
        %v4427 = vsel %vm3242, %v4377, %v2817
        %v4429 = vsel %vm3242, %v4379, %v4109
        %v4431 = vsel %vm3242, %v4381, %v4111
        %v4433 = vsel %vm3242, %v4383, %v4113
        %v4435 = vsel %vm3242, %v4385, %v4115
        %v4437 = vsel %vm3242, %v4387, %v4117
        %v4439 = vsel %vm3242, %v4389, %v4119
        %v4441 = vsel %vm3242, %v4391, %v4121
        %v4443 = vsel %vm3242, %v4393, %v4123
        %v4445 = vsel %vm3242, %v4395, %v4125
        %v4447 = vsel %vm3242, %v4397, %v4127
        %v4449 = vsel %vm3242, %v4399, %v4129
        %v4451 = vsel %vm3242, %v4401, %v4131
        %v4453 = vsel %vm3242, %v4403, %v4133
        %v4455 = vsel %vm3242, %v4405, %v4135
        %v4457 = vsel %vm3242, %v4407, %v4137
        %v4459 = vsel %vm3242, %v4409, %v4139
        %v4461 = vsel %vm3124, %v3805, %v2844
        %v4463 = vsel %vm3124, %v3807, %v2846
        %v4465 = vsel %vm3124, %v3809, %v2848
        %v4467 = vsel %vm3124, %v3811, %v2850
        %v4469 = vsel %vm3124, %v3813, %v2852
        %v4471 = vsel %vm3124, %v3815, %v2854
        %v4474 = vsel %vm3124, %v3989, %v4141
        %v4476 = vsel %vm3124, %v3801, %v2826
        %v4478 = vsel %vm3124, %v3819, %v2858
        %v4480 = vsel %vm3124, %v3821, %v2860
        %v4482 = vsel %vm3124, %v3823, %v2862
        %v4484 = vsel %vm3124, %v3825, %v2864
        %v4486 = vsel %vm3124, %v3827, %v2866
        %v4488 = vsel %vm3124, %v3829, %v2868
        %v4491 = vsel %vm3124, %v3991, %v4143
        %v4493 = vsel %vm3124, %v3833, %v2872
        %v4495 = vsel %vm3124, %v3835, %v2874
        %v4497 = vsel %vm3124, %v3837, %v2876
        %v4499 = vsel %vm3124, %v3839, %v2878
        %v4501 = vsel %vm3124, %v3841, %v2880
        %v4503 = vsel %vm3124, %v3843, %v2882
        %v4506 = vsel %vm3124, %v3993, %v4145
        %v4509 = vsel %vm3124, %v3857, %v4147
        %v4512 = vsel %vm3124, %v3864, %v4149
        %v4515 = vsel %vm3124, %v3871, %v4151
        %v4518 = vsel %vm3124, %v3878, %v4153
        %v4521 = vsel %vm3124, %v3885, %v4155
        %v4524 = vsel %vm3124, %v3892, %v4157
        %v4527 = vsel %vm3124, %v4000, %v4159
        %v4528 = vsel %vm3183, %v4461, %v2951
        %v4529 = vsel %vm3183, %v4463, %v2953
        %v4530 = vsel %vm3183, %v4465, %v2955
        %v4531 = vsel %vm3183, %v4467, %v2957
        %v4532 = vsel %vm3183, %v4469, %v2959
        %v4533 = vsel %vm3183, %v4471, %v2961
        %v4535 = vsel %vm3183, %v4474, %v4161
        %v4536 = vsel %vm3183, %v4476, %v2933
        %v4537 = vsel %vm3183, %v4478, %v2965
        %v4538 = vsel %vm3183, %v4480, %v2967
        %v4539 = vsel %vm3183, %v4482, %v2969
        %v4540 = vsel %vm3183, %v4484, %v2971
        %v4541 = vsel %vm3183, %v4486, %v2973
        %v4542 = vsel %vm3183, %v4488, %v2975
        %v4544 = vsel %vm3183, %v4491, %v4163
        %v4545 = vsel %vm3183, %v4493, %v2979
        %v4546 = vsel %vm3183, %v4495, %v2981
        %v4547 = vsel %vm3183, %v4497, %v2983
        %v4548 = vsel %vm3183, %v4499, %v2985
        %v4549 = vsel %vm3183, %v4501, %v2987
        %v4550 = vsel %vm3183, %v4503, %v2989
        %v4552 = vsel %vm3183, %v4506, %v4165
        %v4554 = vsel %vm3183, %v4509, %v4167
        %v4556 = vsel %vm3183, %v4512, %v4169
        %v4558 = vsel %vm3183, %v4515, %v4171
        %v4560 = vsel %vm3183, %v4518, %v4173
        %v4562 = vsel %vm3183, %v4521, %v4175
        %v4564 = vsel %vm3183, %v4524, %v4177
        %v4566 = vsel %vm3183, %v4527, %v4179
        %v4567 = vshrl.u32 %v4241, 16
        %v4569 = vshll.u32 %v4241, 16
        %v4571 = vrot.slane %v4569, 1
        %v4572 = vor.u32 %v4567, %v4571
        %v4573 = vshrl.u32 %v4411, 16
        %v4575 = vshll.u32 %v4411, 16
        %v4577 = vrot.slane %v4575, 1
        %v4578 = vor.u32 %v4573, %v4577
        %v4579 = vshrl.u32 %v4528, 16
        %v4581 = vshll.u32 %v4528, 16
        %v4583 = vrot.slane %v4581, 1
        %v4584 = vor.u32 %v4579, %v4583
        %v4585 = vshrl.u32 %v4242, 16
        %v4587 = vshll.u32 %v4242, 16
        %v4589 = vrot.slane %v4587, 1
        %v4590 = vor.u32 %v4585, %v4589
        %v4591 = vshrl.u32 %v4412, 16
        %v4593 = vshll.u32 %v4412, 16
        %v4595 = vrot.slane %v4593, 1
        %v4596 = vor.u32 %v4591, %v4595
        %v4597 = vshrl.u32 %v4529, 16
        %v4599 = vshll.u32 %v4529, 16
        %v4601 = vrot.slane %v4599, 1
        %v4602 = vor.u32 %v4597, %v4601
        %v4603 = vshrl.u32 %v4243, 16
        %v4605 = vshll.u32 %v4243, 16
        %v4607 = vrot.slane %v4605, 1
        %v4608 = vor.u32 %v4603, %v4607
        %v4609 = vshrl.u32 %v4413, 16
        %v4611 = vshll.u32 %v4413, 16
        %v4613 = vrot.slane %v4611, 1
        %v4614 = vor.u32 %v4609, %v4613
        %v4615 = vshrl.u32 %v4530, 16
        %v4617 = vshll.u32 %v4530, 16
        %v4619 = vrot.slane %v4617, 1
        %v4620 = vor.u32 %v4615, %v4619
        %v4621 = vshrl.u32 %v4244, 16
        %v4623 = vshll.u32 %v4244, 16
        %v4625 = vrot.slane %v4623, 1
        %v4626 = vor.u32 %v4621, %v4625
        %v4627 = vshrl.u32 %v4414, 16
        %v4629 = vshll.u32 %v4414, 16
        %v4631 = vrot.slane %v4629, 1
        %v4632 = vor.u32 %v4627, %v4631
        %v4633 = vshrl.u32 %v4531, 16
        %v4635 = vshll.u32 %v4531, 16
        %v4637 = vrot.slane %v4635, 1
        %v4638 = vor.u32 %v4633, %v4637
        %v4639 = vshrl.u32 %v4245, 16
        %v4641 = vshll.u32 %v4245, 16
        %v4643 = vrot.slane %v4641, 1
        %v4644 = vor.u32 %v4639, %v4643
        %v4645 = vshrl.u32 %v4415, 16
        %v4647 = vshll.u32 %v4415, 16
        %v4649 = vrot.slane %v4647, 1
        %v4650 = vor.u32 %v4645, %v4649
        %v4651 = vshrl.u32 %v4532, 16
        %v4653 = vshll.u32 %v4532, 16
        %v4655 = vrot.slane %v4653, 1
        %v4656 = vor.u32 %v4651, %v4655
        %v4657 = vshrl.u32 %v4246, 16
        %v4659 = vshll.u32 %v4246, 16
        %v4661 = vrot.slane %v4659, 1
        %v4662 = vor.u32 %v4657, %v4661
        %v4663 = vshrl.u32 %v4416, 16
        %v4665 = vshll.u32 %v4416, 16
        %v4667 = vrot.slane %v4665, 1
        %v4668 = vor.u32 %v4663, %v4667
        %v4669 = vshrl.u32 %v4533, 16
        %v4671 = vshll.u32 %v4533, 16
        %v4673 = vrot.slane %v4671, 1
        %v4674 = vor.u32 %v4669, %v4673
        %v4675 = vshrl.u32 %v4247, 16
        %v4677 = vshll.u32 %v4247, 16
        %v4679 = vrot.slane %v4677, 1
        %v4680 = vor.u32 %v4675, %v4679
        %v4681 = vshrl.u32 %v4417, 16
        %v4683 = vshll.u32 %v4417, 16
        %v4685 = vrot.slane %v4683, 1
        %v4686 = vor.u32 %v4681, %v4685
        %v4687 = vshrl.u32 %v4535, 16
        %v4689 = vshll.u32 %v4535, 16
        %v4691 = vrot.slane %v4689, 1
        %v4692 = vor.u32 %v4687, %v4691
        %v4693 = vshrl.u32 %v4248, 16
        %v4695 = vshll.u32 %v4248, 16
        %v4697 = vrot.slane %v4695, 1
        %v4698 = vor.u32 %v4693, %v4697
        %v4699 = vshrl.u32 %v4418, 16
        %v4701 = vshll.u32 %v4418, 16
        %v4703 = vrot.slane %v4701, 1
        %v4704 = vor.u32 %v4699, %v4703
        %v4705 = vshrl.u32 %v4536, 16
        %v4707 = vshll.u32 %v4536, 16
        %v4709 = vrot.slane %v4707, 1
        %v4710 = vor.u32 %v4705, %v4709
        %v4711 = vshrl.u32 %v4249, 16
        %v4713 = vshll.u32 %v4249, 16
        %v4715 = vrot.slane %v4713, 1
        %v4716 = vor.u32 %v4711, %v4715
        %v4717 = vshrl.u32 %v4420, 16
        %v4719 = vshll.u32 %v4420, 16
        %v4721 = vrot.slane %v4719, 1
        %v4722 = vor.u32 %v4717, %v4721
        %v4723 = vshrl.u32 %v4537, 16
        %v4725 = vshll.u32 %v4537, 16
        %v4727 = vrot.slane %v4725, 1
        %v4728 = vor.u32 %v4723, %v4727
        %v4729 = vshrl.u32 %v4250, 16
        %v4731 = vshll.u32 %v4250, 16
        %v4733 = vrot.slane %v4731, 1
        %v4734 = vor.u32 %v4729, %v4733
        %v4735 = vshrl.u32 %v4421, 16
        %v4737 = vshll.u32 %v4421, 16
        %v4739 = vrot.slane %v4737, 1
        %v4740 = vor.u32 %v4735, %v4739
        %v4741 = vshrl.u32 %v4538, 16
        %v4743 = vshll.u32 %v4538, 16
        %v4745 = vrot.slane %v4743, 1
        %v4746 = vor.u32 %v4741, %v4745
        %v4747 = vshrl.u32 %v4251, 16
        %v4749 = vshll.u32 %v4251, 16
        %v4751 = vrot.slane %v4749, 1
        %v4752 = vor.u32 %v4747, %v4751
        %v4753 = vshrl.u32 %v4422, 16
        %v4755 = vshll.u32 %v4422, 16
        %v4757 = vrot.slane %v4755, 1
        %v4758 = vor.u32 %v4753, %v4757
        %v4759 = vshrl.u32 %v4539, 16
        %v4761 = vshll.u32 %v4539, 16
        %v4763 = vrot.slane %v4761, 1
        %v4764 = vor.u32 %v4759, %v4763
        %v4765 = vshrl.u32 %v4252, 16
        %v4767 = vshll.u32 %v4252, 16
        %v4769 = vrot.slane %v4767, 1
        %v4770 = vor.u32 %v4765, %v4769
        %v4771 = vshrl.u32 %v4423, 16
        %v4773 = vshll.u32 %v4423, 16
        %v4775 = vrot.slane %v4773, 1
        %v4776 = vor.u32 %v4771, %v4775
        %v4777 = vshrl.u32 %v4540, 16
        %v4779 = vshll.u32 %v4540, 16
        %v4781 = vrot.slane %v4779, 1
        %v4782 = vor.u32 %v4777, %v4781
        %v4783 = vshrl.u32 %v4253, 16
        %v4785 = vshll.u32 %v4253, 16
        %v4787 = vrot.slane %v4785, 1
        %v4788 = vor.u32 %v4783, %v4787
        %v4789 = vshrl.u32 %v4424, 16
        %v4791 = vshll.u32 %v4424, 16
        %v4793 = vrot.slane %v4791, 1
        %v4794 = vor.u32 %v4789, %v4793
        %v4795 = vshrl.u32 %v4541, 16
        %v4797 = vshll.u32 %v4541, 16
        %v4799 = vrot.slane %v4797, 1
        %v4800 = vor.u32 %v4795, %v4799
        %v4801 = vshrl.u32 %v4254, 16
        %v4803 = vshll.u32 %v4254, 16
        %v4805 = vrot.slane %v4803, 1
        %v4806 = vor.u32 %v4801, %v4805
        %v4807 = vshrl.u32 %v4425, 16
        %v4809 = vshll.u32 %v4425, 16
        %v4811 = vrot.slane %v4809, 1
        %v4812 = vor.u32 %v4807, %v4811
        %v4813 = vshrl.u32 %v4542, 16
        %v4815 = vshll.u32 %v4542, 16
        %v4817 = vrot.slane %v4815, 1
        %v4818 = vor.u32 %v4813, %v4817
        %v4819 = vshrl.u32 %v4255, 16
        %v4821 = vshll.u32 %v4255, 16
        %v4823 = vrot.slane %v4821, 1
        %v4824 = vor.u32 %v4819, %v4823
        %v4825 = vshrl.u32 %v4426, 16
        %v4827 = vshll.u32 %v4426, 16
        %v4829 = vrot.slane %v4827, 1
        %v4830 = vor.u32 %v4825, %v4829
        %v4831 = vshrl.u32 %v4544, 16
        %v4833 = vshll.u32 %v4544, 16
        %v4835 = vrot.slane %v4833, 1
        %v4836 = vor.u32 %v4831, %v4835
        %v4837 = vshrl.u32 %v4256, 16
        %v4839 = vshll.u32 %v4256, 16
        %v4841 = vrot.slane %v4839, 1
        %v4842 = vor.u32 %v4837, %v4841
        %v4843 = vshrl.u32 %v4427, 16
        %v4845 = vshll.u32 %v4427, 16
        %v4847 = vrot.slane %v4845, 1
        %v4848 = vor.u32 %v4843, %v4847
        %v4849 = vshrl.u32 %v4257, 16
        %v4851 = vshll.u32 %v4257, 16
        %v4853 = vrot.slane %v4851, 1
        %v4854 = vor.u32 %v4849, %v4853
        %v4855 = vshrl.u32 %v4429, 16
        %v4857 = vshll.u32 %v4429, 16
        %v4859 = vrot.slane %v4857, 1
        %v4860 = vor.u32 %v4855, %v4859
        %v4861 = vshrl.u32 %v4545, 16
        %v4863 = vshll.u32 %v4545, 16
        %v4865 = vrot.slane %v4863, 1
        %v4866 = vor.u32 %v4861, %v4865
        %v4867 = vshrl.u32 %v4259, 16
        %v4869 = vshll.u32 %v4259, 16
        %v4871 = vrot.slane %v4869, 1
        %v4872 = vor.u32 %v4867, %v4871
        %v4873 = vshrl.u32 %v4431, 16
        %v4875 = vshll.u32 %v4431, 16
        %v4877 = vrot.slane %v4875, 1
        %v4878 = vor.u32 %v4873, %v4877
        %v4879 = vshrl.u32 %v4546, 16
        %v4881 = vshll.u32 %v4546, 16
        %v4883 = vrot.slane %v4881, 1
        %v4884 = vor.u32 %v4879, %v4883
        %v4885 = vshrl.u32 %v4260, 16
        %v4887 = vshll.u32 %v4260, 16
        %v4889 = vrot.slane %v4887, 1
        %v4890 = vor.u32 %v4885, %v4889
        %v4891 = vshrl.u32 %v4433, 16
        %v4893 = vshll.u32 %v4433, 16
        %v4895 = vrot.slane %v4893, 1
        %v4896 = vor.u32 %v4891, %v4895
        %v4897 = vshrl.u32 %v4547, 16
        %v4899 = vshll.u32 %v4547, 16
        %v4901 = vrot.slane %v4899, 1
        %v4902 = vor.u32 %v4897, %v4901
        %v4903 = vshrl.u32 %v4261, 16
        %v4905 = vshll.u32 %v4261, 16
        %v4907 = vrot.slane %v4905, 1
        %v4908 = vor.u32 %v4903, %v4907
        %v4909 = vshrl.u32 %v4435, 16
        %v4911 = vshll.u32 %v4435, 16
        %v4913 = vrot.slane %v4911, 1
        %v4914 = vor.u32 %v4909, %v4913
        %v4915 = vshrl.u32 %v4548, 16
        %v4917 = vshll.u32 %v4548, 16
        %v4919 = vrot.slane %v4917, 1
        %v4920 = vor.u32 %v4915, %v4919
        %v4921 = vshrl.u32 %v4262, 16
        %v4923 = vshll.u32 %v4262, 16
        %v4925 = vrot.slane %v4923, 1
        %v4926 = vor.u32 %v4921, %v4925
        %v4927 = vshrl.u32 %v4437, 16
        %v4929 = vshll.u32 %v4437, 16
        %v4931 = vrot.slane %v4929, 1
        %v4932 = vor.u32 %v4927, %v4931
        %v4933 = vshrl.u32 %v4549, 16
        %v4935 = vshll.u32 %v4549, 16
        %v4937 = vrot.slane %v4935, 1
        %v4938 = vor.u32 %v4933, %v4937
        %v4939 = vshrl.u32 %v4263, 16
        %v4941 = vshll.u32 %v4263, 16
        %v4943 = vrot.slane %v4941, 1
        %v4944 = vor.u32 %v4939, %v4943
        %v4945 = vshrl.u32 %v4439, 16
        %v4947 = vshll.u32 %v4439, 16
        %v4949 = vrot.slane %v4947, 1
        %v4950 = vor.u32 %v4945, %v4949
        %v4951 = vshrl.u32 %v4550, 16
        %v4953 = vshll.u32 %v4550, 16
        %v4955 = vrot.slane %v4953, 1
        %v4956 = vor.u32 %v4951, %v4955
        %v4957 = vshrl.u32 %v4264, 16
        %v4959 = vshll.u32 %v4264, 16
        %v4961 = vrot.slane %v4959, 1
        %v4962 = vor.u32 %v4957, %v4961
        %v4963 = vshrl.u32 %v4441, 16
        %v4965 = vshll.u32 %v4441, 16
        %v4967 = vrot.slane %v4965, 1
        %v4968 = vor.u32 %v4963, %v4967
        %v4969 = vshrl.u32 %v4552, 16
        %v4971 = vshll.u32 %v4552, 16
        %v4973 = vrot.slane %v4971, 1
        %v4974 = vor.u32 %v4969, %v4973
        %v4975 = vshrl.u32 %v4265, 16
        %v4977 = vshll.u32 %v4265, 16
        %v4979 = vrot.slane %v4977, 1
        %v4980 = vor.u32 %v4975, %v4979
        %v4981 = vshrl.u32 %v4443, 16
        %v4983 = vshll.u32 %v4443, 16
        %v4985 = vrot.slane %v4983, 1
        %v4986 = vor.u32 %v4981, %v4985
        %v4987 = vshrl.u32 %v4266, 16
        %v4989 = vshll.u32 %v4266, 16
        %v4991 = vrot.slane %v4989, 1
        %v4992 = vor.u32 %v4987, %v4991
        %v4993 = vshrl.u32 %v4445, 16
        %v4995 = vshll.u32 %v4445, 16
        %v4997 = vrot.slane %v4995, 1
        %v4998 = vor.u32 %v4993, %v4997
        %v4999 = vshrl.u32 %v4554, 16
        %v5001 = vshll.u32 %v4554, 16
        %v5003 = vrot.slane %v5001, 1
        %v5004 = vor.u32 %v4999, %v5003
        %v5005 = vshrl.u32 %v4268, 16
        %v5007 = vshll.u32 %v4268, 16
        %v5009 = vrot.slane %v5007, 1
        %v5010 = vor.u32 %v5005, %v5009
        %v5011 = vshrl.u32 %v4447, 16
        %v5013 = vshll.u32 %v4447, 16
        %v5015 = vrot.slane %v5013, 1
        %v5016 = vor.u32 %v5011, %v5015
        %v5017 = vshrl.u32 %v4556, 16
        %v5019 = vshll.u32 %v4556, 16
        %v5021 = vrot.slane %v5019, 1
        %v5022 = vor.u32 %v5017, %v5021
        %v5023 = vshrl.u32 %v4270, 16
        %v5025 = vshll.u32 %v4270, 16
        %v5027 = vrot.slane %v5025, 1
        %v5028 = vor.u32 %v5023, %v5027
        %v5029 = vshrl.u32 %v4449, 16
        %v5031 = vshll.u32 %v4449, 16
        %v5033 = vrot.slane %v5031, 1
        %v5034 = vor.u32 %v5029, %v5033
        %v5035 = vshrl.u32 %v4558, 16
        %v5037 = vshll.u32 %v4558, 16
        %v5039 = vrot.slane %v5037, 1
        %v5040 = vor.u32 %v5035, %v5039
        %v5041 = vshrl.u32 %v4272, 16
        %v5043 = vshll.u32 %v4272, 16
        %v5045 = vrot.slane %v5043, 1
        %v5046 = vor.u32 %v5041, %v5045
        %v5047 = vshrl.u32 %v4451, 16
        %v5049 = vshll.u32 %v4451, 16
        %v5051 = vrot.slane %v5049, 1
        %v5052 = vor.u32 %v5047, %v5051
        %v5053 = vshrl.u32 %v4560, 16
        %v5055 = vshll.u32 %v4560, 16
        %v5057 = vrot.slane %v5055, 1
        %v5058 = vor.u32 %v5053, %v5057
        %v5059 = vshrl.u32 %v4274, 16
        %v5061 = vshll.u32 %v4274, 16
        %v5063 = vrot.slane %v5061, 1
        %v5064 = vor.u32 %v5059, %v5063
        %v5065 = vshrl.u32 %v4453, 16
        %v5067 = vshll.u32 %v4453, 16
        %v5069 = vrot.slane %v5067, 1
        %v5070 = vor.u32 %v5065, %v5069
        %v5071 = vshrl.u32 %v4562, 16
        %v5073 = vshll.u32 %v4562, 16
        %v5075 = vrot.slane %v5073, 1
        %v5076 = vor.u32 %v5071, %v5075
        %v5077 = vshrl.u32 %v4276, 16
        %v5079 = vshll.u32 %v4276, 16
        %v5081 = vrot.slane %v5079, 1
        %v5082 = vor.u32 %v5077, %v5081
        %v5083 = vshrl.u32 %v4455, 16
        %v5085 = vshll.u32 %v4455, 16
        %v5087 = vrot.slane %v5085, 1
        %v5088 = vor.u32 %v5083, %v5087
        %v5089 = vshrl.u32 %v4564, 16
        %v5091 = vshll.u32 %v4564, 16
        %v5093 = vrot.slane %v5091, 1
        %v5094 = vor.u32 %v5089, %v5093
        %v5095 = vshrl.u32 %v4278, 16
        %v5097 = vshll.u32 %v4278, 16
        %v5099 = vrot.slane %v5097, 1
        %v5100 = vor.u32 %v5095, %v5099
        %v5101 = vshrl.u32 %v4457, 16
        %v5103 = vshll.u32 %v4457, 16
        %v5105 = vrot.slane %v5103, 1
        %v5106 = vor.u32 %v5101, %v5105
        %v5107 = vshrl.u32 %v4566, 16
        %v5109 = vshll.u32 %v4566, 16
        %v5111 = vrot.slane %v5109, 1
        %v5112 = vor.u32 %v5107, %v5111
        %v5113 = vshrl.u32 %v4280, 16
        %v5115 = vshll.u32 %v4280, 16
        %v5117 = vrot.slane %v5115, 1
        %v5118 = vor.u32 %v5113, %v5117
        %v5119 = vshrl.u32 %v4459, 16
        %v5121 = vshll.u32 %v4459, 16
        %v5123 = vrot.slane %v5121, 1
        %v5124 = vor.u32 %v5119, %v5123
        %v5232 = vunpack.c.l.b16 %v3244
        %v5233 = vunpack.c.l.b16 %v3465
        %v5234 = vunpack.c.l.b16 %v3677
        %v5235 = vunpack.c.l.b16 %v3262
        %v5236 = vunpack.c.l.b16 %v4572
        %v5237 = vunpack.c.l.b16 %v4578
        %v5238 = vunpack.c.l.b16 %v4584
        %v5239 = vunpack.c.l.b16 %v3246
        %v5240 = vunpack.c.l.b16 %v3467
        %v5241 = vunpack.c.l.b16 %v3679
        %v5242 = vunpack.c.l.b16 %v3264
        %v5243 = vunpack.c.l.b16 %v4590
        %v5244 = vunpack.c.l.b16 %v4596
        %v5245 = vunpack.c.l.b16 %v4602
        %v5246 = vunpack.c.l.b16 %v3248
        %v5247 = vunpack.c.l.b16 %v3469
        %v5248 = vunpack.c.l.b16 %v3681
        %v5249 = vunpack.c.l.b16 %v3266
        %v5250 = vunpack.c.l.b16 %v4608
        %v5251 = vunpack.c.l.b16 %v4614
        %v5252 = vunpack.c.l.b16 %v4620
        %v5253 = vunpack.c.l.b16 %v3250
        %v5254 = vunpack.c.l.b16 %v3471
        %v5255 = vunpack.c.l.b16 %v3683
        %v5256 = vunpack.c.l.b16 %v3268
        %v5257 = vunpack.c.l.b16 %v4626
        %v5258 = vunpack.c.l.b16 %v4632
        %v5259 = vunpack.c.l.b16 %v4638
        %v5260 = vunpack.c.l.b16 %v3252
        %v5261 = vunpack.c.l.b16 %v3473
        %v5262 = vunpack.c.l.b16 %v3685
        %v5263 = vunpack.c.l.b16 %v3270
        %v5264 = vunpack.c.l.b16 %v4644
        %v5265 = vunpack.c.l.b16 %v4650
        %v5266 = vunpack.c.l.b16 %v4656
        %v5267 = vunpack.c.l.b16 %v3254
        %v5268 = vunpack.c.l.b16 %v3475
        %v5269 = vunpack.c.l.b16 %v3687
        %v5270 = vunpack.c.l.b16 %v3272
        %v5271 = vunpack.c.l.b16 %v4662
        %v5272 = vunpack.c.l.b16 %v4668
        %v5273 = vunpack.c.l.b16 %v4674
        %v5274 = vunpack.c.l.b16 %v3256
        %v5275 = vunpack.c.l.b16 %v3477
        %v5276 = vunpack.c.l.b16 %v3689
        %v5277 = vunpack.c.l.b16 %v3274
        %v5278 = vunpack.c.l.b16 %v4680
        %v5279 = vunpack.c.l.b16 %v4686
        %v5280 = vunpack.c.l.b16 %v4692
        %v5281 = vunpack.c.l.b16 %v3258
        %v5282 = vunpack.c.l.b16 %v3479
        %v5283 = vunpack.c.l.b16 %v3691
        %v5284 = vunpack.c.l.b16 %v3782
        %v5285 = vunpack.c.l.b16 %v4698
        %v5286 = vunpack.c.l.b16 %v4704
        %v5287 = vunpack.c.l.b16 %v4710
        %v5288 = vunpack.c.l.b16 %v3260
        %v5289 = vunpack.c.l.b16 %v3481
        %v5290 = vunpack.c.l.b16 %v3692
        %v5291 = vunpack.c.l.b16 %v3278
        %v5292 = vunpack.c.l.b16 %v4716
        %v5293 = vunpack.c.l.b16 %v4722
        %v5294 = vunpack.c.l.b16 %v4728
        %v5295 = vunpack.c.l.b16 %v3483
        %v5296 = vunpack.c.l.b16 %v3694
        %v5297 = vunpack.c.l.b16 %v3280
        %v5298 = vunpack.c.l.b16 %v4734
        %v5299 = vunpack.c.l.b16 %v4740
        %v5300 = vunpack.c.l.b16 %v4746
        %v5301 = vunpack.c.l.b16 %v3485
        %v5302 = vunpack.c.l.b16 %v3696
        %v5303 = vunpack.c.l.b16 %v3282
        %v5304 = vunpack.c.l.b16 %v4752
        %v5305 = vunpack.c.l.b16 %v4758
        %v5306 = vunpack.c.l.b16 %v4764
        %v5307 = vunpack.c.l.b16 %v3487
        %v5308 = vunpack.c.l.b16 %v3698
        %v5309 = vunpack.c.l.b16 %v3284
        %v5310 = vunpack.c.l.b16 %v4770
        %v5311 = vunpack.c.l.b16 %v4776
        %v5312 = vunpack.c.l.b16 %v4782
        %v5313 = vunpack.c.l.b16 %v3489
        %v5314 = vunpack.c.l.b16 %v3700
        %v5315 = vunpack.c.l.b16 %v3286
        %v5316 = vunpack.c.l.b16 %v4788
        %v5317 = vunpack.c.l.b16 %v4794
        %v5318 = vunpack.c.l.b16 %v4800
        %v5319 = vunpack.c.l.b16 %v3491
        %v5320 = vunpack.c.l.b16 %v3702
        %v5321 = vunpack.c.l.b16 %v3288
        %v5322 = vunpack.c.l.b16 %v4806
        %v5323 = vunpack.c.l.b16 %v4812
        %v5324 = vunpack.c.l.b16 %v4818
        %v5325 = vunpack.c.l.b16 %v3493
        %v5326 = vunpack.c.l.b16 %v3704
        %v5327 = vunpack.c.l.b16 %v3290
        %v5328 = vunpack.c.l.b16 %v4824
        %v5329 = vunpack.c.l.b16 %v4830
        %v5330 = vunpack.c.l.b16 %v4836
        %v5331 = vunpack.c.l.b16 %v3494
        %v5332 = vunpack.c.l.b16 %v3706
        %v5333 = vunpack.c.l.b16 %v3783
        %v5334 = vunpack.c.l.b16 %v4842
        %v5335 = vunpack.c.l.b16 %v4848
        %v5336 = vunpack.c.l.b16 %v3276
        %v5337 = vunpack.c.l.b16 %v3496
        %v5338 = vunpack.c.l.b16 %v3707
        %v5339 = vunpack.c.l.b16 %v3294
        %v5340 = vunpack.c.l.b16 %v4854
        %v5341 = vunpack.c.l.b16 %v4860
        %v5342 = vunpack.c.l.b16 %v4866
        %v5343 = vunpack.c.l.b16 %v3498
        %v5344 = vunpack.c.l.b16 %v3709
        %v5345 = vunpack.c.l.b16 %v3296
        %v5346 = vunpack.c.l.b16 %v4872
        %v5347 = vunpack.c.l.b16 %v4878
        %v5348 = vunpack.c.l.b16 %v4884
        %v5349 = vunpack.c.l.b16 %v3500
        %v5350 = vunpack.c.l.b16 %v3711
        %v5351 = vunpack.c.l.b16 %v3298
        %v5352 = vunpack.c.l.b16 %v4890
        %v5353 = vunpack.c.l.b16 %v4896
        %v5354 = vunpack.c.l.b16 %v4902
        %v5355 = vunpack.c.l.b16 %v3502
        %v5356 = vunpack.c.l.b16 %v3713
        %v5357 = vunpack.c.l.b16 %v3300
        %v5358 = vunpack.c.l.b16 %v4908
        %v5359 = vunpack.c.l.b16 %v4914
        %v5360 = vunpack.c.l.b16 %v4920
        %v5361 = vunpack.c.l.b16 %v3504
        %v5362 = vunpack.c.l.b16 %v3715
        %v5363 = vunpack.c.l.b16 %v3302
        %v5364 = vunpack.c.l.b16 %v4926
        %v5365 = vunpack.c.l.b16 %v4932
        %v5366 = vunpack.c.l.b16 %v4938
        %v5367 = vunpack.c.l.b16 %v3506
        %v5368 = vunpack.c.l.b16 %v3717
        %v5369 = vunpack.c.l.b16 %v3304
        %v5370 = vunpack.c.l.b16 %v4944
        %v5371 = vunpack.c.l.b16 %v4950
        %v5372 = vunpack.c.l.b16 %v4956
        %v5373 = vunpack.c.l.b16 %v3508
        %v5374 = vunpack.c.l.b16 %v3719
        %v5375 = vunpack.c.l.b16 %v3306
        %v5376 = vunpack.c.l.b16 %v4962
        %v5377 = vunpack.c.l.b16 %v4968
        %v5378 = vunpack.c.l.b16 %v4974
        %v5379 = vunpack.c.l.b16 %v3509
        %v5380 = vunpack.c.l.b16 %v3721
        %v5381 = vunpack.c.l.b16 %v3784
        %v5382 = vunpack.c.l.b16 %v4980
        %v5383 = vunpack.c.l.b16 %v4986
        %v5384 = vunpack.c.l.b16 %v3292
        %v5385 = vunpack.c.l.b16 %v3511
        %v5386 = vunpack.c.l.b16 %v3722
        %v5387 = vunpack.c.l.b16 %v3786
        %v5388 = vunpack.c.l.b16 %v4992
        %v5389 = vunpack.c.l.b16 %v4998
        %v5390 = vunpack.c.l.b16 %v5004
        %v5391 = vunpack.c.l.b16 %v3513
        %v5392 = vunpack.c.l.b16 %v3724
        %v5393 = vunpack.c.l.b16 %v3788
        %v5394 = vunpack.c.l.b16 %v5010
        %v5395 = vunpack.c.l.b16 %v5016
        %v5396 = vunpack.c.l.b16 %v5022
        %v5397 = vunpack.c.l.b16 %v3515
        %v5398 = vunpack.c.l.b16 %v3726
        %v5399 = vunpack.c.l.b16 %v3790
        %v5400 = vunpack.c.l.b16 %v5028
        %v5401 = vunpack.c.l.b16 %v5034
        %v5402 = vunpack.c.l.b16 %v5040
        %v5403 = vunpack.c.l.b16 %v3517
        %v5404 = vunpack.c.l.b16 %v3728
        %v5405 = vunpack.c.l.b16 %v3792
        %v5406 = vunpack.c.l.b16 %v5046
        %v5407 = vunpack.c.l.b16 %v5052
        %v5408 = vunpack.c.l.b16 %v5058
        %v5409 = vunpack.c.l.b16 %v3519
        %v5410 = vunpack.c.l.b16 %v3730
        %v5411 = vunpack.c.l.b16 %v3794
        %v5412 = vunpack.c.l.b16 %v5064
        %v5413 = vunpack.c.l.b16 %v5070
        %v5414 = vunpack.c.l.b16 %v5076
        %v5415 = vunpack.c.l.b16 %v3521
        %v5416 = vunpack.c.l.b16 %v3732
        %v5417 = vunpack.c.l.b16 %v3796
        %v5418 = vunpack.c.l.b16 %v5082
        %v5419 = vunpack.c.l.b16 %v5088
        %v5420 = vunpack.c.l.b16 %v5094
        %v5421 = vunpack.c.l.b16 %v3523
        %v5422 = vunpack.c.l.b16 %v3734
        %v5423 = vunpack.c.l.b16 %v3798
        %v5424 = vunpack.c.l.b16 %v5100
        %v5425 = vunpack.c.l.b16 %v5106
        %v5426 = vunpack.c.l.b16 %v5112
        %v5427 = vunpack.c.l.b16 %v3524
        %v5428 = vunpack.c.l.b16 %v3736
        %v5429 = vunpack.c.l.b16 %v3799
        %v5430 = vunpack.c.l.b16 %v5118
        %v5431 = vunpack.c.l.b16 %v5124
        %v5432 = vld [vmem:[%s6] sm:$0xf]
        %v5433 = vld [vmem:[%s6 + $0x4] sm:$0xf]
        %v5434 = vld [vmem:[%s6 + $0x8] sm:$0xf]
        %v5435 = vld [vmem:[%s6 + $0xc] sm:$0xf]
        %v5436 = vld [vmem:[%s6 + $0x10] sm:$0xf]
        %v5437 = vld [vmem:[%s6 + $0x14] sm:$0xf]
        %v5438 = vld [vmem:[%s6 + $0x18] sm:$0xf]
        %v5439 = vld [vmem:[%s6 + $0x1c] sm:$0xf]
        %v5440 = vld [vmem:[%s6 + $0x20] sm:$0xf]
        %v5441 = vld [vmem:[%s6 + $0x24] sm:$0xf]
        %v5442 = vld [vmem:[%s6 + $0x28] sm:$0xf]
        %v5443 = vld [vmem:[%s6 + $0x2c] sm:$0xf]
        %v5444 = vld [vmem:[%s6 + $0x30] sm:$0xf]
        %v5445 = vld [vmem:[%s6 + $0x34] sm:$0xf]
        %v5446 = vld [vmem:[%s6 + $0x38] sm:$0xf]
        %v5447 = vld [vmem:[%s6 + $0x3c] sm:$0xf]
        %v5448 = vld [vmem:[%s6 + $0x40] sm:$0xf]
        %v5449 = vld [vmem:[%s6 + $0x44] sm:$0xf]
        %v5450 = vld [vmem:[%s6 + $0x48] sm:$0xf]
        %v5451 = vld [vmem:[%s6 + $0x4c] sm:$0xf]
        %v5452 = vld [vmem:[%s6 + $0x50] sm:$0xf]
        %v5453 = vld [vmem:[%s6 + $0x54] sm:$0xf]
        %v5454 = vld [vmem:[%s6 + $0x58] sm:$0xf]
        %v5455 = vld [vmem:[%s6 + $0x5c] sm:$0xf]
        %v5456 = vld [vmem:[%s6 + $0x60] sm:$0xf]
        %v5457 = vld [vmem:[%s6 + $0x64] sm:$0xf]
        %v5458 = vld [vmem:[%s6 + $0x68] sm:$0xf]
        %v5459 = vld [vmem:[%s6 + $0x6c] sm:$0xf]
        %v5460 = vld [vmem:[%s6 + $0x70] sm:$0xf]
        %v5461 = vld [vmem:[%s6 + $0x74] sm:$0xf]
        %v5462 = vld [vmem:[%s6 + $0x78] sm:$0xf]
        %v5463 = vld [vmem:[%s6 + $0x7c] sm:$0xf]
        %v5464 = vld [vmem:[%s6 + $0x80] sm:$0xf]
        %v5465 = vld [vmem:[%s6 + $0x84] sm:$0xf]
        %v5466 = vld [vmem:[%s6 + $0x88] sm:$0xf]
        %v5467 = vld [vmem:[%s6 + $0x8c] sm:$0xf]
        %v5468 = vld [vmem:[%s6 + $0x90] sm:$0xf]
        %v5469 = vld [vmem:[%s6 + $0x94] sm:$0xf]
        %v5470 = vld [vmem:[%s6 + $0x98] sm:$0xf]
        %v5471 = vld [vmem:[%s6 + $0x9c] sm:$0xf]
        %v5472 = vld [vmem:[%s6 + $0xa0] sm:$0xf]
        %v5473 = vld [vmem:[%s6 + $0xa4] sm:$0xf]
        %v5474 = vld [vmem:[%s6 + $0xa8] sm:$0xf]
        %v5475 = vld [vmem:[%s6 + $0xac] sm:$0xf]
        %v5476 = vld [vmem:[%s6 + $0xb0] sm:$0xf]
        %v5477 = vld [vmem:[%s6 + $0xb4] sm:$0xf]
        %v5478 = vld [vmem:[%s6 + $0xb8] sm:$0xf]
        %v5479 = vld [vmem:[%s6 + $0xbc] sm:$0xf]
        %v5480 = vld [vmem:[%s6 + $0xc0] sm:$0xf]
        %v5481 = vld [vmem:[%s6 + $0xc4] sm:$0xf]
        %v5482 = vld [vmem:[%s6 + $0xc8] sm:$0xf]
        %v5483 = vld [vmem:[%s6 + $0xcc] sm:$0xf]
        %v5484 = vld [vmem:[%s6 + $0xd0] sm:$0xf]
        %v5485 = vld [vmem:[%s6 + $0xd4] sm:$0xf]
        %v5486 = vld [vmem:[%s6 + $0xd8] sm:$0xf]
        %v5487 = vld [vmem:[%s6 + $0xdc] sm:$0xf]
        %v5488 = vld [vmem:[%s6 + $0xe0] sm:$0xf]
        %v5489 = vld [vmem:[%s6 + $0xe4] sm:$0xf]
        %v5490 = vld [vmem:[%s6 + $0xe8] sm:$0xf]
        %v5491 = vld [vmem:[%s6 + $0xec] sm:$0xf]
        %v5492 = vld [vmem:[%s6 + $0xf0] sm:$0xf]
        %v5493 = vld [vmem:[%s6 + $0xf4] sm:$0xf]
        %v5494 = vld [vmem:[%s6 + $0xf8] sm:$0xf]
        %v5495 = vld [vmem:[%s6 + $0xfc] sm:$0xf]
        %v5496 = vld [vmem:[%s6 + $0x100] sm:$0xf]
        %v5497 = vld [vmem:[%s6 + $0x104] sm:$0xf]
        %v5498 = vld [vmem:[%s6 + $0x108] sm:$0xf]
        %v5499 = vld [vmem:[%s6 + $0x10c] sm:$0xf]
        %v5500 = vld [vmem:[%s6 + $0x110] sm:$0xf]
        %v5501 = vld [vmem:[%s6 + $0x114] sm:$0xf]
        %v5502 = vld [vmem:[%s6 + $0x118] sm:$0xf]
        %v5503 = vld [vmem:[%s6 + $0x11c] sm:$0xf]
        %v5504 = vld [vmem:[%s6 + $0x120] sm:$0xf]
        %v5505 = vld [vmem:[%s6 + $0x124] sm:$0xf]
        %v5506 = vld [vmem:[%s6 + $0x128] sm:$0xf]
        %v5507 = vld [vmem:[%s6 + $0x12c] sm:$0xf]
        %v5508 = vld [vmem:[%s6 + $0x130] sm:$0xf]
        %v5509 = vld [vmem:[%s6 + $0x134] sm:$0xf]
        %v5510 = vld [vmem:[%s6 + $0x138] sm:$0xf]
        %v5511 = vld [vmem:[%s6 + $0x13c] sm:$0xf]
        %v5512 = vld [vmem:[%s6 + $0x140] sm:$0xf]
        %v5513 = vld [vmem:[%s6 + $0x144] sm:$0xf]
        %v5514 = vld [vmem:[%s6 + $0x148] sm:$0xf]
        %v5515 = vld [vmem:[%s6 + $0x14c] sm:$0xf]
        %v5516 = vld [vmem:[%s6 + $0x150] sm:$0xf]
        %v5517 = vld [vmem:[%s6 + $0x154] sm:$0xf]
        %v5518 = vld [vmem:[%s6 + $0x158] sm:$0xf]
        %v5519 = vld [vmem:[%s6 + $0x15c] sm:$0xf]
        %v5520 = vld [vmem:[%s6 + $0x160] sm:$0xf]
        %v5521 = vld [vmem:[%s6 + $0x164] sm:$0xf]
        %v5522 = vld [vmem:[%s6 + $0x168] sm:$0xf]
        %v5523 = vld [vmem:[%s6 + $0x16c] sm:$0xf]
        %v5524 = vld [vmem:[%s6 + $0x170] sm:$0xf]
        %v5525 = vld [vmem:[%s6 + $0x174] sm:$0xf]
        %v5526 = vld [vmem:[%s6 + $0x178] sm:$0xf]
        %v5527 = vld [vmem:[%s6 + $0x17c] sm:$0xf]
        %v5528 = vld [vmem:[%s6 + $0x180] sm:$0xf]
        %v5529 = vld [vmem:[%s6 + $0x184] sm:$0xf]
        %v5530 = vld [vmem:[%s6 + $0x188] sm:$0xf]
        %v5531 = vld [vmem:[%s6 + $0x18c] sm:$0xf]
        %v5532 = vld [vmem:[%s6 + $0x190] sm:$0xf]
        %v5533 = vld [vmem:[%s6 + $0x194] sm:$0xf]
        %v5534 = vld [vmem:[%s6 + $0x198] sm:$0xf]
        %v5535 = vld [vmem:[%s6 + $0x19c] sm:$0xf]
        %v5536 = vld [vmem:[%s6 + $0x1a0] sm:$0xf]
        %v5537 = vld [vmem:[%s6 + $0x1a4] sm:$0xf]
        %v5538 = vld [vmem:[%s6 + $0x1a8] sm:$0xf]
        %v5539 = vld [vmem:[%s6 + $0x1ac] sm:$0xf]
        %v5540 = vpack.c.b16 %v5239, %v5232
        %v5541 = vpack.c.b16 %v5240, %v5233
        %v5542 = vpack.c.b16 %v5241, %v5234
        %v5543 = vpack.c.b16 %v5242, %v5235
        %v5544 = vpack.c.b16 %v5243, %v5236
        %v5545 = vpack.c.b16 %v5244, %v5237
        %v5546 = vpack.c.b16 %v5245, %v5238
        %v5547 = vpack.c.b16 %v5253, %v5246
        %v5548 = vpack.c.b16 %v5254, %v5247
        %v5549 = vpack.c.b16 %v5255, %v5248
        %v5550 = vpack.c.b16 %v5256, %v5249
        %v5551 = vpack.c.b16 %v5257, %v5250
        %v5552 = vpack.c.b16 %v5258, %v5251
        %v5553 = vpack.c.b16 %v5259, %v5252
        %v5554 = vpack.c.b16 %v5267, %v5260
        %v5555 = vpack.c.b16 %v5268, %v5261
        %v5556 = vpack.c.b16 %v5269, %v5262
        %v5557 = vpack.c.b16 %v5270, %v5263
        %v5558 = vpack.c.b16 %v5271, %v5264
        %v5559 = vpack.c.b16 %v5272, %v5265
        %v5560 = vpack.c.b16 %v5273, %v5266
        %v5561 = vpack.c.b16 %v5281, %v5274
        %v5562 = vpack.c.b16 %v5282, %v5275
        %v5563 = vpack.c.b16 %v5283, %v5276
        %v5564 = vpack.c.b16 %v5284, %v5277
        %v5565 = vpack.c.b16 %v5285, %v5278
        %v5566 = vpack.c.b16 %v5286, %v5279
        %v5567 = vpack.c.b16 %v5287, %v5280
        %v5568 = vpack.c.b16 %v5235, %v5288
        %v5569 = vpack.c.b16 %v5295, %v5289
        %v5570 = vpack.c.b16 %v5296, %v5290
        %v5571 = vpack.c.b16 %v5297, %v5291
        %v5572 = vpack.c.b16 %v5298, %v5292
        %v5573 = vpack.c.b16 %v5299, %v5293
        %v5574 = vpack.c.b16 %v5300, %v5294
        %v5575 = vpack.c.b16 %v5249, %v5242
        %v5576 = vpack.c.b16 %v5307, %v5301
        %v5577 = vpack.c.b16 %v5308, %v5302
        %v5578 = vpack.c.b16 %v5309, %v5303
        %v5579 = vpack.c.b16 %v5310, %v5304
        %v5580 = vpack.c.b16 %v5311, %v5305
        %v5581 = vpack.c.b16 %v5312, %v5306
        %v5582 = vpack.c.b16 %v5263, %v5256
        %v5583 = vpack.c.b16 %v5319, %v5313
        %v5584 = vpack.c.b16 %v5320, %v5314
        %v5585 = vpack.c.b16 %v5321, %v5315
        %v5586 = vpack.c.b16 %v5322, %v5316
        %v5587 = vpack.c.b16 %v5323, %v5317
        %v5588 = vpack.c.b16 %v5324, %v5318
        %v5589 = vpack.c.b16 %v5277, %v5270
        %v5590 = vpack.c.b16 %v5331, %v5325
        %v5591 = vpack.c.b16 %v5332, %v5326
        %v5592 = vpack.c.b16 %v5333, %v5327
        %v5593 = vpack.c.b16 %v5334, %v5328
        %v5594 = vpack.c.b16 %v5335, %v5329
        %v5595 = vpack.c.b16 %v5287, %v5330
        %v5596 = vpack.c.b16 %v5291, %v5336
        %v5597 = vpack.c.b16 %v5343, %v5337
        %v5598 = vpack.c.b16 %v5344, %v5338
        %v5599 = vpack.c.b16 %v5345, %v5339
        %v5600 = vpack.c.b16 %v5346, %v5340
        %v5601 = vpack.c.b16 %v5347, %v5341
        %v5602 = vpack.c.b16 %v5348, %v5342
        %v5603 = vpack.c.b16 %v5303, %v5297
        %v5604 = vpack.c.b16 %v5355, %v5349
        %v5605 = vpack.c.b16 %v5356, %v5350
        %v5606 = vpack.c.b16 %v5357, %v5351
        %v5607 = vpack.c.b16 %v5358, %v5352
        %v5608 = vpack.c.b16 %v5359, %v5353
        %v5609 = vpack.c.b16 %v5360, %v5354
        %v5610 = vpack.c.b16 %v5315, %v5309
        %v5611 = vpack.c.b16 %v5367, %v5361
        %v5612 = vpack.c.b16 %v5368, %v5362
        %v5613 = vpack.c.b16 %v5369, %v5363
        %v5614 = vpack.c.b16 %v5370, %v5364
        %v5615 = vpack.c.b16 %v5371, %v5365
        %v5616 = vpack.c.b16 %v5372, %v5366
        %v5617 = vpack.c.b16 %v5327, %v5321
        %v5618 = vpack.c.b16 %v5379, %v5373
        %v5619 = vpack.c.b16 %v5380, %v5374
        %v5620 = vpack.c.b16 %v5381, %v5375
        %v5621 = vpack.c.b16 %v5382, %v5376
        %v5622 = vpack.c.b16 %v5383, %v5377
        %v5623 = vpack.c.b16 %v5287, %v5378
        %v5624 = vpack.c.b16 %v5339, %v5384
        %v5625 = vpack.c.b16 %v5391, %v5385
        %v5626 = vpack.c.b16 %v5392, %v5386
        %v5627 = vpack.c.b16 %v5393, %v5387
        %v5628 = vpack.c.b16 %v5394, %v5388
        %v5629 = vpack.c.b16 %v5395, %v5389
        %v5630 = vpack.c.b16 %v5396, %v5390
        %v5631 = vpack.c.b16 %v5351, %v5345
        %v5632 = vpack.c.b16 %v5403, %v5397
        %v5633 = vpack.c.b16 %v5404, %v5398
        %v5634 = vpack.c.b16 %v5405, %v5399
        %v5635 = vpack.c.b16 %v5406, %v5400
        %v5636 = vpack.c.b16 %v5407, %v5401
        %v5637 = vpack.c.b16 %v5408, %v5402
        %v5638 = vpack.c.b16 %v5363, %v5357
        %v5639 = vpack.c.b16 %v5415, %v5409
        %v5640 = vpack.c.b16 %v5416, %v5410
        %v5641 = vpack.c.b16 %v5417, %v5411
        %v5642 = vpack.c.b16 %v5418, %v5412
        %v5643 = vpack.c.b16 %v5419, %v5413
        %v5644 = vpack.c.b16 %v5420, %v5414
        %v5645 = vpack.c.b16 %v5375, %v5369
        %v5646 = vpack.c.b16 %v5427, %v5421
        %v5647 = vpack.c.b16 %v5428, %v5422
        %v5648 = vpack.c.b16 %v5429, %v5423
        %v5649 = vpack.c.b16 %v5430, %v5424
        %v5650 = vpack.c.b16 %v5431, %v5425
        %v5651 = vpack.c.b16 %v5287, %v5426
        %v5856 = vunpack.c.l.b16 %v5432
        %v5857 = vunpack.c.l.b16 %v5433
        %v5858 = vunpack.c.l.b16 %v5434
        %v5859 = vunpack.c.l.b16 %v5435
        %v5860 = vunpack.c.l.b16 %v5436
        %v5861 = vunpack.c.l.b16 %v5437
        %v5862 = vunpack.c.l.b16 %v5438
        %v5863 = vunpack.c.l.b16 %v5439
        %v5864 = vunpack.c.l.b16 %v5440
        %v5865 = vunpack.c.l.b16 %v5441
        %v5866 = vunpack.c.l.b16 %v5442
        %v5867 = vunpack.c.l.b16 %v5443
        %v5868 = vunpack.c.l.b16 %v5444
        %v5869 = vunpack.c.l.b16 %v5445
        %v5870 = vunpack.c.l.b16 %v5446
        %v5871 = vunpack.c.l.b16 %v5447
        %v5872 = vunpack.c.l.b16 %v5448
        %v5873 = vunpack.c.l.b16 %v5449
        %v5874 = vunpack.c.l.b16 %v5450
        %v5875 = vunpack.c.l.b16 %v5451
        %v5876 = vunpack.c.l.b16 %v5452
        %v5877 = vunpack.c.l.b16 %v5453
        %v5878 = vunpack.c.l.b16 %v5454
        %v5879 = vunpack.c.l.b16 %v5455
        %v5880 = vunpack.c.l.b16 %v5456
        %v5881 = vunpack.c.l.b16 %v5457
        %v5882 = vunpack.c.l.b16 %v5458
        %v5883 = vunpack.c.l.b16 %v5459
        %v5884 = vunpack.c.l.b16 %v5460
        %v5885 = vunpack.c.l.b16 %v5461
        %v5886 = vunpack.c.l.b16 %v5462
        %v5887 = vunpack.c.l.b16 %v5463
        %v5888 = vunpack.c.l.b16 %v5464
        %v5889 = vunpack.c.l.b16 %v5465
        %v5890 = vunpack.c.l.b16 %v5466
        %v5891 = vunpack.c.l.b16 %v5467
        %v5892 = vunpack.c.l.b16 %v5468
        %v5893 = vunpack.c.l.b16 %v5469
        %v5894 = vunpack.c.l.b16 %v5470
        %v5895 = vunpack.c.l.b16 %v5471
        %v5896 = vunpack.c.l.b16 %v5472
        %v5897 = vunpack.c.l.b16 %v5473
        %v5898 = vunpack.c.l.b16 %v5474
        %v5899 = vunpack.c.l.b16 %v5475
        %v5900 = vunpack.c.l.b16 %v5476
        %v5901 = vunpack.c.l.b16 %v5477
        %v5902 = vunpack.c.l.b16 %v5478
        %v5903 = vunpack.c.l.b16 %v5479
        %v5904 = vunpack.c.l.b16 %v5480
        %v5905 = vunpack.c.l.b16 %v5481
        %v5906 = vunpack.c.l.b16 %v5482
        %v5907 = vunpack.c.l.b16 %v5483
        %v5908 = vunpack.c.l.b16 %v5484
        %v5909 = vunpack.c.l.b16 %v5485
        %v5910 = vunpack.c.l.b16 %v5486
        %v5911 = vunpack.c.l.b16 %v5487
        %v5912 = vunpack.c.l.b16 %v5488
        %v5913 = vunpack.c.l.b16 %v5489
        %v5914 = vunpack.c.l.b16 %v5490
        %v5915 = vunpack.c.l.b16 %v5491
        %v5916 = vunpack.c.l.b16 %v5492
        %v5917 = vunpack.c.l.b16 %v5493
        %v5918 = vunpack.c.l.b16 %v5494
        %v5919 = vunpack.c.l.b16 %v5495
        %v5920 = vunpack.c.l.b16 %v5496
        %v5921 = vunpack.c.l.b16 %v5497
        %v5922 = vunpack.c.l.b16 %v5498
        %v5923 = vunpack.c.l.b16 %v5499
        %v5924 = vunpack.c.l.b16 %v5500
        %v5925 = vunpack.c.l.b16 %v5501
        %v5926 = vunpack.c.l.b16 %v5502
        %v5927 = vunpack.c.l.b16 %v5503
        %v5928 = vunpack.c.l.b16 %v5504
        %v5929 = vunpack.c.l.b16 %v5505
        %v5930 = vunpack.c.l.b16 %v5506
        %v5931 = vunpack.c.l.b16 %v5507
        %v5932 = vunpack.c.l.b16 %v5508
        %v5933 = vunpack.c.l.b16 %v5509
        %v5934 = vunpack.c.l.b16 %v5510
        %v5935 = vunpack.c.l.b16 %v5511
        %v5936 = vunpack.c.l.b16 %v5512
        %v5937 = vunpack.c.l.b16 %v5513
        %v5938 = vunpack.c.l.b16 %v5514
        %v5939 = vunpack.c.l.b16 %v5515
        %v5940 = vunpack.c.l.b16 %v5516
        %v5941 = vunpack.c.l.b16 %v5517
        %v5942 = vunpack.c.l.b16 %v5518
        %v5943 = vunpack.c.l.b16 %v5519
        %v5944 = vunpack.c.l.b16 %v5520
        %v5945 = vunpack.c.l.b16 %v5521
        %v5946 = vunpack.c.l.b16 %v5522
        %v5947 = vunpack.c.l.b16 %v5523
        %v5948 = vunpack.c.l.b16 %v5524
        %v5949 = vunpack.c.l.b16 %v5525
        %v5950 = vunpack.c.l.b16 %v5526
        %v5951 = vunpack.c.l.b16 %v5527
        %v5952 = vunpack.c.l.b16 %v5528
        %v5953 = vunpack.c.l.b16 %v5529
        %v5954 = vunpack.c.l.b16 %v5530
        %v5955 = vunpack.c.l.b16 %v5531
        %v5956 = vunpack.c.l.b16 %v5532
        %v5957 = vunpack.c.l.b16 %v5533
        %v5958 = vunpack.c.l.b16 %v5534
        %v5959 = vunpack.c.l.b16 %v5535
        %v5960 = vunpack.c.l.b16 %v5536
        %v5961 = vunpack.c.l.b16 %v5537
        %v5962 = vunpack.c.l.b16 %v5538
        %v5963 = vunpack.c.l.b16 %v5539
        %v5964 = vpack.c.b16 %v5857, %v5856
        %v5965 = vpack.c.b16 %v5859, %v5858
        %v5966 = vpack.c.b16 %v5861, %v5860
        %v5967 = vpack.c.b16 %v5863, %v5862
        %v5968 = vpack.c.b16 %v5865, %v5864
        %v5969 = vpack.c.b16 %v5867, %v5866
        %v5970 = vpack.c.b16 %v5869, %v5868
        %v5971 = vpack.c.b16 %v5871, %v5870
        %v5972 = vpack.c.b16 %v5873, %v5872
        %v5973 = vpack.c.b16 %v5875, %v5874
        %v5974 = vpack.c.b16 %v5877, %v5876
        %v5975 = vpack.c.b16 %v5879, %v5878
        %v5976 = vpack.c.b16 %v5881, %v5880
        %v5977 = vpack.c.b16 %v5883, %v5882
        %v5978 = vpack.c.b16 %v5885, %v5884
        %v5979 = vpack.c.b16 %v5887, %v5886
        %v5980 = vpack.c.b16 %v5889, %v5888
        %v5981 = vpack.c.b16 %v5891, %v5890
        %v5982 = vpack.c.b16 %v5893, %v5892
        %v5983 = vpack.c.b16 %v5895, %v5894
        %v5984 = vpack.c.b16 %v5897, %v5896
        %v5985 = vpack.c.b16 %v5899, %v5898
        %v5986 = vpack.c.b16 %v5901, %v5900
        %v5987 = vpack.c.b16 %v5903, %v5902
        %v5988 = vpack.c.b16 %v5905, %v5904
        %v5989 = vpack.c.b16 %v5907, %v5906
        %v5990 = vpack.c.b16 %v5909, %v5908
        %v5991 = vpack.c.b16 %v5911, %v5910
        %v5992 = vpack.c.b16 %v5913, %v5912
        %v5993 = vpack.c.b16 %v5915, %v5914
        %v5994 = vpack.c.b16 %v5917, %v5916
        %v5995 = vpack.c.b16 %v5919, %v5918
        %v5996 = vpack.c.b16 %v5921, %v5920
        %v5997 = vpack.c.b16 %v5923, %v5922
        %v5998 = vpack.c.b16 %v5925, %v5924
        %v5999 = vpack.c.b16 %v5927, %v5926
        %v6000 = vpack.c.b16 %v5929, %v5928
        %v6001 = vpack.c.b16 %v5931, %v5930
        %v6002 = vpack.c.b16 %v5933, %v5932
        %v6003 = vpack.c.b16 %v5935, %v5934
        %v6004 = vpack.c.b16 %v5937, %v5936
        %v6005 = vpack.c.b16 %v5939, %v5938
        %v6006 = vpack.c.b16 %v5941, %v5940
        %v6007 = vpack.c.b16 %v5943, %v5942
        %v6008 = vpack.c.b16 %v5945, %v5944
        %v6009 = vpack.c.b16 %v5947, %v5946
        %v6010 = vpack.c.b16 %v5949, %v5948
        %v6011 = vpack.c.b16 %v5951, %v5950
        %v6012 = vpack.c.b16 %v5953, %v5952
        %v6013 = vpack.c.b16 %v5955, %v5954
        %v6014 = vpack.c.b16 %v5957, %v5956
        %v6015 = vpack.c.b16 %v5959, %v5958
        %v6016 = vpack.c.b16 %v5961, %v5960
        %v6017 = vpack.c.b16 %v5963, %v5962
        %v6073 = vsel %vm3242, %v5546, 0
        %v6076 = vsel %vm3242, %v5553, 0
        %v6079 = vsel %vm3242, %v5560, 0
        %v6082 = vsel %vm3242, %v5567, 0
        %v6085 = vsel %vm3242, %v5574, 0
        %v6088 = vsel %vm3242, %v5581, 0
        %v6091 = vsel %vm3242, %v5588, 0
        %v6094 = vsel %vm3242, %v5595, 0
        %v6097 = vsel %vm3242, %v5602, 0
        %v6100 = vsel %vm3242, %v5609, 0
        %v6103 = vsel %vm3242, %v5616, 0
        %v6106 = vsel %vm3242, %v5623, 0
        %v6109 = vsel %vm3242, %v5630, 0
        %v6112 = vsel %vm3242, %v5637, 0
        %v6115 = vsel %vm3242, %v5644, 0
        %v6118 = vsel %vm3242, %v5651, 0
        %6120 = vmatprep.subr.bf16.mxu0 0
        %6121 = vmatpush1.bf16.msra.mxu0 %v5964
        %6122 = vmatprep.subr.bf16.mxu0 0
        %6123 = vmatpush1.bf16.msra.mxu0 %v5965
        %6124 = vmatprep.subr.bf16.mxu0 0
        %6125 = vmatpush1.bf16.msra.mxu0 %v5966
        %6126 = vmatprep.subr.bf16.mxu0 0
        %6127 = vmatpush1.bf16.msra.mxu0 %v5967
        %6128 = vmatprep.subr.bf16.mxu0 0
        %6129 = vmatpush1.bf16.msra.mxu0 %v5968
        %6130 = vmatprep.subr.bf16.mxu0 0
        %6131 = vmatpush1.bf16.msra.mxu0 %v5969
        %6132 = vmatprep.subr.bf16.mxu0 0
        %6133 = vmatpush1.bf16.msra.mxu0 %v5970
        %6134 = vmatprep.subr.bf16.mxu0 0
        %6135 = vmatpush1.bf16.msra.mxu0 %v5971
        %6136 = vmatprep.subr.bf16.mxu0 0
        %6137 = vmatpush1.bf16.msra.mxu0 %v5972
        %6138 = vmatprep.subr.bf16.mxu0 0
        %6139 = vmatpush1.bf16.msra.mxu0 %v5973
        %6140 = vmatprep.subr.bf16.mxu0 0
        %6141 = vmatpush1.bf16.msra.mxu0 %v5974
        %6142 = vmatprep.subr.bf16.mxu0 0
        %6143 = vmatpush1.bf16.msra.mxu0 %v5975
        %6144 = vmatprep.subr.bf16.mxu0 0
        %6145 = vmatpush1.bf16.msra.mxu0 %v5976
        %6146 = vmatprep.subr.bf16.mxu0 0
        %6147 = vmatpush1.bf16.msra.mxu0 %v5977
        %6148 = vmatprep.subr.bf16.mxu0 0
        %6149 = vmatpush1.bf16.msra.mxu0 %v5978
        %6150 = vmatprep.subr.bf16.mxu0 0
        %6151 = vmatpush1.bf16.msra.mxu0 %v5979
        %6152 = vmatprep.mubr.bf16.mxu0 %v5541
        %6153 = vmatmul.mubr.bf16.gmra.mrb[0].mxu0 %v5540
        %v6154 = vpop.f32.mrb[0].mxu0
        %v6155 = vadd.f32 0.0, %v6154
        %v6156 = vpop.f32.mrb[0].mxu0
        %v6157 = vpop.f32.mrb[0].mxu0
        %v6158 = vadd.f32 0.0, %v6157
        %v6159 = vpop.f32.mrb[0].mxu0
        %6160 = vmatprep.mubr.bf16.mxu0 %v5548
        %6161 = vmatmul.mubr.bf16.gmra.mrb[0].mxu0 %v5547
        %v6162 = vpop.f32.mrb[0].mxu0
        %v6163 = vadd.f32 0.0, %v6162
        %v6164 = vpop.f32.mrb[0].mxu0
        %v6165 = vpop.f32.mrb[0].mxu0
        %v6166 = vadd.f32 0.0, %v6165
        %v6167 = vpop.f32.mrb[0].mxu0
        %6168 = vmatprep.mubr.bf16.mxu0 %v5555
        %6169 = vmatmul.mubr.bf16.gmra.mrb[0].mxu0 %v5554
        %v6170 = vpop.f32.mrb[0].mxu0
        %v6171 = vadd.f32 0.0, %v6170
        %v6172 = vpop.f32.mrb[0].mxu0
        %v6173 = vpop.f32.mrb[0].mxu0
        %v6174 = vadd.f32 0.0, %v6173
        %v6175 = vpop.f32.mrb[0].mxu0
        %6176 = vmatprep.mubr.bf16.mxu0 %v5562
        %6177 = vmatmul.mubr.bf16.gmra.mrb[0].mxu0 %v5561
        %v6178 = vpop.f32.mrb[0].mxu0
        %v6179 = vadd.f32 0.0, %v6178
        %v6180 = vpop.f32.mrb[0].mxu0
        %v6181 = vpop.f32.mrb[0].mxu0
        %v6182 = vadd.f32 0.0, %v6181
        %v6183 = vpop.f32.mrb[0].mxu0
        %6184 = vmatprep.mubr.bf16.mxu0 %v5569
        %6185 = vmatmul.mubr.bf16.gmra.mrb[0].mxu0 %v5568
        %v6186 = vpop.f32.mrb[0].mxu0
        %v6187 = vadd.f32 0.0, %v6186
        %v6188 = vpop.f32.mrb[0].mxu0
        %v6189 = vpop.f32.mrb[0].mxu0
        %v6190 = vadd.f32 0.0, %v6189
        %v6191 = vpop.f32.mrb[0].mxu0
        %6192 = vmatprep.mubr.bf16.mxu0 %v5576
        %6193 = vmatmul.mubr.bf16.gmra.mrb[0].mxu0 %v5575
        %v6194 = vpop.f32.mrb[0].mxu0
        %v6195 = vadd.f32 0.0, %v6194
        %v6196 = vpop.f32.mrb[0].mxu0
        %v6197 = vpop.f32.mrb[0].mxu0
        %v6198 = vadd.f32 0.0, %v6197
        %v6199 = vpop.f32.mrb[0].mxu0
        %6200 = vmatprep.mubr.bf16.mxu0 %v5583
        %6201 = vmatmul.mubr.bf16.gmra.mrb[0].mxu0 %v5582
        %v6202 = vpop.f32.mrb[0].mxu0
        %v6203 = vadd.f32 0.0, %v6202
        %v6204 = vpop.f32.mrb[0].mxu0
        %v6205 = vpop.f32.mrb[0].mxu0
        %v6206 = vadd.f32 0.0, %v6205
        %v6207 = vpop.f32.mrb[0].mxu0
        %6208 = vmatprep.mubr.bf16.mxu0 %v5590
        %6209 = vmatmul.mubr.bf16.gmra.mrb[0].mxu0 %v5589
        %v6210 = vpop.f32.mrb[0].mxu0
        %v6211 = vadd.f32 0.0, %v6210
        %v6212 = vpop.f32.mrb[0].mxu0
        %v6213 = vpop.f32.mrb[0].mxu0
        %v6214 = vadd.f32 0.0, %v6213
        %v6215 = vpop.f32.mrb[0].mxu0
        %6216 = vmatprep.mubr.bf16.mxu0 %v5597
        %6217 = vmatmul.mubr.bf16.gmra.mrb[0].mxu0 %v5596
        %v6218 = vpop.f32.mrb[0].mxu0
        %v6219 = vadd.f32 0.0, %v6218
        %v6220 = vpop.f32.mrb[0].mxu0
        %v6221 = vpop.f32.mrb[0].mxu0
        %v6222 = vadd.f32 0.0, %v6221
        %v6223 = vpop.f32.mrb[0].mxu0
        %6224 = vmatprep.mubr.bf16.mxu0 %v5604
        %6225 = vmatmul.mubr.bf16.gmra.mrb[0].mxu0 %v5603
        %v6226 = vpop.f32.mrb[0].mxu0
        %v6227 = vadd.f32 0.0, %v6226
        %v6228 = vpop.f32.mrb[0].mxu0
        %v6229 = vpop.f32.mrb[0].mxu0
        %v6230 = vadd.f32 0.0, %v6229
        %v6231 = vpop.f32.mrb[0].mxu0
        %6232 = vmatprep.mubr.bf16.mxu0 %v5611
        %6233 = vmatmul.mubr.bf16.gmra.mrb[0].mxu0 %v5610
        %v6234 = vpop.f32.mrb[0].mxu0
        %v6235 = vadd.f32 0.0, %v6234
        %v6236 = vpop.f32.mrb[0].mxu0
        %v6237 = vpop.f32.mrb[0].mxu0
        %v6238 = vadd.f32 0.0, %v6237
        %v6239 = vpop.f32.mrb[0].mxu0
        %6240 = vmatprep.mubr.bf16.mxu0 %v5618
        %6241 = vmatmul.mubr.bf16.gmra.mrb[0].mxu0 %v5617
        %v6242 = vpop.f32.mrb[0].mxu0
        %v6243 = vadd.f32 0.0, %v6242
        %v6244 = vpop.f32.mrb[0].mxu0
        %v6245 = vpop.f32.mrb[0].mxu0
        %v6246 = vadd.f32 0.0, %v6245
        %v6247 = vpop.f32.mrb[0].mxu0
        %6248 = vmatprep.mubr.bf16.mxu0 %v5625
        %6249 = vmatmul.mubr.bf16.gmra.mrb[0].mxu0 %v5624
        %v6250 = vpop.f32.mrb[0].mxu0
        %v6251 = vadd.f32 0.0, %v6250
        %v6252 = vpop.f32.mrb[0].mxu0
        %v6253 = vpop.f32.mrb[0].mxu0
        %v6254 = vadd.f32 0.0, %v6253
        %v6255 = vpop.f32.mrb[0].mxu0
        %6256 = vmatprep.mubr.bf16.mxu0 %v5632
        %6257 = vmatmul.mubr.bf16.gmra.mrb[0].mxu0 %v5631
        %v6258 = vpop.f32.mrb[0].mxu0
        %v6259 = vadd.f32 0.0, %v6258
        %v6260 = vpop.f32.mrb[0].mxu0
        %v6261 = vpop.f32.mrb[0].mxu0
        %v6262 = vadd.f32 0.0, %v6261
        %v6263 = vpop.f32.mrb[0].mxu0
        %6264 = vmatprep.mubr.bf16.mxu0 %v5639
        %6265 = vmatmul.mubr.bf16.gmra.mrb[0].mxu0 %v5638
        %v6266 = vpop.f32.mrb[0].mxu0
        %v6267 = vadd.f32 0.0, %v6266
        %v6268 = vpop.f32.mrb[0].mxu0
        %v6269 = vpop.f32.mrb[0].mxu0
        %v6270 = vadd.f32 0.0, %v6269
        %v6271 = vpop.f32.mrb[0].mxu0
        %6272 = vmatprep.mubr.bf16.mxu0 %v5646
        %6273 = vmatmul.mubr.bf16.gmra.mrb[0].mxu0 %v5645
        %v6274 = vpop.f32.mrb[0].mxu0
        %v6275 = vadd.f32 0.0, %v6274
        %v6276 = vpop.f32.mrb[0].mxu0
        %v6277 = vpop.f32.mrb[0].mxu0
        %v6278 = vadd.f32 0.0, %v6277
        %v6279 = vpop.f32.mrb[0].mxu0
        %6280 = vdwg.mxu0
        %6281 = vmatprep.subr.bf16.mxu0 0
        %6282 = vmatpush1.bf16.msra.mxu0 %v5980
        %6283 = vmatprep.subr.bf16.mxu0 0
        %6284 = vmatpush1.bf16.msra.mxu0 %v5981
        %6285 = vmatprep.subr.bf16.mxu0 0
        %6286 = vmatpush1.bf16.msra.mxu0 %v5982
        %6287 = vmatprep.subr.bf16.mxu0 0
        %6288 = vmatpush1.bf16.msra.mxu0 %v5983
        %6289 = vmatprep.subr.bf16.mxu0 0
        %6290 = vmatpush1.bf16.msra.mxu0 %v5984
        %6291 = vmatprep.subr.bf16.mxu0 0
        %6292 = vmatpush1.bf16.msra.mxu0 %v5985
        %6293 = vmatprep.subr.bf16.mxu0 0
        %6294 = vmatpush1.bf16.msra.mxu0 %v5986
        %6295 = vmatprep.subr.bf16.mxu0 0
        %6296 = vmatpush1.bf16.msra.mxu0 %v5987
        %6297 = vmatprep.subr.bf16.mxu0 0
        %6298 = vmatpush1.bf16.msra.mxu0 %v5988
        %6299 = vmatprep.subr.bf16.mxu0 0
        %6300 = vmatpush1.bf16.msra.mxu0 %v5989
        %6301 = vmatprep.subr.bf16.mxu0 0
        %6302 = vmatpush1.bf16.msra.mxu0 %v5990
        %6303 = vmatprep.subr.bf16.mxu0 0
        %6304 = vmatpush1.bf16.msra.mxu0 %v5991
        %6305 = vmatprep.subr.bf16.mxu0 0
        %6306 = vmatpush1.bf16.msra.mxu0 %v5992
        %6307 = vmatprep.subr.bf16.mxu0 0
        %6308 = vmatpush1.bf16.msra.mxu0 %v5993
        %6309 = vmatprep.subr.bf16.mxu0 0
        %6310 = vmatpush1.bf16.msra.mxu0 %v5994
        %6311 = vmatprep.subr.bf16.mxu0 0
        %6312 = vmatpush1.bf16.msra.mxu0 %v5995
        %6313 = vmatprep.mubr.bf16.mxu0 %v5543
        %6314 = vmatmul.mubr.bf16.gmra.mrb[0].mxu0 %v5542
        %v6315 = vpop.f32.mrb[0].mxu0
        %v6316 = vadd.f32 %v6155, %v6315
        %v6317 = vpop.f32.mrb[0].mxu0
        %v6318 = vpop.f32.mrb[0].mxu0
        %v6319 = vadd.f32 %v6158, %v6318
        %v6320 = vpop.f32.mrb[0].mxu0
        %6321 = vmatprep.mubr.bf16.mxu0 %v5550
        %6322 = vmatmul.mubr.bf16.gmra.mrb[0].mxu0 %v5549
        %v6323 = vpop.f32.mrb[0].mxu0
        %v6324 = vadd.f32 %v6163, %v6323
        %v6325 = vpop.f32.mrb[0].mxu0
        %v6326 = vpop.f32.mrb[0].mxu0
        %v6327 = vadd.f32 %v6166, %v6326
        %v6328 = vpop.f32.mrb[0].mxu0
        %6329 = vmatprep.mubr.bf16.mxu0 %v5557
        %6330 = vmatmul.mubr.bf16.gmra.mrb[0].mxu0 %v5556
        %v6331 = vpop.f32.mrb[0].mxu0
        %v6332 = vadd.f32 %v6171, %v6331
        %v6333 = vpop.f32.mrb[0].mxu0
        %v6334 = vpop.f32.mrb[0].mxu0
        %v6335 = vadd.f32 %v6174, %v6334
        %v6336 = vpop.f32.mrb[0].mxu0
        %6337 = vmatprep.mubr.bf16.mxu0 %v5564
        %6338 = vmatmul.mubr.bf16.gmra.mrb[0].mxu0 %v5563
        %v6339 = vpop.f32.mrb[0].mxu0
        %v6340 = vadd.f32 %v6179, %v6339
        %v6341 = vpop.f32.mrb[0].mxu0
        %v6342 = vpop.f32.mrb[0].mxu0
        %v6343 = vadd.f32 %v6182, %v6342
        %v6344 = vpop.f32.mrb[0].mxu0
        %6345 = vmatprep.mubr.bf16.mxu0 %v5571
        %6346 = vmatmul.mubr.bf16.gmra.mrb[0].mxu0 %v5570
        %v6347 = vpop.f32.mrb[0].mxu0
        %v6348 = vadd.f32 %v6187, %v6347
        %v6349 = vpop.f32.mrb[0].mxu0
        %v6350 = vpop.f32.mrb[0].mxu0
        %v6351 = vadd.f32 %v6190, %v6350
        %v6352 = vpop.f32.mrb[0].mxu0
        %6353 = vmatprep.mubr.bf16.mxu0 %v5578
        %6354 = vmatmul.mubr.bf16.gmra.mrb[0].mxu0 %v5577
        %v6355 = vpop.f32.mrb[0].mxu0
        %v6356 = vadd.f32 %v6195, %v6355
        %v6357 = vpop.f32.mrb[0].mxu0
        %v6358 = vpop.f32.mrb[0].mxu0
        %v6359 = vadd.f32 %v6198, %v6358
        %v6360 = vpop.f32.mrb[0].mxu0
        %6361 = vmatprep.mubr.bf16.mxu0 %v5585
        %6362 = vmatmul.mubr.bf16.gmra.mrb[0].mxu0 %v5584
        %v6363 = vpop.f32.mrb[0].mxu0
        %v6364 = vadd.f32 %v6203, %v6363
        %v6365 = vpop.f32.mrb[0].mxu0
        %v6366 = vpop.f32.mrb[0].mxu0
        %v6367 = vadd.f32 %v6206, %v6366
        %v6368 = vpop.f32.mrb[0].mxu0
        %6369 = vmatprep.mubr.bf16.mxu0 %v5592
        %6370 = vmatmul.mubr.bf16.gmra.mrb[0].mxu0 %v5591
        %v6371 = vpop.f32.mrb[0].mxu0
        %v6372 = vadd.f32 %v6211, %v6371
        %v6373 = vpop.f32.mrb[0].mxu0
        %v6374 = vpop.f32.mrb[0].mxu0
        %v6375 = vadd.f32 %v6214, %v6374
        %v6376 = vpop.f32.mrb[0].mxu0
        %6377 = vmatprep.mubr.bf16.mxu0 %v5599
        %6378 = vmatmul.mubr.bf16.gmra.mrb[0].mxu0 %v5598
        %v6379 = vpop.f32.mrb[0].mxu0
        %v6380 = vadd.f32 %v6219, %v6379
        %v6381 = vpop.f32.mrb[0].mxu0
        %v6382 = vpop.f32.mrb[0].mxu0
        %v6383 = vadd.f32 %v6222, %v6382
        %v6384 = vpop.f32.mrb[0].mxu0
        %6385 = vmatprep.mubr.bf16.mxu0 %v5606
        %6386 = vmatmul.mubr.bf16.gmra.mrb[0].mxu0 %v5605
        %v6387 = vpop.f32.mrb[0].mxu0
        %v6388 = vadd.f32 %v6227, %v6387
        %v6389 = vpop.f32.mrb[0].mxu0
        %v6390 = vpop.f32.mrb[0].mxu0
        %v6391 = vadd.f32 %v6230, %v6390
        %v6392 = vpop.f32.mrb[0].mxu0
        %6393 = vmatprep.mubr.bf16.mxu0 %v5613
        %6394 = vmatmul.mubr.bf16.gmra.mrb[0].mxu0 %v5612
        %v6395 = vpop.f32.mrb[0].mxu0
        %v6396 = vadd.f32 %v6235, %v6395
        %v6397 = vpop.f32.mrb[0].mxu0
        %v6398 = vpop.f32.mrb[0].mxu0
        %v6399 = vadd.f32 %v6238, %v6398
        %v6400 = vpop.f32.mrb[0].mxu0
        %6401 = vmatprep.mubr.bf16.mxu0 %v5620
        %6402 = vmatmul.mubr.bf16.gmra.mrb[0].mxu0 %v5619
        %v6403 = vpop.f32.mrb[0].mxu0
        %v6404 = vadd.f32 %v6243, %v6403
        %v6405 = vpop.f32.mrb[0].mxu0
        %v6406 = vpop.f32.mrb[0].mxu0
        %v6407 = vadd.f32 %v6246, %v6406
        %v6408 = vpop.f32.mrb[0].mxu0
        %6409 = vmatprep.mubr.bf16.mxu0 %v5627
        %6410 = vmatmul.mubr.bf16.gmra.mrb[0].mxu0 %v5626
        %v6411 = vpop.f32.mrb[0].mxu0
        %v6412 = vadd.f32 %v6251, %v6411
        %v6413 = vpop.f32.mrb[0].mxu0
        %v6414 = vpop.f32.mrb[0].mxu0
        %v6415 = vadd.f32 %v6254, %v6414
        %v6416 = vpop.f32.mrb[0].mxu0
        %6417 = vmatprep.mubr.bf16.mxu0 %v5634
        %6418 = vmatmul.mubr.bf16.gmra.mrb[0].mxu0 %v5633
        %v6419 = vpop.f32.mrb[0].mxu0
        %v6420 = vadd.f32 %v6259, %v6419
        %v6421 = vpop.f32.mrb[0].mxu0
        %v6422 = vpop.f32.mrb[0].mxu0
        %v6423 = vadd.f32 %v6262, %v6422
        %v6424 = vpop.f32.mrb[0].mxu0
        %6425 = vmatprep.mubr.bf16.mxu0 %v5641
        %6426 = vmatmul.mubr.bf16.gmra.mrb[0].mxu0 %v5640
        %v6427 = vpop.f32.mrb[0].mxu0
        %v6428 = vadd.f32 %v6267, %v6427
        %v6429 = vpop.f32.mrb[0].mxu0
        %v6430 = vpop.f32.mrb[0].mxu0
        %v6431 = vadd.f32 %v6270, %v6430
        %v6432 = vpop.f32.mrb[0].mxu0
        %6433 = vmatprep.mubr.bf16.mxu0 %v5648
        %6434 = vmatmul.mubr.bf16.gmra.mrb[0].mxu0 %v5647
        %v6435 = vpop.f32.mrb[0].mxu0
        %v6436 = vadd.f32 %v6275, %v6435
        %v6437 = vpop.f32.mrb[0].mxu0
        %v6438 = vpop.f32.mrb[0].mxu0
        %v6439 = vadd.f32 %v6278, %v6438
        %v6440 = vpop.f32.mrb[0].mxu0
        %6441 = vdwg.mxu0
        %6442 = vmatprep.subr.bf16.mxu0 0
        %6443 = vmatpush1.bf16.msra.mxu0 %v5996
        %6444 = vmatprep.subr.bf16.mxu0 0
        %6445 = vmatpush1.bf16.msra.mxu0 %v5997
        %6446 = vmatprep.subr.bf16.mxu0 0
        %6447 = vmatpush1.bf16.msra.mxu0 %v5998
        %6448 = vmatprep.subr.bf16.mxu0 0
        %6449 = vmatpush1.bf16.msra.mxu0 %v5999
        %6450 = vmatprep.subr.bf16.mxu0 0
        %6451 = vmatpush1.bf16.msra.mxu0 %v6000
        %6452 = vmatprep.subr.bf16.mxu0 0
        %6453 = vmatpush1.bf16.msra.mxu0 %v6001
        %6454 = vmatprep.subr.bf16.mxu0 0
        %6455 = vmatpush1.bf16.msra.mxu0 %v6002
        %6456 = vmatprep.subr.bf16.mxu0 0
        %6457 = vmatpush1.bf16.msra.mxu0 %v6003
        %6458 = vmatprep.subr.bf16.mxu0 0
        %6459 = vmatpush1.bf16.msra.mxu0 %v6004
        %6460 = vmatprep.subr.bf16.mxu0 0
        %6461 = vmatpush1.bf16.msra.mxu0 %v6005
        %6462 = vmatprep.subr.bf16.mxu0 0
        %6463 = vmatpush1.bf16.msra.mxu0 %v6006
        %6464 = vmatprep.subr.bf16.mxu0 0
        %6465 = vmatpush1.bf16.msra.mxu0 %v6007
        %6466 = vmatprep.subr.bf16.mxu0 0
        %6467 = vmatpush1.bf16.msra.mxu0 %v6008
        %6468 = vmatprep.subr.bf16.mxu0 0
        %6469 = vmatpush1.bf16.msra.mxu0 %v6009
        %6470 = vmatprep.subr.bf16.mxu0 0
        %6471 = vmatpush1.bf16.msra.mxu0 %v6010
        %6472 = vmatprep.subr.bf16.mxu0 0
        %6473 = vmatpush1.bf16.msra.mxu0 %v6011
        %6474 = vmatprep.mubr.bf16.mxu0 %v5545
        %6475 = vmatmul.mubr.bf16.gmra.mrb[0].mxu0 %v5544
        %v6476 = vpop.f32.mrb[0].mxu0
        %v6477 = vadd.f32 %v6316, %v6476
        %v6478 = vpop.f32.mrb[0].mxu0
        %v6479 = vpop.f32.mrb[0].mxu0
        %v6480 = vadd.f32 %v6319, %v6479
        %v6481 = vpop.f32.mrb[0].mxu0
        %6482 = vmatprep.mubr.bf16.mxu0 %v5552
        %6483 = vmatmul.mubr.bf16.gmra.mrb[0].mxu0 %v5551
        %v6484 = vpop.f32.mrb[0].mxu0
        %v6485 = vadd.f32 %v6324, %v6484
        %v6486 = vpop.f32.mrb[0].mxu0
        %v6487 = vpop.f32.mrb[0].mxu0
        %v6488 = vadd.f32 %v6327, %v6487
        %v6489 = vpop.f32.mrb[0].mxu0
        %6490 = vmatprep.mubr.bf16.mxu0 %v5559
        %6491 = vmatmul.mubr.bf16.gmra.mrb[0].mxu0 %v5558
        %v6492 = vpop.f32.mrb[0].mxu0
        %v6493 = vadd.f32 %v6332, %v6492
        %v6494 = vpop.f32.mrb[0].mxu0
        %v6495 = vpop.f32.mrb[0].mxu0
        %v6496 = vadd.f32 %v6335, %v6495
        %v6497 = vpop.f32.mrb[0].mxu0
        %6498 = vmatprep.mubr.bf16.mxu0 %v5566
        %6499 = vmatmul.mubr.bf16.gmra.mrb[0].mxu0 %v5565
        %v6500 = vpop.f32.mrb[0].mxu0
        %v6501 = vadd.f32 %v6340, %v6500
        %v6502 = vpop.f32.mrb[0].mxu0
        %v6503 = vpop.f32.mrb[0].mxu0
        %v6504 = vadd.f32 %v6343, %v6503
        %v6505 = vpop.f32.mrb[0].mxu0
        %6506 = vmatprep.mubr.bf16.mxu0 %v5573
        %6507 = vmatmul.mubr.bf16.gmra.mrb[0].mxu0 %v5572
        %v6508 = vpop.f32.mrb[0].mxu0
        %v6509 = vadd.f32 %v6348, %v6508
        %v6510 = vpop.f32.mrb[0].mxu0
        %v6511 = vpop.f32.mrb[0].mxu0
        %v6512 = vadd.f32 %v6351, %v6511
        %v6513 = vpop.f32.mrb[0].mxu0
        %6514 = vmatprep.mubr.bf16.mxu0 %v5580
        %6515 = vmatmul.mubr.bf16.gmra.mrb[0].mxu0 %v5579
        %v6516 = vpop.f32.mrb[0].mxu0
        %v6517 = vadd.f32 %v6356, %v6516
        %v6518 = vpop.f32.mrb[0].mxu0
        %v6519 = vpop.f32.mrb[0].mxu0
        %v6520 = vadd.f32 %v6359, %v6519
        %v6521 = vpop.f32.mrb[0].mxu0
        %6522 = vmatprep.mubr.bf16.mxu0 %v5587
        %6523 = vmatmul.mubr.bf16.gmra.mrb[0].mxu0 %v5586
        %v6524 = vpop.f32.mrb[0].mxu0
        %v6525 = vadd.f32 %v6364, %v6524
        %v6526 = vpop.f32.mrb[0].mxu0
        %v6527 = vpop.f32.mrb[0].mxu0
        %v6528 = vadd.f32 %v6367, %v6527
        %v6529 = vpop.f32.mrb[0].mxu0
        %6530 = vmatprep.mubr.bf16.mxu0 %v5594
        %6531 = vmatmul.mubr.bf16.gmra.mrb[0].mxu0 %v5593
        %v6532 = vpop.f32.mrb[0].mxu0
        %v6533 = vadd.f32 %v6372, %v6532
        %v6534 = vpop.f32.mrb[0].mxu0
        %v6535 = vpop.f32.mrb[0].mxu0
        %v6536 = vadd.f32 %v6375, %v6535
        %v6537 = vpop.f32.mrb[0].mxu0
        %6538 = vmatprep.mubr.bf16.mxu0 %v5601
        %6539 = vmatmul.mubr.bf16.gmra.mrb[0].mxu0 %v5600
        %v6540 = vpop.f32.mrb[0].mxu0
        %v6541 = vadd.f32 %v6380, %v6540
        %v6542 = vpop.f32.mrb[0].mxu0
        %v6543 = vpop.f32.mrb[0].mxu0
        %v6544 = vadd.f32 %v6383, %v6543
        %v6545 = vpop.f32.mrb[0].mxu0
        %6546 = vmatprep.mubr.bf16.mxu0 %v5608
        %6547 = vmatmul.mubr.bf16.gmra.mrb[0].mxu0 %v5607
        %v6548 = vpop.f32.mrb[0].mxu0
        %v6549 = vadd.f32 %v6388, %v6548
        %v6550 = vpop.f32.mrb[0].mxu0
        %v6551 = vpop.f32.mrb[0].mxu0
        %v6552 = vadd.f32 %v6391, %v6551
        %v6553 = vpop.f32.mrb[0].mxu0
        %6554 = vmatprep.mubr.bf16.mxu0 %v5615
        %6555 = vmatmul.mubr.bf16.gmra.mrb[0].mxu0 %v5614
        %v6556 = vpop.f32.mrb[0].mxu0
        %v6557 = vadd.f32 %v6396, %v6556
        %v6558 = vpop.f32.mrb[0].mxu0
        %v6559 = vpop.f32.mrb[0].mxu0
        %v6560 = vadd.f32 %v6399, %v6559
        %v6561 = vpop.f32.mrb[0].mxu0
        %6562 = vmatprep.mubr.bf16.mxu0 %v5622
        %6563 = vmatmul.mubr.bf16.gmra.mrb[0].mxu0 %v5621
        %v6564 = vpop.f32.mrb[0].mxu0
        %v6565 = vadd.f32 %v6404, %v6564
        %v6566 = vpop.f32.mrb[0].mxu0
        %v6567 = vpop.f32.mrb[0].mxu0
        %v6568 = vadd.f32 %v6407, %v6567
        %v6569 = vpop.f32.mrb[0].mxu0
        %6570 = vmatprep.mubr.bf16.mxu0 %v5629
        %6571 = vmatmul.mubr.bf16.gmra.mrb[0].mxu0 %v5628
        %v6572 = vpop.f32.mrb[0].mxu0
        %v6573 = vadd.f32 %v6412, %v6572
        %v6574 = vpop.f32.mrb[0].mxu0
        %v6575 = vpop.f32.mrb[0].mxu0
        %v6576 = vadd.f32 %v6415, %v6575
        %v6577 = vpop.f32.mrb[0].mxu0
        %6578 = vmatprep.mubr.bf16.mxu0 %v5636
        %6579 = vmatmul.mubr.bf16.gmra.mrb[0].mxu0 %v5635
        %v6580 = vpop.f32.mrb[0].mxu0
        %v6581 = vadd.f32 %v6420, %v6580
        %v6582 = vpop.f32.mrb[0].mxu0
        %v6583 = vpop.f32.mrb[0].mxu0
        %v6584 = vadd.f32 %v6423, %v6583
        %v6585 = vpop.f32.mrb[0].mxu0
        %6586 = vmatprep.mubr.bf16.mxu0 %v5643
        %6587 = vmatmul.mubr.bf16.gmra.mrb[0].mxu0 %v5642
        %v6588 = vpop.f32.mrb[0].mxu0
        %v6589 = vadd.f32 %v6428, %v6588
        %v6590 = vpop.f32.mrb[0].mxu0
        %v6591 = vpop.f32.mrb[0].mxu0
        %v6592 = vadd.f32 %v6431, %v6591
        %v6593 = vpop.f32.mrb[0].mxu0
        %6594 = vmatprep.mubr.bf16.mxu0 %v5650
        %6595 = vmatmul.mubr.bf16.gmra.mrb[0].mxu0 %v5649
        %v6596 = vpop.f32.mrb[0].mxu0
        %v6597 = vadd.f32 %v6436, %v6596
        %v6598 = vpop.f32.mrb[0].mxu0
        %v6599 = vpop.f32.mrb[0].mxu0
        %v6600 = vadd.f32 %v6439, %v6599
        %v6601 = vpop.f32.mrb[0].mxu0
        %6602 = vdwg.mxu0
        %6603 = vmatprep.subr.bf16.mxu0 0
        %6604 = vmatpush1.bf16.msra.mxu0 %v6012
        %6605 = vmatprep.subr.bf16.mxu0 0
        %6606 = vmatpush1.bf16.msra.mxu0 %v6013
        %6607 = vmatprep.subr.bf16.mxu0 0
        %6608 = vmatpush1.bf16.msra.mxu0 %v6014
        %6609 = vmatprep.subr.bf16.mxu0 0
        %6610 = vmatpush1.bf16.msra.mxu0 %v6015
        %6611 = vmatprep.subr.bf16.mxu0 0
        %6612 = vmatpush1.bf16.msra.mxu0 %v6016
        %6613 = vmatprep.subr.bf16.mxu0 0
        %6614 = vmatpush1.bf16.msra.mxu0 %v6017
        %6615 = vmatprep.subr.bf16.mxu0 0
        %6616 = vmatpush1.bf16.msra.mxu0 0
        %6617 = vmatprep.subr.bf16.mxu0 0
        %6618 = vmatpush1.bf16.msra.mxu0 0
        %6619 = vmatprep.subr.bf16.mxu0 0
        %6620 = vmatpush1.bf16.msra.mxu0 0
        %6621 = vmatprep.subr.bf16.mxu0 0
        %6622 = vmatpush1.bf16.msra.mxu0 0
        %6623 = vmatprep.subr.bf16.mxu0 0
        %6624 = vmatpush1.bf16.msra.mxu0 0
        %6625 = vmatprep.subr.bf16.mxu0 0
        %6626 = vmatpush1.bf16.msra.mxu0 0
        %6627 = vmatprep.subr.bf16.mxu0 0
        %6628 = vmatpush1.bf16.msra.mxu0 0
        %6629 = vmatprep.subr.bf16.mxu0 0
        %6630 = vmatpush1.bf16.msra.mxu0 0
        %6631 = vmatprep.subr.bf16.mxu0 0
        %6632 = vmatpush1.bf16.msra.mxu0 0
        %6633 = vmatprep.subr.bf16.mxu0 0
        %6634 = vmatpush1.bf16.msra.mxu0 0
        %6635 = vmatprep.mubr.bf16.mxu0 0
        %6636 = vmatmul.mubr.bf16.gmra.mrb[0].mxu0 %v6073
        %v6637 = vpop.f32.mrb[0].mxu0
        %v6638 = vadd.f32 %v6477, %v6637
        %v6639 = vpop.f32.mrb[0].mxu0
        %v6640 = vpop.f32.mrb[0].mxu0
        %v6641 = vadd.f32 %v6480, %v6640
        %v6642 = vpop.f32.mrb[0].mxu0
        %6643 = vmatprep.mubr.bf16.mxu0 0
        %6644 = vmatmul.mubr.bf16.gmra.mrb[0].mxu0 %v6076
        %v6645 = vpop.f32.mrb[0].mxu0
        %v6646 = vadd.f32 %v6485, %v6645
        %v6647 = vpop.f32.mrb[0].mxu0
        %v6648 = vpop.f32.mrb[0].mxu0
        %v6649 = vadd.f32 %v6488, %v6648
        %v6650 = vpop.f32.mrb[0].mxu0
        %6651 = vmatprep.mubr.bf16.mxu0 0
        %6652 = vmatmul.mubr.bf16.gmra.mrb[0].mxu0 %v6079
        %v6653 = vpop.f32.mrb[0].mxu0
        %v6654 = vadd.f32 %v6493, %v6653
        %v6655 = vpop.f32.mrb[0].mxu0
        %v6656 = vpop.f32.mrb[0].mxu0
        %v6657 = vadd.f32 %v6496, %v6656
        %v6658 = vpop.f32.mrb[0].mxu0
        %6659 = vmatprep.mubr.bf16.mxu0 0
        %6660 = vmatmul.mubr.bf16.gmra.mrb[0].mxu0 %v6082
        %v6661 = vpop.f32.mrb[0].mxu0
        %v6662 = vadd.f32 %v6501, %v6661
        %v6663 = vpop.f32.mrb[0].mxu0
        %v6664 = vpop.f32.mrb[0].mxu0
        %v6665 = vadd.f32 %v6504, %v6664
        %v6666 = vpop.f32.mrb[0].mxu0
        %6667 = vmatprep.mubr.bf16.mxu0 0
        %6668 = vmatmul.mubr.bf16.gmra.mrb[0].mxu0 %v6085
        %v6669 = vpop.f32.mrb[0].mxu0
        %v6670 = vadd.f32 %v6509, %v6669
        %v6671 = vpop.f32.mrb[0].mxu0
        %v6672 = vpop.f32.mrb[0].mxu0
        %v6673 = vadd.f32 %v6512, %v6672
        %v6674 = vpop.f32.mrb[0].mxu0
        %6675 = vmatprep.mubr.bf16.mxu0 0
        %6676 = vmatmul.mubr.bf16.gmra.mrb[0].mxu0 %v6088
        %v6677 = vpop.f32.mrb[0].mxu0
        %v6678 = vadd.f32 %v6517, %v6677
        %v6679 = vpop.f32.mrb[0].mxu0
        %v6680 = vpop.f32.mrb[0].mxu0
        %v6681 = vadd.f32 %v6520, %v6680
        %v6682 = vpop.f32.mrb[0].mxu0
        %6683 = vmatprep.mubr.bf16.mxu0 0
        %6684 = vmatmul.mubr.bf16.gmra.mrb[0].mxu0 %v6091
        %v6685 = vpop.f32.mrb[0].mxu0
        %v6686 = vadd.f32 %v6525, %v6685
        %v6687 = vpop.f32.mrb[0].mxu0
        %v6688 = vpop.f32.mrb[0].mxu0
        %v6689 = vadd.f32 %v6528, %v6688
        %v6690 = vpop.f32.mrb[0].mxu0
        %6691 = vmatprep.mubr.bf16.mxu0 0
        %6692 = vmatmul.mubr.bf16.gmra.mrb[0].mxu0 %v6094
        %v6693 = vpop.f32.mrb[0].mxu0
        %v6694 = vadd.f32 %v6533, %v6693
        %v6695 = vpop.f32.mrb[0].mxu0
        %v6696 = vpop.f32.mrb[0].mxu0
        %v6697 = vadd.f32 %v6536, %v6696
        %v6698 = vpop.f32.mrb[0].mxu0
        %6699 = vmatprep.mubr.bf16.mxu0 0
        %6700 = vmatmul.mubr.bf16.gmra.mrb[0].mxu0 %v6097
        %v6701 = vpop.f32.mrb[0].mxu0
        %v6702 = vadd.f32 %v6541, %v6701
        %v6703 = vpop.f32.mrb[0].mxu0
        %v6704 = vpop.f32.mrb[0].mxu0
        %v6705 = vadd.f32 %v6544, %v6704
        %v6706 = vpop.f32.mrb[0].mxu0
        %6707 = vmatprep.mubr.bf16.mxu0 0
        %6708 = vmatmul.mubr.bf16.gmra.mrb[0].mxu0 %v6100
        %v6709 = vpop.f32.mrb[0].mxu0
        %v6710 = vadd.f32 %v6549, %v6709
        %v6711 = vpop.f32.mrb[0].mxu0
        %v6712 = vpop.f32.mrb[0].mxu0
        %v6713 = vadd.f32 %v6552, %v6712
        %v6714 = vpop.f32.mrb[0].mxu0
        %6715 = vmatprep.mubr.bf16.mxu0 0
        %6716 = vmatmul.mubr.bf16.gmra.mrb[0].mxu0 %v6103
        %v6717 = vpop.f32.mrb[0].mxu0
        %v6718 = vadd.f32 %v6557, %v6717
        %v6719 = vpop.f32.mrb[0].mxu0
        %v6720 = vpop.f32.mrb[0].mxu0
        %v6721 = vadd.f32 %v6560, %v6720
        %v6722 = vpop.f32.mrb[0].mxu0
        %6723 = vmatprep.mubr.bf16.mxu0 0
        %6724 = vmatmul.mubr.bf16.gmra.mrb[0].mxu0 %v6106
        %v6725 = vpop.f32.mrb[0].mxu0
        %v6726 = vadd.f32 %v6565, %v6725
        %v6727 = vpop.f32.mrb[0].mxu0
        %v6728 = vpop.f32.mrb[0].mxu0
        %v6729 = vadd.f32 %v6568, %v6728
        %v6730 = vpop.f32.mrb[0].mxu0
        %6731 = vmatprep.mubr.bf16.mxu0 0
        %6732 = vmatmul.mubr.bf16.gmra.mrb[0].mxu0 %v6109
        %v6733 = vpop.f32.mrb[0].mxu0
        %v6734 = vadd.f32 %v6573, %v6733
        %v6735 = vpop.f32.mrb[0].mxu0
        %v6736 = vpop.f32.mrb[0].mxu0
        %v6737 = vadd.f32 %v6576, %v6736
        %v6738 = vpop.f32.mrb[0].mxu0
        %6739 = vmatprep.mubr.bf16.mxu0 0
        %6740 = vmatmul.mubr.bf16.gmra.mrb[0].mxu0 %v6112
        %v6741 = vpop.f32.mrb[0].mxu0
        %v6742 = vadd.f32 %v6581, %v6741
        %v6743 = vpop.f32.mrb[0].mxu0
        %v6744 = vpop.f32.mrb[0].mxu0
        %v6745 = vadd.f32 %v6584, %v6744
        %v6746 = vpop.f32.mrb[0].mxu0
        %6747 = vmatprep.mubr.bf16.mxu0 0
        %6748 = vmatmul.mubr.bf16.gmra.mrb[0].mxu0 %v6115
        %v6749 = vpop.f32.mrb[0].mxu0
        %v6750 = vadd.f32 %v6589, %v6749
        %v6751 = vpop.f32.mrb[0].mxu0
        %v6752 = vpop.f32.mrb[0].mxu0
        %v6753 = vadd.f32 %v6592, %v6752
        %v6754 = vpop.f32.mrb[0].mxu0
        %6755 = vmatprep.mubr.bf16.mxu0 0
        %6756 = vmatmul.mubr.bf16.gmra.mrb[0].mxu0 %v6118
        %v6757 = vpop.f32.mrb[0].mxu0
        %v6758 = vadd.f32 %v6597, %v6757
        %v6759 = vpop.f32.mrb[0].mxu0
        %v6760 = vpop.f32.mrb[0].mxu0
        %v6761 = vadd.f32 %v6600, %v6760
        %v6762 = vpop.f32.mrb[0].mxu0
        %6763 = vdwg.mxu0
        %v6764 = vld [vmem:[%s7] sm:$0x1]
        %v6766 = vlaneseq
        %v6767 = vshrl.u32 %v6766, 7
        %v6768 = vsub.s32 0, %v6767
        %v6769 = vrot.slane %v6764, %v6768
        %v6771 = vmul.f32 %v6638, %v6769
        %v6772 = vmul.f32 %v6641, %v6769
        %v6773 = vmul.f32 %v6646, %v6769
        %v6774 = vmul.f32 %v6649, %v6769
        %v6775 = vmul.f32 %v6654, %v6769
        %v6776 = vmul.f32 %v6657, %v6769
        %v6777 = vmul.f32 %v6662, %v6769
        %v6778 = vmul.f32 %v6665, %v6769
        %v6779 = vmul.f32 %v6670, %v6769
        %v6780 = vmul.f32 %v6673, %v6769
        %v6781 = vmul.f32 %v6678, %v6769
        %v6782 = vmul.f32 %v6681, %v6769
        %v6783 = vmul.f32 %v6686, %v6769
        %v6784 = vmul.f32 %v6689, %v6769
        %v6785 = vmul.f32 %v6694, %v6769
        %v6786 = vmul.f32 %v6697, %v6769
        %v6787 = vmul.f32 %v6702, %v6769
        %v6788 = vmul.f32 %v6705, %v6769
        %v6789 = vmul.f32 %v6710, %v6769
        %v6790 = vmul.f32 %v6713, %v6769
        %v6791 = vmul.f32 %v6718, %v6769
        %v6792 = vmul.f32 %v6721, %v6769
        %v6793 = vmul.f32 %v6726, %v6769
        %v6794 = vmul.f32 %v6729, %v6769
        %v6795 = vmul.f32 %v6734, %v6769
        %v6796 = vmul.f32 %v6737, %v6769
        %v6797 = vmul.f32 %v6742, %v6769
        %v6798 = vmul.f32 %v6745, %v6769
        %v6799 = vmul.f32 %v6750, %v6769
        %v6800 = vmul.f32 %v6753, %v6769
        %v6801 = vmul.f32 %v6758, %v6769
        %v6802 = vmul.f32 %v6761, %v6769
        %v6803 = vld [vmem:[%s8] sm:$0x1]
        %v6805 = vlaneseq
        %v6806 = vshrl.u32 %v6805, 7
        %v6807 = vsub.s32 0, %v6806
        %v6808 = vrot.slane %v6803, %v6807
        %v6810 = vadd.f32 %v6771, %v6808
        %v6811 = vadd.f32 %v6772, %v6808
        %v6812 = vadd.f32 %v6773, %v6808
        %v6813 = vadd.f32 %v6774, %v6808
        %v6814 = vadd.f32 %v6775, %v6808
        %v6815 = vadd.f32 %v6776, %v6808
        %v6816 = vadd.f32 %v6777, %v6808
        %v6817 = vadd.f32 %v6778, %v6808
        %v6818 = vadd.f32 %v6779, %v6808
        %v6819 = vadd.f32 %v6780, %v6808
        %v6820 = vadd.f32 %v6781, %v6808
        %v6821 = vadd.f32 %v6782, %v6808
        %v6822 = vadd.f32 %v6783, %v6808
        %v6823 = vadd.f32 %v6784, %v6808
        %v6824 = vadd.f32 %v6785, %v6808
        %v6825 = vadd.f32 %v6786, %v6808
        %v6826 = vadd.f32 %v6787, %v6808
        %v6827 = vadd.f32 %v6788, %v6808
        %v6828 = vadd.f32 %v6789, %v6808
        %v6829 = vadd.f32 %v6790, %v6808
        %v6830 = vadd.f32 %v6791, %v6808
        %v6831 = vadd.f32 %v6792, %v6808
        %v6832 = vadd.f32 %v6793, %v6808
        %v6833 = vadd.f32 %v6794, %v6808
        %v6834 = vadd.f32 %v6795, %v6808
        %v6835 = vadd.f32 %v6796, %v6808
        %v6836 = vadd.f32 %v6797, %v6808
        %v6837 = vadd.f32 %v6798, %v6808
        %v6838 = vadd.f32 %v6799, %v6808
        %v6839 = vadd.f32 %v6800, %v6808
        %v6840 = vadd.f32 %v6801, %v6808
        %v6841 = vadd.f32 %v6802, %v6808
        %v6842 = vmax.f32 %v6810, 0.0
        %v6843 = vmax.f32 %v6811, 0.0
        %v6844 = vmax.f32 %v6812, 0.0
        %v6845 = vmax.f32 %v6813, 0.0
        %v6846 = vmax.f32 %v6814, 0.0
        %v6847 = vmax.f32 %v6815, 0.0
        %v6848 = vmax.f32 %v6816, 0.0
        %v6849 = vmax.f32 %v6817, 0.0
        %v6850 = vmax.f32 %v6818, 0.0
        %v6851 = vmax.f32 %v6819, 0.0
        %v6852 = vmax.f32 %v6820, 0.0
        %v6853 = vmax.f32 %v6821, 0.0
        %v6854 = vmax.f32 %v6822, 0.0
        %v6855 = vmax.f32 %v6823, 0.0
        %v6856 = vmax.f32 %v6824, 0.0
        %v6857 = vmax.f32 %v6825, 0.0
        %v6858 = vmax.f32 %v6826, 0.0
        %v6859 = vmax.f32 %v6827, 0.0
        %v6860 = vmax.f32 %v6828, 0.0
        %v6861 = vmax.f32 %v6829, 0.0
        %v6862 = vmax.f32 %v6830, 0.0
        %v6863 = vmax.f32 %v6831, 0.0
        %v6864 = vmax.f32 %v6832, 0.0
        %v6865 = vmax.f32 %v6833, 0.0
        %v6866 = vmax.f32 %v6834, 0.0
        %v6867 = vmax.f32 %v6835, 0.0
        %v6868 = vmax.f32 %v6836, 0.0
        %v6869 = vmax.f32 %v6837, 0.0
        %v6870 = vmax.f32 %v6838, 0.0
        %v6871 = vmax.f32 %v6839, 0.0
        %v6872 = vmax.f32 %v6840, 0.0
        %v6873 = vmax.f32 %v6841, 0.0
        %v6874 = vpack.c.bf16 %v6843, %v6842
        %v6875 = vpack.c.bf16 %v6845, %v6844
        %v6876 = vpack.c.bf16 %v6847, %v6846
        %v6877 = vpack.c.bf16 %v6849, %v6848
        %v6878 = vpack.c.bf16 %v6851, %v6850
        %v6879 = vpack.c.bf16 %v6853, %v6852
        %v6880 = vpack.c.bf16 %v6855, %v6854
        %v6881 = vpack.c.bf16 %v6857, %v6856
        %v6882 = vpack.c.bf16 %v6859, %v6858
        %v6883 = vpack.c.bf16 %v6861, %v6860
        %v6884 = vpack.c.bf16 %v6863, %v6862
        %v6885 = vpack.c.bf16 %v6865, %v6864
        %v6886 = vpack.c.bf16 %v6867, %v6866
        %v6887 = vpack.c.bf16 %v6869, %v6868
        %v6888 = vpack.c.bf16 %v6871, %v6870
        %v6889 = vpack.c.bf16 %v6873, %v6872
        %v6890 = vld [vmem:[%s9] sm:$0xf]
        %v6891 = vld [vmem:[%s9 + $0x4] sm:$0xf]
        %v6892 = vld [vmem:[%s9 + $0x8] sm:$0xf]
        %v6893 = vld [vmem:[%s9 + $0xc] sm:$0xf]
        %v6898 = vunpack.c.l.b16 %v6890
        %v6899 = vunpack.c.l.b16 %v6891
        %v6900 = vunpack.c.l.b16 %v6892
        %v6901 = vunpack.c.l.b16 %v6893
        %v6902 = vpack.c.b16 %v6899, %v6898
        %v6903 = vpack.c.b16 %v6901, %v6900
        %v6907 = vsel %vm3124, %v6874, 0
        %v6910 = vsel %vm3124, %v6875, 0
        %v6913 = vsel %vm3124, %v6876, 0
        %v6916 = vsel %vm3124, %v6877, 0
        %v6919 = vsel %vm3124, %v6878, 0
        %v6922 = vsel %vm3124, %v6879, 0
        %v6925 = vsel %vm3124, %v6880, 0
        %v6928 = vsel %vm3124, %v6881, 0
        %v6931 = vsel %vm3124, %v6882, 0
        %v6934 = vsel %vm3124, %v6883, 0
        %v6937 = vsel %vm3124, %v6884, 0
        %v6940 = vsel %vm3124, %v6885, 0
        %v6943 = vsel %vm3124, %v6886, 0
        %v6946 = vsel %vm3124, %v6887, 0
        %v6949 = vsel %vm3124, %v6888, 0
        %v6952 = vsel %vm3124, %v6889, 0
        %6954 = vmatprep.subr.bf16.mxu0 0
        %6955 = vmatpush1.bf16.msra.mxu0 %v6902
        %6956 = vmatprep.subr.bf16.mxu0 0
        %6957 = vmatpush1.bf16.msra.mxu0 %v6903
        %6958 = vmatprep.subr.bf16.mxu0 0
        %6959 = vmatpush1.bf16.msra.mxu0 0
        %6960 = vmatprep.subr.bf16.mxu0 0
        %6961 = vmatpush1.bf16.msra.mxu0 0
        %6962 = vmatprep.subr.bf16.mxu0 0
        %6963 = vmatpush1.bf16.msra.mxu0 0
        %6964 = vmatprep.subr.bf16.mxu0 0
        %6965 = vmatpush1.bf16.msra.mxu0 0
        %6966 = vmatprep.subr.bf16.mxu0 0
        %6967 = vmatpush1.bf16.msra.mxu0 0
        %6968 = vmatprep.subr.bf16.mxu0 0
        %6969 = vmatpush1.bf16.msra.mxu0 0
        %6970 = vmatprep.subr.bf16.mxu0 0
        %6971 = vmatpush1.bf16.msra.mxu0 0
        %6972 = vmatprep.subr.bf16.mxu0 0
        %6973 = vmatpush1.bf16.msra.mxu0 0
        %6974 = vmatprep.subr.bf16.mxu0 0
        %6975 = vmatpush1.bf16.msra.mxu0 0
        %6976 = vmatprep.subr.bf16.mxu0 0
        %6977 = vmatpush1.bf16.msra.mxu0 0
        %6978 = vmatprep.subr.bf16.mxu0 0
        %6979 = vmatpush1.bf16.msra.mxu0 0
        %6980 = vmatprep.subr.bf16.mxu0 0
        %6981 = vmatpush1.bf16.msra.mxu0 0
        %6982 = vmatprep.subr.bf16.mxu0 0
        %6983 = vmatpush1.bf16.msra.mxu0 0
        %6984 = vmatprep.subr.bf16.mxu0 0
        %6985 = vmatpush1.bf16.msra.mxu0 0
        %6986 = vmatprep.mubr.bf16.mxu0 0
        %6987 = vmatmul.mubr.bf16.gmra.mrb[0].mxu0 %v6907
        %v6988 = vpop.f32.mrb[0].mxu0
        %v6989 = vadd.f32 0.0, %v6988
        %v6990 = vpop.f32.mrb[0].mxu0
        %v6991 = vpop.f32.mrb[0].mxu0
        %v6992 = vadd.f32 0.0, %v6991
        %v6993 = vpop.f32.mrb[0].mxu0
        %6994 = vmatprep.mubr.bf16.mxu0 0
        %6995 = vmatmul.mubr.bf16.gmra.mrb[0].mxu0 %v6910
        %v6996 = vpop.f32.mrb[0].mxu0
        %v6997 = vadd.f32 0.0, %v6996
        %v6998 = vpop.f32.mrb[0].mxu0
        %v6999 = vpop.f32.mrb[0].mxu0
        %v7000 = vadd.f32 0.0, %v6999
        %v7001 = vpop.f32.mrb[0].mxu0
        %7002 = vmatprep.mubr.bf16.mxu0 0
        %7003 = vmatmul.mubr.bf16.gmra.mrb[0].mxu0 %v6913
        %v7004 = vpop.f32.mrb[0].mxu0
        %v7005 = vadd.f32 0.0, %v7004
        %v7006 = vpop.f32.mrb[0].mxu0
        %v7007 = vpop.f32.mrb[0].mxu0
        %v7008 = vadd.f32 0.0, %v7007
        %v7009 = vpop.f32.mrb[0].mxu0
        %7010 = vmatprep.mubr.bf16.mxu0 0
        %7011 = vmatmul.mubr.bf16.gmra.mrb[0].mxu0 %v6916
        %v7012 = vpop.f32.mrb[0].mxu0
        %v7013 = vadd.f32 0.0, %v7012
        %v7014 = vpop.f32.mrb[0].mxu0
        %v7015 = vpop.f32.mrb[0].mxu0
        %v7016 = vadd.f32 0.0, %v7015
        %v7017 = vpop.f32.mrb[0].mxu0
        %7018 = vmatprep.mubr.bf16.mxu0 0
        %7019 = vmatmul.mubr.bf16.gmra.mrb[0].mxu0 %v6919
        %v7020 = vpop.f32.mrb[0].mxu0
        %v7021 = vadd.f32 0.0, %v7020
        %v7022 = vpop.f32.mrb[0].mxu0
        %v7023 = vpop.f32.mrb[0].mxu0
        %v7024 = vadd.f32 0.0, %v7023
        %v7025 = vpop.f32.mrb[0].mxu0
        %7026 = vmatprep.mubr.bf16.mxu0 0
        %7027 = vmatmul.mubr.bf16.gmra.mrb[0].mxu0 %v6922
        %v7028 = vpop.f32.mrb[0].mxu0
        %v7029 = vadd.f32 0.0, %v7028
        %v7030 = vpop.f32.mrb[0].mxu0
        %v7031 = vpop.f32.mrb[0].mxu0
        %v7032 = vadd.f32 0.0, %v7031
        %v7033 = vpop.f32.mrb[0].mxu0
        %7034 = vmatprep.mubr.bf16.mxu0 0
        %7035 = vmatmul.mubr.bf16.gmra.mrb[0].mxu0 %v6925
        %v7036 = vpop.f32.mrb[0].mxu0
        %v7037 = vadd.f32 0.0, %v7036
        %v7038 = vpop.f32.mrb[0].mxu0
        %v7039 = vpop.f32.mrb[0].mxu0
        %v7040 = vadd.f32 0.0, %v7039
        %v7041 = vpop.f32.mrb[0].mxu0
        %7042 = vmatprep.mubr.bf16.mxu0 0
        %7043 = vmatmul.mubr.bf16.gmra.mrb[0].mxu0 %v6928
        %v7044 = vpop.f32.mrb[0].mxu0
        %v7045 = vadd.f32 0.0, %v7044
        %v7046 = vpop.f32.mrb[0].mxu0
        %v7047 = vpop.f32.mrb[0].mxu0
        %v7048 = vadd.f32 0.0, %v7047
        %v7049 = vpop.f32.mrb[0].mxu0
        %7050 = vmatprep.mubr.bf16.mxu0 0
        %7051 = vmatmul.mubr.bf16.gmra.mrb[0].mxu0 %v6931
        %v7052 = vpop.f32.mrb[0].mxu0
        %v7053 = vadd.f32 0.0, %v7052
        %v7054 = vpop.f32.mrb[0].mxu0
        %v7055 = vpop.f32.mrb[0].mxu0
        %v7056 = vadd.f32 0.0, %v7055
        %v7057 = vpop.f32.mrb[0].mxu0
        %7058 = vmatprep.mubr.bf16.mxu0 0
        %7059 = vmatmul.mubr.bf16.gmra.mrb[0].mxu0 %v6934
        %v7060 = vpop.f32.mrb[0].mxu0
        %v7061 = vadd.f32 0.0, %v7060
        %v7062 = vpop.f32.mrb[0].mxu0
        %v7063 = vpop.f32.mrb[0].mxu0
        %v7064 = vadd.f32 0.0, %v7063
        %v7065 = vpop.f32.mrb[0].mxu0
        %7066 = vmatprep.mubr.bf16.mxu0 0
        %7067 = vmatmul.mubr.bf16.gmra.mrb[0].mxu0 %v6937
        %v7068 = vpop.f32.mrb[0].mxu0
        %v7069 = vadd.f32 0.0, %v7068
        %v7070 = vpop.f32.mrb[0].mxu0
        %v7071 = vpop.f32.mrb[0].mxu0
        %v7072 = vadd.f32 0.0, %v7071
        %v7073 = vpop.f32.mrb[0].mxu0
        %7074 = vmatprep.mubr.bf16.mxu0 0
        %7075 = vmatmul.mubr.bf16.gmra.mrb[0].mxu0 %v6940
        %v7076 = vpop.f32.mrb[0].mxu0
        %v7077 = vadd.f32 0.0, %v7076
        %v7078 = vpop.f32.mrb[0].mxu0
        %v7079 = vpop.f32.mrb[0].mxu0
        %v7080 = vadd.f32 0.0, %v7079
        %v7081 = vpop.f32.mrb[0].mxu0
        %7082 = vmatprep.mubr.bf16.mxu0 0
        %7083 = vmatmul.mubr.bf16.gmra.mrb[0].mxu0 %v6943
        %v7084 = vpop.f32.mrb[0].mxu0
        %v7085 = vadd.f32 0.0, %v7084
        %v7086 = vpop.f32.mrb[0].mxu0
        %v7087 = vpop.f32.mrb[0].mxu0
        %v7088 = vadd.f32 0.0, %v7087
        %v7089 = vpop.f32.mrb[0].mxu0
        %7090 = vmatprep.mubr.bf16.mxu0 0
        %7091 = vmatmul.mubr.bf16.gmra.mrb[0].mxu0 %v6946
        %v7092 = vpop.f32.mrb[0].mxu0
        %v7093 = vadd.f32 0.0, %v7092
        %v7094 = vpop.f32.mrb[0].mxu0
        %v7095 = vpop.f32.mrb[0].mxu0
        %v7096 = vadd.f32 0.0, %v7095
        %v7097 = vpop.f32.mrb[0].mxu0
        %7098 = vmatprep.mubr.bf16.mxu0 0
        %7099 = vmatmul.mubr.bf16.gmra.mrb[0].mxu0 %v6949
        %v7100 = vpop.f32.mrb[0].mxu0
        %v7101 = vadd.f32 0.0, %v7100
        %v7102 = vpop.f32.mrb[0].mxu0
        %v7103 = vpop.f32.mrb[0].mxu0
        %v7104 = vadd.f32 0.0, %v7103
        %v7105 = vpop.f32.mrb[0].mxu0
        %7106 = vmatprep.mubr.bf16.mxu0 0
        %7107 = vmatmul.mubr.bf16.gmra.mrb[0].mxu0 %v6952
        %v7108 = vpop.f32.mrb[0].mxu0
        %v7109 = vadd.f32 0.0, %v7108
        %v7110 = vpop.f32.mrb[0].mxu0
        %v7111 = vpop.f32.mrb[0].mxu0
        %v7112 = vadd.f32 0.0, %v7111
        %v7113 = vpop.f32.mrb[0].mxu0
        %7114 = vdwg.mxu0
        %v7115 = vld [vmem:[%s10] sm:$0x1]
        %v7117 = vlaneseq
        %v7118 = vshrl.u32 %v7117, 7
        %v7119 = vsub.s32 0, %v7118
        %v7120 = vrot.slane %v7115, %v7119
        %v7122 = vmul.f32 %v6989, %v7120
        %v7123 = vmul.f32 %v6992, %v7120
        %v7124 = vmul.f32 %v6997, %v7120
        %v7125 = vmul.f32 %v7000, %v7120
        %v7126 = vmul.f32 %v7005, %v7120
        %v7127 = vmul.f32 %v7008, %v7120
        %v7128 = vmul.f32 %v7013, %v7120
        %v7129 = vmul.f32 %v7016, %v7120
        %v7130 = vmul.f32 %v7021, %v7120
        %v7131 = vmul.f32 %v7024, %v7120
        %v7132 = vmul.f32 %v7029, %v7120
        %v7133 = vmul.f32 %v7032, %v7120
        %v7134 = vmul.f32 %v7037, %v7120
        %v7135 = vmul.f32 %v7040, %v7120
        %v7136 = vmul.f32 %v7045, %v7120
        %v7137 = vmul.f32 %v7048, %v7120
        %v7138 = vmul.f32 %v7053, %v7120
        %v7139 = vmul.f32 %v7056, %v7120
        %v7140 = vmul.f32 %v7061, %v7120
        %v7141 = vmul.f32 %v7064, %v7120
        %v7142 = vmul.f32 %v7069, %v7120
        %v7143 = vmul.f32 %v7072, %v7120
        %v7144 = vmul.f32 %v7077, %v7120
        %v7145 = vmul.f32 %v7080, %v7120
        %v7146 = vmul.f32 %v7085, %v7120
        %v7147 = vmul.f32 %v7088, %v7120
        %v7148 = vmul.f32 %v7093, %v7120
        %v7149 = vmul.f32 %v7096, %v7120
        %v7150 = vmul.f32 %v7101, %v7120
        %v7151 = vmul.f32 %v7104, %v7120
        %v7152 = vmul.f32 %v7109, %v7120
        %v7153 = vmul.f32 %v7112, %v7120
        %v7154 = vld [vmem:[%s11] sm:$0x1]
        %v7156 = vlaneseq
        %v7157 = vshrl.u32 %v7156, 7
        %v7158 = vsub.s32 0, %v7157
        %v7159 = vrot.slane %v7154, %v7158
        %v7161 = vadd.f32 %v7122, %v7159
        %v7162 = vadd.f32 %v7123, %v7159
        %v7163 = vadd.f32 %v7124, %v7159
        %v7164 = vadd.f32 %v7125, %v7159
        %v7165 = vadd.f32 %v7126, %v7159
        %v7166 = vadd.f32 %v7127, %v7159
        %v7167 = vadd.f32 %v7128, %v7159
        %v7168 = vadd.f32 %v7129, %v7159
        %v7169 = vadd.f32 %v7130, %v7159
        %v7170 = vadd.f32 %v7131, %v7159
        %v7171 = vadd.f32 %v7132, %v7159
        %v7172 = vadd.f32 %v7133, %v7159
        %v7173 = vadd.f32 %v7134, %v7159
        %v7174 = vadd.f32 %v7135, %v7159
        %v7175 = vadd.f32 %v7136, %v7159
        %v7176 = vadd.f32 %v7137, %v7159
        %v7177 = vadd.f32 %v7138, %v7159
        %v7178 = vadd.f32 %v7139, %v7159
        %v7179 = vadd.f32 %v7140, %v7159
        %v7180 = vadd.f32 %v7141, %v7159
        %v7181 = vadd.f32 %v7142, %v7159
        %v7182 = vadd.f32 %v7143, %v7159
        %v7183 = vadd.f32 %v7144, %v7159
        %v7184 = vadd.f32 %v7145, %v7159
        %v7185 = vadd.f32 %v7146, %v7159
        %v7186 = vadd.f32 %v7147, %v7159
        %v7187 = vadd.f32 %v7148, %v7159
        %v7188 = vadd.f32 %v7149, %v7159
        %v7189 = vadd.f32 %v7150, %v7159
        %v7190 = vadd.f32 %v7151, %v7159
        %v7191 = vadd.f32 %v7152, %v7159
        %v7192 = vadd.f32 %v7153, %v7159
        %v7193 = vadd.f32 %v7161, %v571
        %v7194 = vadd.f32 %v7162, %v572
        %v7195 = vadd.f32 %v7163, %v573
        %v7196 = vadd.f32 %v7164, %v574
        %v7197 = vadd.f32 %v7165, %v575
        %v7198 = vadd.f32 %v7166, %v576
        %v7199 = vadd.f32 %v7167, %v577
        %v7200 = vadd.f32 %v7168, %v578
        %v7201 = vadd.f32 %v7169, %v579
        %v7202 = vadd.f32 %v7170, %v580
        %v7203 = vadd.f32 %v7171, %v581
        %v7204 = vadd.f32 %v7172, %v582
        %v7205 = vadd.f32 %v7173, %v583
        %v7206 = vadd.f32 %v7174, %v584
        %v7207 = vadd.f32 %v7175, %v585
        %v7208 = vadd.f32 %v7176, %v586
        %v7209 = vadd.f32 %v7177, %v587
        %v7210 = vadd.f32 %v7178, %v588
        %v7211 = vadd.f32 %v7179, %v589
        %v7212 = vadd.f32 %v7180, %v590
        %v7213 = vadd.f32 %v7181, %v591
        %v7214 = vadd.f32 %v7182, %v592
        %v7215 = vadd.f32 %v7183, %v593
        %v7216 = vadd.f32 %v7184, %v594
        %v7217 = vadd.f32 %v7185, %v595
        %v7218 = vadd.f32 %v7186, %v596
        %v7219 = vadd.f32 %v7187, %v597
        %v7220 = vadd.f32 %v7188, %v598
        %v7221 = vadd.f32 %v7189, %v599
        %v7222 = vadd.f32 %v7190, %v600
        %v7223 = vadd.f32 %v7191, %v601
        %v7224 = vadd.f32 %v7192, %v602
        %v7225 = vmax.f32 %v7193, 0.0
        %v7226 = vmax.f32 %v7194, 0.0
        %v7227 = vmax.f32 %v7195, 0.0
        %v7228 = vmax.f32 %v7196, 0.0
        %v7229 = vmax.f32 %v7197, 0.0
        %v7230 = vmax.f32 %v7198, 0.0
        %v7231 = vmax.f32 %v7199, 0.0
        %v7232 = vmax.f32 %v7200, 0.0
        %v7233 = vmax.f32 %v7201, 0.0
        %v7234 = vmax.f32 %v7202, 0.0
        %v7235 = vmax.f32 %v7203, 0.0
        %v7236 = vmax.f32 %v7204, 0.0
        %v7237 = vmax.f32 %v7205, 0.0
        %v7238 = vmax.f32 %v7206, 0.0
        %v7239 = vmax.f32 %v7207, 0.0
        %v7240 = vmax.f32 %v7208, 0.0
        %v7241 = vmax.f32 %v7209, 0.0
        %v7242 = vmax.f32 %v7210, 0.0
        %v7243 = vmax.f32 %v7211, 0.0
        %v7244 = vmax.f32 %v7212, 0.0
        %v7245 = vmax.f32 %v7213, 0.0
        %v7246 = vmax.f32 %v7214, 0.0
        %v7247 = vmax.f32 %v7215, 0.0
        %v7248 = vmax.f32 %v7216, 0.0
        %v7249 = vmax.f32 %v7217, 0.0
        %v7250 = vmax.f32 %v7218, 0.0
        %v7251 = vmax.f32 %v7219, 0.0
        %v7252 = vmax.f32 %v7220, 0.0
        %v7253 = vmax.f32 %v7221, 0.0
        %v7254 = vmax.f32 %v7222, 0.0
        %v7255 = vmax.f32 %v7223, 0.0
        %v7256 = vmax.f32 %v7224, 0.0
        %7257 = vst [vmem:[%s559] sm:$0xff] %v7225
        %7258 = vst [vmem:[%s559 + $0x8] sm:$0xff] %v7226
        %7259 = vst [vmem:[%s559 + $0x10] sm:$0xff] %v7227
        %7260 = vst [vmem:[%s559 + $0x18] sm:$0xff] %v7228
        %7261 = vst [vmem:[%s559 + $0x20] sm:$0xff] %v7229
        %7262 = vst [vmem:[%s559 + $0x28] sm:$0xff] %v7230
        %7263 = vst [vmem:[%s559 + $0x30] sm:$0xff] %v7231
        %7264 = vst [vmem:[%s559 + $0x38] sm:$0xff] %v7232
        %7265 = vst [vmem:[%s559 + $0x40] sm:$0xff] %v7233
        %7266 = vst [vmem:[%s559 + $0x48] sm:$0xff] %v7234
        %7267 = vst [vmem:[%s559 + $0x50] sm:$0xff] %v7235
        %7268 = vst [vmem:[%s559 + $0x58] sm:$0xff] %v7236
        %7269 = vst [vmem:[%s559 + $0x60] sm:$0xff] %v7237
        %7270 = vst [vmem:[%s559 + $0x68] sm:$0xff] %v7238
        %7271 = vst [vmem:[%s559 + $0x70] sm:$0xff] %v7239
        %7272 = vst [vmem:[%s559 + $0x78] sm:$0xff] %v7240
        %7273 = vst [vmem:[%s559 + $0x80] sm:$0xff] %v7241
        %7274 = vst [vmem:[%s559 + $0x88] sm:$0xff] %v7242
        %7275 = vst [vmem:[%s559 + $0x90] sm:$0xff] %v7243
        %7276 = vst [vmem:[%s559 + $0x98] sm:$0xff] %v7244
        %7277 = vst [vmem:[%s559 + $0xa0] sm:$0xff] %v7245
        %7278 = vst [vmem:[%s559 + $0xa8] sm:$0xff] %v7246
        %7279 = vst [vmem:[%s559 + $0xb0] sm:$0xff] %v7247
        %7280 = vst [vmem:[%s559 + $0xb8] sm:$0xff] %v7248
        %7281 = vst [vmem:[%s559 + $0xc0] sm:$0xff] %v7249
        %7282 = vst [vmem:[%s559 + $0xc8] sm:$0xff] %v7250
        %7283 = vst [vmem:[%s559 + $0xd0] sm:$0xff] %v7251
        %7284 = vst [vmem:[%s559 + $0xd8] sm:$0xff] %v7252
        %7285 = vst [vmem:[%s559 + $0xe0] sm:$0xff] %v7253
        %7286 = vst [vmem:[%s559 + $0xe8] sm:$0xff] %v7254
        %7287 = vst [vmem:[%s559 + $0xf0] sm:$0xff] %v7255
        %7288 = vst [vmem:[%s559 + $0xf8] sm:$0xff] %v7256
        %s7289 = sand.u32 %s343, 1
        %s7290 = scalar_lea.sflag [#allocation4], %s7289
        %s7291 = sand.u32 %s343, 1
        %s7292 = smul.addr %s7291, 256
        %s7293 = scalar_lea.vmem [#allocation8], %s7292
        // Predicated region
        $region81: #{bottleneck_forward.1} parent=67 // pred_check
          %p7294 = pneg %p353
        $region82: #{bottleneck_forward.1} parent=67 // pred_check_branch
          %7296 = sbr.rel (%p7294) target = $region84
        $region83: #{bottleneck_forward.1} parent=67 // pred_region
          %s7297 = smul.u32 4, %s37
          %s7299 = ssub.s32 4096, 4096
          %7300 = vsyncadd %s7290, %s7299
          %s7301 = smul.addr %s7297, 8
          %s7302 = smul.addr %s36, 64
          %s7303 = sadd.s32 %s7301, %s7302
          %s7304 = smul.addr %s7303, 128
          %s7305 = scalar_lea.hbm %s12, %s7304
          %s7306 = sshll.u32 %s7293, 4
          %s7307 = int_to_ptr.vmem [resolvable:$true] %s7306
          %7312 = dma.vmem_to_hbm [thread:$0]  %s7307, 4096, %s7305, %s7290, 128, 128, 8
        $region84: #{bottleneck_forward.1} parent=67 // pred_fallthru
          _
      $region68: #{bottleneck_forward.1} parent=5 // pred_fallthru
        _
      %p7313 = scmp.le.s32.totalorder 2, %s27
      // Predicated region
      $region85: #{bottleneck_forward.1} parent=5 // pred_check
        %p7314 = pneg %p7313
      $region86: #{bottleneck_forward.1} parent=5 // pred_check_branch
        %7316 = sbr.rel (%p7314) target = $region88
      $region87: #{bottleneck_forward.1} parent=5 // pred_region
        %s7317 = ssub.s32 %s27, 2
        // Predicated region
        $region89: #{bottleneck_forward.1} parent=87 // pred_check
          %p7318 = pneg %p359
        $region90: #{bottleneck_forward.1} parent=87 // pred_check_branch
          %7320 = sbr.rel (%p7318) target = $region92
        $region91: #{bottleneck_forward.1} parent=87 // pred_region
          %s7321 = sand.u32 %s344, 1
          %s7322 = scalar_lea.sflag [#allocation4], %s7321
          %s7323 = sand.u32 %s344, 1
          %s7324 = smul.addr %s7323, 256
          %s7325 = scalar_lea.vmem [#allocation8], %s7324
          %7326 = dma.done %s7322, 4096
        $region92: #{bottleneck_forward.1} parent=87 // pred_fallthru
          _
      $region88: #{bottleneck_forward.1} parent=5 // pred_fallthru
        _
    $region6: #{bottleneck_forward.1} parent=1 // loop_footer
      %s31 = sadd.s32 1, %s27
    $region7: #{bottleneck_forward.1} parent=1 // loop_footer_branch
      %26 = sbr.rel target = $region3
    $region8: #{bottleneck_forward.1} parent=1 // loop_exit
      _
    %7327 = vsyncpa [#allocation3], 1
    %s7328 = scalar_lea.sflag [#allocation3], 1
    %7329 = vsyncpa %s7328, 1
    %7330 = vsyncpa [#allocation6], 1
    %s7331 = scalar_lea.sflag [#allocation6], 1
    %7332 = vsyncpa %s7331, 1
    %7333 = vsyncpa [#allocation4], 1
    %s7334 = scalar_lea.sflag [#allocation4], 1
    %7335 = vsyncpa %s7334, 1

</llo_original>
